<compile_context>
chip_gen: v6e
topology: v6e:2x2x1
jax: 0.10.0
libtpu: 0.0.40
codegen_flags: <defaults>
</compile_context>

<pallas_src>
import functools

import jax
import jax.numpy as jnp
import numpy as np
from jax import lax
from jax.experimental import pallas as pl
from jax.experimental.pallas import tpu as pltpu


# ----------------------------------------------------------------------------
# Fused kernel: conv1+BN+ReLU+pool -> conv2+BN+ReLU+pool -> flatten -> linear
# ----------------------------------------------------------------------------
def _net_kernel(x4_ref, m1_ref, m2_ref, wl_ref, t1_ref, t2_ref, bl_ref,
                out_ref, h1e_ref, h1o_ref):
    nb = out_ref.shape[0]
    f32 = jnp.float32

    # ----- conv1 (1->4, 3x3, pad 1) column work on the MXU -------------------
    # x4_ref[f][n*8 + a, b] = xpadrow[n, 4a+f, b]   (row-phase split, b = 0..27)
    # m1 columns: 6 groups of 128 = (output-col parity par, tap row kh); lane
    # c*32+q of a group is output channel c, conv1 output column 2q+par.
    b_phase = []
    for f in range(4):
        bf = jnp.dot(x4_ref[f], m1_ref[...], preferred_element_type=f32)
        b_phase.append(bf.reshape(nb, 8, 768))           # (nb, 8, 6*128)

    def c1(f, kh, par, off):
        g = (par * 3 + kh) * 128
        return b_phase[f][:, off:off + 7, g:g + 128]      # (nb, 7, 128)

    # pooled row p=2pe covers conv rows 4pe,4pe+1; p=2po+1 covers 4po+2,4po+3.
    # conv row i sums padded-input rows i, i+1, i+2 (phase, row-offset) below.
    rows_even = (((0, 0), (1, 0), (2, 0)),                # conv row 4pe
                 ((1, 0), (2, 0), (3, 0)))                # conv row 4pe+1
    rows_odd = (((2, 0), (3, 0), (0, 1)),                 # conv row 4po+2
                ((3, 0), (0, 1), (1, 1)))                 # conv row 4po+3
    t1v = t1_ref[...]                                     # (1, 128) bias+BN shift

    def conv1_pool(row_specs):
        m = None
        for spec in row_specs:                            # 2 conv rows in window
            for par in (0, 1):                            # 2 conv cols in window
                acc = None
                for kh, (f, off) in enumerate(spec):
                    t = c1(f, kh, par, off)
                    acc = t if acc is None else acc + t
                m = acc if m is None else jnp.maximum(m, acc)
        return jnp.maximum(m + t1v, 0.0)                  # pool -> +shift -> ReLU

    h1e = conv1_pool(rows_even)   # (nb,7,128): h1[ci][n, 2pe , q] at lane ci*32+q
    h1o = conv1_pool(rows_odd)    # (nb,7,128): h1[ci][n, 2po+1, q] at lane ci*32+q

    # Stash into 8-row-padded scratch (the extra row is conv2's zero padding)
    # so conv2's shifted row sums are static, aligned, full-width slices.
    zrow = jnp.zeros((nb, 1, 128), f32)
    h1e_ref[:, 0:7, :] = h1e
    h1e_ref[:, 7:8, :] = zrow
    h1o_ref[:, 1:8, :] = h1o
    h1o_ref[:, 0:1, :] = zrow

    # ----- conv2 (4->4, 3x3, pad 1) column work on the MXU --------------------
    # m2 rows: lane ci*32+b = input channel ci, h1 column b; columns like m1.
    ce = jnp.dot(h1e_ref[...].reshape(nb * 8, 128), m2_ref[...],
                 preferred_element_type=f32).reshape(nb, 8, 768)
    co = jnp.dot(h1o_ref[...].reshape(nb * 8, 128), m2_ref[...],
                 preferred_element_type=f32).reshape(nb, 8, 768)

    def c2(arr, kh, par, off):
        g = (par * 3 + kh) * 128
        return arr[:, off:off + 7, g:g + 128]             # (nb, 7, 128)

    # ce row a = h1 row 2a (row 7 = zero pad); co row a = h1 row 2a-1 (row 0 = pad)
    # conv2 row 2r   sums h1 rows 2r-1, 2r,   2r+1
    # conv2 row 2r+1 sums h1 rows 2r,   2r+1, 2r+2
    row_specs2 = (((co, 0), (ce, 0), (co, 1)),
                  ((ce, 0), (co, 1), (ce, 1)))
    t2v = t2_ref[...]
    m = None
    for spec in row_specs2:
        for par in (0, 1):
            acc = None
            for kh, (arr, off) in enumerate(spec):
                t = c2(arr, kh, par, off)
                acc = t if acc is None else acc + t
            m = acc if m is None else jnp.maximum(m, acc)
    h2 = jnp.maximum(m + t2v, 0.0)    # (nb,7,128): h2[c][n,r,s] at lane c*32+s

    # ----- flatten + Linear(196 -> 10): 7 small MXU matmuls -------------------
    # wl_ref[r][c*32+s, o] = W_linear[o, c*49 + r*7 + s]  (PyTorch flatten order)
    logits = None
    for r in range(7):
        t = jnp.dot(h2[:, r, :], wl_ref[r], preferred_element_type=f32)   # (nb,16)
        logits = t if logits is None else logits + t
    out_ref[...] = logits + bl_ref[...]


# ----------------------------------------------------------------------------
# Trace-time weight folding / banded-matrix construction helpers
# ----------------------------------------------------------------------------
def _fold_bn(conv_bias, gamma, beta, mean, var, eps=1e-5):
    """Fold conv bias + eval-mode BatchNorm2d into per-channel (scale, shift)."""
    scale = gamma / jnp.sqrt(var + eps)
    shift = beta + scale * (conv_bias - mean)
    return scale, shift


def _place(flat_w, idx, msk):
    """out = flat_w[idx] * msk with constant index / mask arrays."""
    return jnp.take(flat_w, jnp.asarray(idx)) * jnp.asarray(msk)


def _conv1_mat_idx():
    # (32, 768): rows = input column b (28 used), cols = 6 groups of 128
    # (par, kh); lane c*32+q within a group = out channel c, out column 2q+par.
    idx = np.zeros((32, 6, 128), np.int32)
    msk = np.zeros((32, 6, 128), np.float32)
    for par in range(2):
        for kh in range(3):
            for c in range(4):
                for q in range(14):
                    j = 2 * q + par                     # conv1 output column
                    for kw in range(3):
                        b = j + kw - 1                  # input column (pad skipped)
                        if 0 <= b < 28:
                            idx[b, par * 3 + kh, c * 32 + q] = c * 9 + kh * 3 + kw
                            msk[b, par * 3 + kh, c * 32 + q] = 1.0
    return idx.reshape(32, 768), msk.reshape(32, 768)


def _conv2_mat_idx():
    # (128, 768): rows = lane ci*32+b (h1 channel ci, column b, 14 used).
    idx = np.zeros((128, 6, 128), np.int32)
    msk = np.zeros((128, 6, 128), np.float32)
    for par in range(2):
        for kh in range(3):
            for co in range(4):
                for ci in range(4):
                    for q in range(7):
                        j = 2 * q + par                 # conv2 output column
                        for kw in range(3):
                            b = j + kw - 1              # h1 column (pad skipped)
                            if 0 <= b < 14:
                                idx[ci * 32 + b, par * 3 + kh, co * 32 + q] = \
                                    co * 36 + ci * 9 + kh * 3 + kw
                                msk[ci * 32 + b, par * 3 + kh, co * 32 + q] = 1.0
    return idx.reshape(128, 768), msk.reshape(128, 768)


def _linear_mat_idx():
    # (7, 128, 16): per output row r, rows = lane c*32+s, cols = logits (10 used).
    idx = np.zeros((7, 128, 16), np.int32)
    msk = np.zeros((7, 128, 16), np.float32)
    for r in range(7):
        for c in range(4):
            for s in range(7):
                for o in range(10):
                    idx[r, c * 32 + s, o] = o * 196 + c * 49 + r * 7 + s
                    msk[r, c * 32 + s, o] = 1.0
    return idx, msk


def _bias_vec_idx(n_cols):
    idx = np.zeros((128,), np.int32)
    msk = np.zeros((128,), np.float32)
    for c in range(4):
        for q in range(n_cols):
            idx[c * 32 + q] = c
            msk[c * 32 + q] = 1.0
    return idx, msk


# ----------------------------------------------------------------------------
# Wrapper: layout prep + the single pallas_call (batch grid, "parallel")
# ----------------------------------------------------------------------------
@functools.partial(jax.jit, static_argnames=("batch_block",))
def net_forward(x_nchw, params, *, batch_block=8):
    """Forward pass of Net.  x_nchw: (N, 1, 28, 28) float32 -> (N, 10)."""
    N = x_nchw.shape[0]
    nb = max(1, min(batch_block, N))            # images per grid step
    n_pad = ((N + nb - 1) // nb) * nb

    x = x_nchw[:, 0, :, :].astype(jnp.float32)                     # (N,28,28)
    if n_pad != N:
        x = jnp.pad(x, ((0, n_pad - N), (0, 0), (0, 0)))
    # 1 zero row on top (conv pad) + 3 on the bottom (to 32 rows for phase split)
    xr = jnp.pad(x, ((0, 0), (1, 3), (0, 0)))                      # (n_pad,32,28)
    # mod-4 row-phase split: x4[f, n*8+a, b] = xr[n, 4a+f, b]
    x4 = xr.reshape(n_pad, 8, 4, 28).transpose(2, 0, 1, 3)         # (4,n_pad,8,28)
    x4 = x4.reshape(4, n_pad * 8, 28)
    x4 = jnp.pad(x4, ((0, 0), (0, 0), (0, 4)))                     # (4,n_pad*8,32)

    # Fold eval-mode BN into the conv weights and a per-channel shift.
    s1, t1 = _fold_bn(params["b1"], params["bn1_gamma"], params["bn1_beta"],
                      params["bn1_mean"], params["bn1_var"])
    w1f = (params["w1"].reshape(4, 9).astype(jnp.float32) * s1[:, None]).reshape(-1)
    s2, t2 = _fold_bn(params["b2"], params["bn2_gamma"], params["bn2_beta"],
                      params["bn2_mean"], params["bn2_var"])
    w2f = (params["w2"].reshape(4, 36).astype(jnp.float32) * s2[:, None]).reshape(-1)

    # Banded matrices: fold the 3x3 column taps + pool column decimation.
    m1 = _place(w1f, *_conv1_mat_idx())                            # (32, 768)
    m2 = _place(w2f, *_conv2_mat_idx())                            # (128, 768)
    wlk = _place(params["wl"].astype(jnp.float32).reshape(-1),
                 *_linear_mat_idx())                               # (7, 128, 16)
    i14, m14 = _bias_vec_idx(14)
    i7, m7 = _bias_vec_idx(7)
    t1v = _place(t1.astype(jnp.float32), i14, m14).reshape(1, 128)
    t2v = _place(t2.astype(jnp.float32), i7, m7).reshape(1, 128)
    blv = jnp.pad(params["bl"].astype(jnp.float32), (0, 6)).reshape(1, 16)

    out = pl.pallas_call(
        _net_kernel,
        out_shape=jax.ShapeDtypeStruct((n_pad, 16), jnp.float32),
        grid=(n_pad // nb,),
        in_specs=[
            pl.BlockSpec((4, nb * 8, 32), lambda b: (0, b, 0)),    # image block
            pl.BlockSpec((32, 768), lambda b: (0, 0)),             # conv1 matrix (resident)
            pl.BlockSpec((128, 768), lambda b: (0, 0)),            # conv2 matrix (resident)
            pl.BlockSpec((7, 128, 16), lambda b: (0, 0, 0)),       # linear matrix (resident)
            pl.BlockSpec((1, 128), lambda b: (0, 0)),              # conv1 bias+BN shift
            pl.BlockSpec((1, 128), lambda b: (0, 0)),              # conv2 bias+BN shift
            pl.BlockSpec((1, 16), lambda b: (0, 0)),               # linear bias
        ],
        out_specs=pl.BlockSpec((nb, 16), lambda b: (b, 0)),
        scratch_shapes=[pltpu.VMEM((nb, 8, 128), jnp.float32),     # conv2 input, even h1 rows
                        pltpu.VMEM((nb, 8, 128), jnp.float32)],    # conv2 input, odd h1 rows
        compiler_params=pltpu.CompilerParams(
            dimension_semantics=("parallel",)),
    )(x4, m1, m2, wlk, t1v, t2v, blv)
    return out[:N, :10]


# ----------------------------------------------------------------------------
# Pure-JAX reference (for correctness verification only)
# ----------------------------------------------------------------------------
def net_forward_reference(x_nchw, params):
    def block(x, w, b, g, bt, mu, var):
        y = lax.conv_general_dilated(x, w, (1, 1), ((1, 1), (1, 1)),
                                     dimension_numbers=("NCHW", "OIHW", "NCHW"),
                                     precision=lax.Precision.HIGHEST)
        y = y + b[None, :, None, None]
        y = (y - mu[None, :, None, None]) * (g / jnp.sqrt(var + 1e-5))[None, :, None, None] \
            + bt[None, :, None, None]
        y = jnp.maximum(y, 0.0)
        n, c, hh, ww = y.shape
        return y.reshape(n, c, hh // 2, 2, ww // 2, 2).max(axis=(3, 5))

    h = block(x_nchw.astype(jnp.float32), params["w1"], params["b1"],
              params["bn1_gamma"], params["bn1_beta"], params["bn1_mean"], params["bn1_var"])
    h = block(h, params["w2"], params["b2"],
              params["bn2_gamma"], params["bn2_beta"], params["bn2_mean"], params["bn2_var"])
    feat = h.reshape(h.shape[0], -1)
    return jnp.matmul(feat, params["wl"].T, precision=lax.Precision.HIGHEST) + params["bl"]


def init_params(key):
    ks = jax.random.split(key, 10)
    return {
        "w1": jax.random.normal(ks[0], (4, 1, 3, 3), jnp.float32) * 0.2,
        "b1": jax.random.normal(ks[1], (4,), jnp.float32) * 0.1,
        "bn1_gamma": 1.0 + 0.1 * jax.random.normal(ks[2], (4,), jnp.float32),
        "bn1_beta": 0.1 * jax.random.normal(ks[3], (4,), jnp.float32),
        "bn1_mean": jnp.zeros((4,), jnp.float32),
        "bn1_var": jnp.ones((4,), jnp.float32),
        "w2": jax.random.normal(ks[4], (4, 4, 3, 3), jnp.float32) * 0.2,
        "b2": jax.random.normal(ks[5], (4,), jnp.float32) * 0.1,
        "bn2_gamma": 1.0 + 0.1 * jax.random.normal(ks[6], (4,), jnp.float32),
        "bn2_beta": 0.1 * jax.random.normal(ks[7], (4,), jnp.float32),
        "bn2_mean": jnp.zeros((4,), jnp.float32),
        "bn2_var": jnp.ones((4,), jnp.float32),
        "wl": jax.random.normal(ks[8], (10, 4 * 7 * 7), jnp.float32) * 0.05,
        "bl": jax.random.normal(ks[9], (10,), jnp.float32) * 0.05,
    }


if __name__ == "__main__":
    key = jax.random.PRNGKey(0)
    k_x, k_p = jax.random.split(key)
    x = jax.random.normal(k_x, (2, 1, 28, 28), dtype=jnp.float32)
    params = init_params(k_p)

    out = jax.block_until_ready(net_forward(x, params))
    assert out.shape == (2, 10), out.shape
    assert out.dtype == jnp.float32

    ref = jax.block_until_ready(net_forward_reference(x, params))
    if not bool(jnp.allclose(out, ref, atol=2e-2, rtol=2e-2)):
        raise AssertionError(
            f"kernel/reference mismatch, max abs diff = {float(jnp.max(jnp.abs(out - ref)))}")

    print("KERNEL_OK")
</pallas_src>

<mosaic_0001>
module attributes {stable_mosaic.version = 11 : i64} {
  func.func @_net_kernel(%arg0: i32, %arg1: memref<4x16x32xf32, #tpu.memory_space<vmem>>, %arg2: memref<32x768xf32, #tpu.memory_space<vmem>>, %arg3: memref<128x768xf32, #tpu.memory_space<vmem>>, %arg4: memref<7x128x16xf32, #tpu.memory_space<vmem>>, %arg5: memref<1x128xf32, #tpu.memory_space<vmem>>, %arg6: memref<1x128xf32, #tpu.memory_space<vmem>>, %arg7: memref<1x16xf32, #tpu.memory_space<vmem>>, %arg8: memref<2x16xf32, #tpu.memory_space<vmem>>, %arg9: memref<2x8x128xf32, #tpu.memory_space<vmem>>, %arg10: memref<2x8x128xf32, #tpu.memory_space<vmem>>) attributes {dimension_semantics = [#tpu.dimension_semantics<parallel>], iteration_bounds = array<i64: 1>, scalar_prefetch = 0 : i64, scratch_operands = 2 : i64, tpu.core_type = #tpu.core_type<tc>, window_params = [{transform_indices = @transform_0, window_bounds = array<i64: 4, 16, 32>}, {pipeline_mode = #tpu.pipeline_mode<synchronous>, transform_indices = @transform_1, window_bounds = array<i64: 32, 768>}, {pipeline_mode = #tpu.pipeline_mode<synchronous>, transform_indices = @transform_2, window_bounds = array<i64: 128, 768>}, {pipeline_mode = #tpu.pipeline_mode<synchronous>, transform_indices = @transform_3, window_bounds = array<i64: 7, 128, 16>}, {pipeline_mode = #tpu.pipeline_mode<synchronous>, transform_indices = @transform_4, window_bounds = array<i64: 1, 128>}, {pipeline_mode = #tpu.pipeline_mode<synchronous>, transform_indices = @transform_5, window_bounds = array<i64: 1, 128>}, {pipeline_mode = #tpu.pipeline_mode<synchronous>, transform_indices = @transform_6, window_bounds = array<i64: 1, 16>}, {transform_indices = @transform_7, window_bounds = array<i64: 2, 16>}]} {
    %c0 = arith.constant 0 : index
    %c0_0 = arith.constant 0 : index
    %c0_1 = arith.constant 0 : index
    %0 = vector.load %arg1[%c0, %c0_0, %c0_1] : memref<4x16x32xf32, #tpu.memory_space<vmem>>, vector<1x16x32xf32>
    %1 = vector.shape_cast %0 : vector<1x16x32xf32> to vector<16x32xf32>
    %c0_2 = arith.constant 0 : index
    %c0_3 = arith.constant 0 : index
    %2 = vector.load %arg2[%c0_2, %c0_3] : memref<32x768xf32, #tpu.memory_space<vmem>>, vector<32x768xf32>
    %cst = arith.constant dense<0.000000e+00> : vector<16x768xf32>
    %3 = tpu.matmul %1, %2, %cst {dimension_numbers = #tpu.dot_dimension_numbers<[1], [0], [0], [1], [0, 0, 1, 1], [], []>} : vector<16x32xf32>, vector<32x768xf32>, vector<16x768xf32> -> vector<16x768xf32>
    %4 = vector.shape_cast %3 : vector<16x768xf32> to vector<2x8x768xf32>
    %c1 = arith.constant 1 : index
    %c0_4 = arith.constant 0 : index
    %c0_5 = arith.constant 0 : index
    %5 = vector.load %arg1[%c1, %c0_4, %c0_5] : memref<4x16x32xf32, #tpu.memory_space<vmem>>, vector<1x16x32xf32>
    %6 = vector.shape_cast %5 : vector<1x16x32xf32> to vector<16x32xf32>
    %c0_6 = arith.constant 0 : index
    %c0_7 = arith.constant 0 : index
    %7 = vector.load %arg2[%c0_6, %c0_7] : memref<32x768xf32, #tpu.memory_space<vmem>>, vector<32x768xf32>
    %cst_8 = arith.constant dense<0.000000e+00> : vector<16x768xf32>
    %8 = tpu.matmul %6, %7, %cst_8 {dimension_numbers = #tpu.dot_dimension_numbers<[1], [0], [0], [1], [0, 0, 1, 1], [], []>} : vector<16x32xf32>, vector<32x768xf32>, vector<16x768xf32> -> vector<16x768xf32>
    %9 = vector.shape_cast %8 : vector<16x768xf32> to vector<2x8x768xf32>
    %c2 = arith.constant 2 : index
    %c0_9 = arith.constant 0 : index
    %c0_10 = arith.constant 0 : index
    %10 = vector.load %arg1[%c2, %c0_9, %c0_10] : memref<4x16x32xf32, #tpu.memory_space<vmem>>, vector<1x16x32xf32>
    %11 = vector.shape_cast %10 : vector<1x16x32xf32> to vector<16x32xf32>
    %c0_11 = arith.constant 0 : index
    %c0_12 = arith.constant 0 : index
    %12 = vector.load %arg2[%c0_11, %c0_12] : memref<32x768xf32, #tpu.memory_space<vmem>>, vector<32x768xf32>
    %cst_13 = arith.constant dense<0.000000e+00> : vector<16x768xf32>
    %13 = tpu.matmul %11, %12, %cst_13 {dimension_numbers = #tpu.dot_dimension_numbers<[1], [0], [0], [1], [0, 0, 1, 1], [], []>} : vector<16x32xf32>, vector<32x768xf32>, vector<16x768xf32> -> vector<16x768xf32>
    %14 = vector.shape_cast %13 : vector<16x768xf32> to vector<2x8x768xf32>
    %c3 = arith.constant 3 : index
    %c0_14 = arith.constant 0 : index
    %c0_15 = arith.constant 0 : index
    %15 = vector.load %arg1[%c3, %c0_14, %c0_15] : memref<4x16x32xf32, #tpu.memory_space<vmem>>, vector<1x16x32xf32>
    %16 = vector.shape_cast %15 : vector<1x16x32xf32> to vector<16x32xf32>
    %c0_16 = arith.constant 0 : index
    %c0_17 = arith.constant 0 : index
    %17 = vector.load %arg2[%c0_16, %c0_17] : memref<32x768xf32, #tpu.memory_space<vmem>>, vector<32x768xf32>
    %cst_18 = arith.constant dense<0.000000e+00> : vector<16x768xf32>
    %18 = tpu.matmul %16, %17, %cst_18 {dimension_numbers = #tpu.dot_dimension_numbers<[1], [0], [0], [1], [0, 0, 1, 1], [], []>} : vector<16x32xf32>, vector<32x768xf32>, vector<16x768xf32> -> vector<16x768xf32>
    %19 = vector.shape_cast %18 : vector<16x768xf32> to vector<2x8x768xf32>
    %c0_19 = arith.constant 0 : index
    %c0_20 = arith.constant 0 : index
    %20 = vector.load %arg5[%c0_19, %c0_20] : memref<1x128xf32, #tpu.memory_space<vmem>>, vector<1x128xf32>
    %21 = vector.extract_strided_slice %4 {offsets = [0, 0, 0], sizes = [2, 7, 128], strides = [1, 1, 1]} : vector<2x8x768xf32> to vector<2x7x128xf32>
    %22 = vector.extract_strided_slice %9 {offsets = [0, 0, 128], sizes = [2, 7, 128], strides = [1, 1, 1]} : vector<2x8x768xf32> to vector<2x7x128xf32>
    %23 = arith.addf %21, %22 : vector<2x7x128xf32>
    %24 = vector.extract_strided_slice %14 {offsets = [0, 0, 256], sizes = [2, 7, 128], strides = [1, 1, 1]} : vector<2x8x768xf32> to vector<2x7x128xf32>
    %25 = arith.addf %23, %24 : vector<2x7x128xf32>
    %26 = vector.extract_strided_slice %4 {offsets = [0, 0, 384], sizes = [2, 7, 128], strides = [1, 1, 1]} : vector<2x8x768xf32> to vector<2x7x128xf32>
    %27 = vector.extract_strided_slice %9 {offsets = [0, 0, 512], sizes = [2, 7, 128], strides = [1, 1, 1]} : vector<2x8x768xf32> to vector<2x7x128xf32>
    %28 = arith.addf %26, %27 : vector<2x7x128xf32>
    %29 = vector.extract_strided_slice %14 {offsets = [0, 0, 640], sizes = [2, 7, 128], strides = [1, 1, 1]} : vector<2x8x768xf32> to vector<2x7x128xf32>
    %30 = arith.addf %28, %29 : vector<2x7x128xf32>
    %31 = arith.maximumf %25, %30 : vector<2x7x128xf32>
    %32 = vector.extract_strided_slice %9 {offsets = [0, 0, 0], sizes = [2, 7, 128], strides = [1, 1, 1]} : vector<2x8x768xf32> to vector<2x7x128xf32>
    %33 = vector.extract_strided_slice %14 {offsets = [0, 0, 128], sizes = [2, 7, 128], strides = [1, 1, 1]} : vector<2x8x768xf32> to vector<2x7x128xf32>
    %34 = arith.addf %32, %33 : vector<2x7x128xf32>
    %35 = vector.extract_strided_slice %19 {offsets = [0, 0, 256], sizes = [2, 7, 128], strides = [1, 1, 1]} : vector<2x8x768xf32> to vector<2x7x128xf32>
    %36 = arith.addf %34, %35 : vector<2x7x128xf32>
    %37 = arith.maximumf %31, %36 : vector<2x7x128xf32>
    %38 = vector.extract_strided_slice %9 {offsets = [0, 0, 384], sizes = [2, 7, 128], strides = [1, 1, 1]} : vector<2x8x768xf32> to vector<2x7x128xf32>
    %39 = vector.extract_strided_slice %14 {offsets = [0, 0, 512], sizes = [2, 7, 128], strides = [1, 1, 1]} : vector<2x8x768xf32> to vector<2x7x128xf32>
    %40 = arith.addf %38, %39 : vector<2x7x128xf32>
    %41 = vector.extract_strided_slice %19 {offsets = [0, 0, 640], sizes = [2, 7, 128], strides = [1, 1, 1]} : vector<2x8x768xf32> to vector<2x7x128xf32>
    %42 = arith.addf %40, %41 : vector<2x7x128xf32>
    %43 = arith.maximumf %37, %42 : vector<2x7x128xf32>
    %44 = vector.shape_cast %20 : vector<1x128xf32> to vector<1x1x128xf32>
    %45 = vector.broadcast %44 : vector<1x1x128xf32> to vector<2x7x128xf32>
    %46 = arith.addf %43, %45 : vector<2x7x128xf32>
    %cst_21 = arith.constant 0.000000e+00 : f32
    %47 = vector.broadcast %cst_21 : f32 to vector<2x7x128xf32>
    %48 = arith.maximumf %46, %47 : vector<2x7x128xf32>
    %49 = vector.extract_strided_slice %14 {offsets = [0, 0, 0], sizes = [2, 7, 128], strides = [1, 1, 1]} : vector<2x8x768xf32> to vector<2x7x128xf32>
    %50 = vector.extract_strided_slice %19 {offsets = [0, 0, 128], sizes = [2, 7, 128], strides = [1, 1, 1]} : vector<2x8x768xf32> to vector<2x7x128xf32>
    %51 = arith.addf %49, %50 : vector<2x7x128xf32>
    %52 = vector.extract_strided_slice %4 {offsets = [0, 1, 256], sizes = [2, 7, 128], strides = [1, 1, 1]} : vector<2x8x768xf32> to vector<2x7x128xf32>
    %53 = arith.addf %51, %52 : vector<2x7x128xf32>
    %54 = vector.extract_strided_slice %14 {offsets = [0, 0, 384], sizes = [2, 7, 128], strides = [1, 1, 1]} : vector<2x8x768xf32> to vector<2x7x128xf32>
    %55 = vector.extract_strided_slice %19 {offsets = [0, 0, 512], sizes = [2, 7, 128], strides = [1, 1, 1]} : vector<2x8x768xf32> to vector<2x7x128xf32>
    %56 = arith.addf %54, %55 : vector<2x7x128xf32>
    %57 = vector.extract_strided_slice %4 {offsets = [0, 1, 640], sizes = [2, 7, 128], strides = [1, 1, 1]} : vector<2x8x768xf32> to vector<2x7x128xf32>
    %58 = arith.addf %56, %57 : vector<2x7x128xf32>
    %59 = arith.maximumf %53, %58 : vector<2x7x128xf32>
    %60 = vector.extract_strided_slice %19 {offsets = [0, 0, 0], sizes = [2, 7, 128], strides = [1, 1, 1]} : vector<2x8x768xf32> to vector<2x7x128xf32>
    %61 = vector.extract_strided_slice %4 {offsets = [0, 1, 128], sizes = [2, 7, 128], strides = [1, 1, 1]} : vector<2x8x768xf32> to vector<2x7x128xf32>
    %62 = arith.addf %60, %61 : vector<2x7x128xf32>
    %63 = vector.extract_strided_slice %9 {offsets = [0, 1, 256], sizes = [2, 7, 128], strides = [1, 1, 1]} : vector<2x8x768xf32> to vector<2x7x128xf32>
    %64 = arith.addf %62, %63 : vector<2x7x128xf32>
    %65 = arith.maximumf %59, %64 : vector<2x7x128xf32>
    %66 = vector.extract_strided_slice %19 {offsets = [0, 0, 384], sizes = [2, 7, 128], strides = [1, 1, 1]} : vector<2x8x768xf32> to vector<2x7x128xf32>
    %67 = vector.extract_strided_slice %4 {offsets = [0, 1, 512], sizes = [2, 7, 128], strides = [1, 1, 1]} : vector<2x8x768xf32> to vector<2x7x128xf32>
    %68 = arith.addf %66, %67 : vector<2x7x128xf32>
    %69 = vector.extract_strided_slice %9 {offsets = [0, 1, 640], sizes = [2, 7, 128], strides = [1, 1, 1]} : vector<2x8x768xf32> to vector<2x7x128xf32>
    %70 = arith.addf %68, %69 : vector<2x7x128xf32>
    %71 = arith.maximumf %65, %70 : vector<2x7x128xf32>
    %72 = vector.shape_cast %20 : vector<1x128xf32> to vector<1x1x128xf32>
    %73 = vector.broadcast %72 : vector<1x1x128xf32> to vector<2x7x128xf32>
    %74 = arith.addf %71, %73 : vector<2x7x128xf32>
    %cst_22 = arith.constant 0.000000e+00 : f32
    %75 = vector.broadcast %cst_22 : f32 to vector<2x7x128xf32>
    %76 = arith.maximumf %74, %75 : vector<2x7x128xf32>
    %cst_23 = arith.constant 0.000000e+00 : f32
    %77 = vector.broadcast %cst_23 : f32 to vector<2x1x128xf32>
    %c0_24 = arith.constant 0 : index
    %c0_25 = arith.constant 0 : index
    %c0_26 = arith.constant 0 : index
    %78 = vector.load %arg9[%c0_24, %c0_25, %c0_26] : memref<2x8x128xf32, #tpu.memory_space<vmem>>, vector<2x7x128xf32>
    tpu.vector_store %arg9[%c0_24, %c0_25, %c0_26], %48 {strides = array<i32>} : memref<2x8x128xf32, #tpu.memory_space<vmem>>, vector<2x7x128xf32>,
    %c0_27 = arith.constant 0 : index
    %c7 = arith.constant 7 : index
    %c0_28 = arith.constant 0 : index
    %79 = vector.load %arg9[%c0_27, %c7, %c0_28] : memref<2x8x128xf32, #tpu.memory_space<vmem>>, vector<2x1x128xf32>
    tpu.vector_store %arg9[%c0_27, %c7, %c0_28], %77 {strides = array<i32>} : memref<2x8x128xf32, #tpu.memory_space<vmem>>, vector<2x1x128xf32>,
    %c0_29 = arith.constant 0 : index
    %c1_30 = arith.constant 1 : index
    %c0_31 = arith.constant 0 : index
    %80 = vector.load %arg10[%c0_29, %c1_30, %c0_31] : memref<2x8x128xf32, #tpu.memory_space<vmem>>, vector<2x7x128xf32>
    tpu.vector_store %arg10[%c0_29, %c1_30, %c0_31], %76 {strides = array<i32>} : memref<2x8x128xf32, #tpu.memory_space<vmem>>, vector<2x7x128xf32>,
    %c0_32 = arith.constant 0 : index
    %c0_33 = arith.constant 0 : index
    %c0_34 = arith.constant 0 : index
    %81 = vector.load %arg10[%c0_32, %c0_33, %c0_34] : memref<2x8x128xf32, #tpu.memory_space<vmem>>, vector<2x1x128xf32>
    tpu.vector_store %arg10[%c0_32, %c0_33, %c0_34], %77 {strides = array<i32>} : memref<2x8x128xf32, #tpu.memory_space<vmem>>, vector<2x1x128xf32>,
    %c0_35 = arith.constant 0 : index
    %c0_36 = arith.constant 0 : index
    %c0_37 = arith.constant 0 : index
    %82 = vector.load %arg9[%c0_35, %c0_36, %c0_37] : memref<2x8x128xf32, #tpu.memory_space<vmem>>, vector<2x8x128xf32>
    %83 = vector.shape_cast %82 : vector<2x8x128xf32> to vector<16x128xf32>
    %c0_38 = arith.constant 0 : index
    %c0_39 = arith.constant 0 : index
    %84 = vector.load %arg3[%c0_38, %c0_39] : memref<128x768xf32, #tpu.memory_space<vmem>>, vector<128x768xf32>
    %cst_40 = arith.constant dense<0.000000e+00> : vector<16x768xf32>
    %85 = tpu.matmul %83, %84, %cst_40 {dimension_numbers = #tpu.dot_dimension_numbers<[1], [0], [0], [1], [0, 0, 1, 1], [], []>} : vector<16x128xf32>, vector<128x768xf32>, vector<16x768xf32> -> vector<16x768xf32>
    %86 = vector.shape_cast %85 : vector<16x768xf32> to vector<2x8x768xf32>
    %c0_41 = arith.constant 0 : index
    %c0_42 = arith.constant 0 : index
    %c0_43 = arith.constant 0 : index
    %87 = vector.load %arg10[%c0_41, %c0_42, %c0_43] : memref<2x8x128xf32, #tpu.memory_space<vmem>>, vector<2x8x128xf32>
    %88 = vector.shape_cast %87 : vector<2x8x128xf32> to vector<16x128xf32>
    %c0_44 = arith.constant 0 : index
    %c0_45 = arith.constant 0 : index
    %89 = vector.load %arg3[%c0_44, %c0_45] : memref<128x768xf32, #tpu.memory_space<vmem>>, vector<128x768xf32>
    %cst_46 = arith.constant dense<0.000000e+00> : vector<16x768xf32>
    %90 = tpu.matmul %88, %89, %cst_46 {dimension_numbers = #tpu.dot_dimension_numbers<[1], [0], [0], [1], [0, 0, 1, 1], [], []>} : vector<16x128xf32>, vector<128x768xf32>, vector<16x768xf32> -> vector<16x768xf32>
    %91 = vector.shape_cast %90 : vector<16x768xf32> to vector<2x8x768xf32>
    %c0_47 = arith.constant 0 : index
    %c0_48 = arith.constant 0 : index
    %92 = vector.load %arg6[%c0_47, %c0_48] : memref<1x128xf32, #tpu.memory_space<vmem>>, vector<1x128xf32>
    %93 = vector.extract_strided_slice %91 {offsets = [0, 0, 0], sizes = [2, 7, 128], strides = [1, 1, 1]} : vector<2x8x768xf32> to vector<2x7x128xf32>
    %94 = vector.extract_strided_slice %86 {offsets = [0, 0, 128], sizes = [2, 7, 128], strides = [1, 1, 1]} : vector<2x8x768xf32> to vector<2x7x128xf32>
    %95 = arith.addf %93, %94 : vector<2x7x128xf32>
    %96 = vector.extract_strided_slice %91 {offsets = [0, 1, 256], sizes = [2, 7, 128], strides = [1, 1, 1]} : vector<2x8x768xf32> to vector<2x7x128xf32>
    %97 = arith.addf %95, %96 : vector<2x7x128xf32>
    %98 = vector.extract_strided_slice %91 {offsets = [0, 0, 384], sizes = [2, 7, 128], strides = [1, 1, 1]} : vector<2x8x768xf32> to vector<2x7x128xf32>
    %99 = vector.extract_strided_slice %86 {offsets = [0, 0, 512], sizes = [2, 7, 128], strides = [1, 1, 1]} : vector<2x8x768xf32> to vector<2x7x128xf32>
    %100 = arith.addf %98, %99 : vector<2x7x128xf32>
    %101 = vector.extract_strided_slice %91 {offsets = [0, 1, 640], sizes = [2, 7, 128], strides = [1, 1, 1]} : vector<2x8x768xf32> to vector<2x7x128xf32>
    %102 = arith.addf %100, %101 : vector<2x7x128xf32>
    %103 = arith.maximumf %97, %102 : vector<2x7x128xf32>
    %104 = vector.extract_strided_slice %86 {offsets = [0, 0, 0], sizes = [2, 7, 128], strides = [1, 1, 1]} : vector<2x8x768xf32> to vector<2x7x128xf32>
    %105 = vector.extract_strided_slice %91 {offsets = [0, 1, 128], sizes = [2, 7, 128], strides = [1, 1, 1]} : vector<2x8x768xf32> to vector<2x7x128xf32>
    %106 = arith.addf %104, %105 : vector<2x7x128xf32>
    %107 = vector.extract_strided_slice %86 {offsets = [0, 1, 256], sizes = [2, 7, 128], strides = [1, 1, 1]} : vector<2x8x768xf32> to vector<2x7x128xf32>
    %108 = arith.addf %106, %107 : vector<2x7x128xf32>
    %109 = arith.maximumf %103, %108 : vector<2x7x128xf32>
    %110 = vector.extract_strided_slice %86 {offsets = [0, 0, 384], sizes = [2, 7, 128], strides = [1, 1, 1]} : vector<2x8x768xf32> to vector<2x7x128xf32>
    %111 = vector.extract_strided_slice %91 {offsets = [0, 1, 512], sizes = [2, 7, 128], strides = [1, 1, 1]} : vector<2x8x768xf32> to vector<2x7x128xf32>
    %112 = arith.addf %110, %111 : vector<2x7x128xf32>
    %113 = vector.extract_strided_slice %86 {offsets = [0, 1, 640], sizes = [2, 7, 128], strides = [1, 1, 1]} : vector<2x8x768xf32> to vector<2x7x128xf32>
    %114 = arith.addf %112, %113 : vector<2x7x128xf32>
    %115 = arith.maximumf %109, %114 : vector<2x7x128xf32>
    %116 = vector.shape_cast %92 : vector<1x128xf32> to vector<1x1x128xf32>
    %117 = vector.broadcast %116 : vector<1x1x128xf32> to vector<2x7x128xf32>
    %118 = arith.addf %115, %117 : vector<2x7x128xf32>
    %cst_49 = arith.constant 0.000000e+00 : f32
    %119 = vector.broadcast %cst_49 : f32 to vector<2x7x128xf32>
    %120 = arith.maximumf %118, %119 : vector<2x7x128xf32>
    %121 = vector.extract_strided_slice %120 {offsets = [0, 0, 0], sizes = [2, 1, 128], strides = [1, 1, 1]} : vector<2x7x128xf32> to vector<2x1x128xf32>
    %122 = vector.shape_cast %121 : vector<2x1x128xf32> to vector<2x128xf32>
    %c0_50 = arith.constant 0 : index
    %c0_51 = arith.constant 0 : index
    %c0_52 = arith.constant 0 : index
    %123 = vector.load %arg4[%c0_50, %c0_51, %c0_52] : memref<7x128x16xf32, #tpu.memory_space<vmem>>, vector<1x128x16xf32>
    %124 = vector.shape_cast %123 : vector<1x128x16xf32> to vector<128x16xf32>
    %cst_53 = arith.constant dense<0.000000e+00> : vector<2x16xf32>
    %125 = tpu.matmul %122, %124, %cst_53 {dimension_numbers = #tpu.dot_dimension_numbers<[1], [0], [0], [1], [0, 0, 1, 1], [], []>} : vector<2x128xf32>, vector<128x16xf32>, vector<2x16xf32> -> vector<2x16xf32>
    %126 = vector.extract_strided_slice %120 {offsets = [0, 1, 0], sizes = [2, 1, 128], strides = [1, 1, 1]} : vector<2x7x128xf32> to vector<2x1x128xf32>
    %127 = vector.shape_cast %126 : vector<2x1x128xf32> to vector<2x128xf32>
    %c1_54 = arith.constant 1 : index
    %c0_55 = arith.constant 0 : index
    %c0_56 = arith.constant 0 : index
    %128 = vector.load %arg4[%c1_54, %c0_55, %c0_56] : memref<7x128x16xf32, #tpu.memory_space<vmem>>, vector<1x128x16xf32>
    %129 = vector.shape_cast %128 : vector<1x128x16xf32> to vector<128x16xf32>
    %cst_57 = arith.constant dense<0.000000e+00> : vector<2x16xf32>
    %130 = tpu.matmul %127, %129, %cst_57 {dimension_numbers = #tpu.dot_dimension_numbers<[1], [0], [0], [1], [0, 0, 1, 1], [], []>} : vector<2x128xf32>, vector<128x16xf32>, vector<2x16xf32> -> vector<2x16xf32>
    %131 = arith.addf %125, %130 : vector<2x16xf32>
    %132 = vector.extract_strided_slice %120 {offsets = [0, 2, 0], sizes = [2, 1, 128], strides = [1, 1, 1]} : vector<2x7x128xf32> to vector<2x1x128xf32>
    %133 = vector.shape_cast %132 : vector<2x1x128xf32> to vector<2x128xf32>
    %c2_58 = arith.constant 2 : index
    %c0_59 = arith.constant 0 : index
    %c0_60 = arith.constant 0 : index
    %134 = vector.load %arg4[%c2_58, %c0_59, %c0_60] : memref<7x128x16xf32, #tpu.memory_space<vmem>>, vector<1x128x16xf32>
    %135 = vector.shape_cast %134 : vector<1x128x16xf32> to vector<128x16xf32>
    %cst_61 = arith.constant dense<0.000000e+00> : vector<2x16xf32>
    %136 = tpu.matmul %133, %135, %cst_61 {dimension_numbers = #tpu.dot_dimension_numbers<[1], [0], [0], [1], [0, 0, 1, 1], [], []>} : vector<2x128xf32>, vector<128x16xf32>, vector<2x16xf32> -> vector<2x16xf32>
    %137 = arith.addf %131, %136 : vector<2x16xf32>
    %138 = vector.extract_strided_slice %120 {offsets = [0, 3, 0], sizes = [2, 1, 128], strides = [1, 1, 1]} : vector<2x7x128xf32> to vector<2x1x128xf32>
    %139 = vector.shape_cast %138 : vector<2x1x128xf32> to vector<2x128xf32>
    %c3_62 = arith.constant 3 : index
    %c0_63 = arith.constant 0 : index
    %c0_64 = arith.constant 0 : index
    %140 = vector.load %arg4[%c3_62, %c0_63, %c0_64] : memref<7x128x16xf32, #tpu.memory_space<vmem>>, vector<1x128x16xf32>
    %141 = vector.shape_cast %140 : vector<1x128x16xf32> to vector<128x16xf32>
    %cst_65 = arith.constant dense<0.000000e+00> : vector<2x16xf32>
    %142 = tpu.matmul %139, %141, %cst_65 {dimension_numbers = #tpu.dot_dimension_numbers<[1], [0], [0], [1], [0, 0, 1, 1], [], []>} : vector<2x128xf32>, vector<128x16xf32>, vector<2x16xf32> -> vector<2x16xf32>
    %143 = arith.addf %137, %142 : vector<2x16xf32>
    %144 = vector.extract_strided_slice %120 {offsets = [0, 4, 0], sizes = [2, 1, 128], strides = [1, 1, 1]} : vector<2x7x128xf32> to vector<2x1x128xf32>
    %145 = vector.shape_cast %144 : vector<2x1x128xf32> to vector<2x128xf32>
    %c4 = arith.constant 4 : index
    %c0_66 = arith.constant 0 : index
    %c0_67 = arith.constant 0 : index
    %146 = vector.load %arg4[%c4, %c0_66, %c0_67] : memref<7x128x16xf32, #tpu.memory_space<vmem>>, vector<1x128x16xf32>
    %147 = vector.shape_cast %146 : vector<1x128x16xf32> to vector<128x16xf32>
    %cst_68 = arith.constant dense<0.000000e+00> : vector<2x16xf32>
    %148 = tpu.matmul %145, %147, %cst_68 {dimension_numbers = #tpu.dot_dimension_numbers<[1], [0], [0], [1], [0, 0, 1, 1], [], []>} : vector<2x128xf32>, vector<128x16xf32>, vector<2x16xf32> -> vector<2x16xf32>
    %149 = arith.addf %143, %148 : vector<2x16xf32>
    %150 = vector.extract_strided_slice %120 {offsets = [0, 5, 0], sizes = [2, 1, 128], strides = [1, 1, 1]} : vector<2x7x128xf32> to vector<2x1x128xf32>
    %151 = vector.shape_cast %150 : vector<2x1x128xf32> to vector<2x128xf32>
    %c5 = arith.constant 5 : index
    %c0_69 = arith.constant 0 : index
    %c0_70 = arith.constant 0 : index
    %152 = vector.load %arg4[%c5, %c0_69, %c0_70] : memref<7x128x16xf32, #tpu.memory_space<vmem>>, vector<1x128x16xf32>
    %153 = vector.shape_cast %152 : vector<1x128x16xf32> to vector<128x16xf32>
    %cst_71 = arith.constant dense<0.000000e+00> : vector<2x16xf32>
    %154 = tpu.matmul %151, %153, %cst_71 {dimension_numbers = #tpu.dot_dimension_numbers<[1], [0], [0], [1], [0, 0, 1, 1], [], []>} : vector<2x128xf32>, vector<128x16xf32>, vector<2x16xf32> -> vector<2x16xf32>
    %155 = arith.addf %149, %154 : vector<2x16xf32>
    %156 = vector.extract_strided_slice %120 {offsets = [0, 6, 0], sizes = [2, 1, 128], strides = [1, 1, 1]} : vector<2x7x128xf32> to vector<2x1x128xf32>
    %157 = vector.shape_cast %156 : vector<2x1x128xf32> to vector<2x128xf32>
    %c6 = arith.constant 6 : index
    %c0_72 = arith.constant 0 : index
    %c0_73 = arith.constant 0 : index
    %158 = vector.load %arg4[%c6, %c0_72, %c0_73] : memref<7x128x16xf32, #tpu.memory_space<vmem>>, vector<1x128x16xf32>
    %159 = vector.shape_cast %158 : vector<1x128x16xf32> to vector<128x16xf32>
    %cst_74 = arith.constant dense<0.000000e+00> : vector<2x16xf32>
    %160 = tpu.matmul %157, %159, %cst_74 {dimension_numbers = #tpu.dot_dimension_numbers<[1], [0], [0], [1], [0, 0, 1, 1], [], []>} : vector<2x128xf32>, vector<128x16xf32>, vector<2x16xf32> -> vector<2x16xf32>
    %161 = arith.addf %155, %160 : vector<2x16xf32>
    %c0_75 = arith.constant 0 : index
    %c0_76 = arith.constant 0 : index
    %162 = vector.load %arg7[%c0_75, %c0_76] : memref<1x16xf32, #tpu.memory_space<vmem>>, vector<1x16xf32>
    %163 = vector.broadcast %162 : vector<1x16xf32> to vector<2x16xf32>
    %164 = arith.addf %161, %163 : vector<2x16xf32>
    %c0_77 = arith.constant 0 : index
    %c0_78 = arith.constant 0 : index
    %165 = vector.load %arg8[%c0_77, %c0_78] : memref<2x16xf32, #tpu.memory_space<vmem>>, vector<2x16xf32>
    tpu.vector_store %arg8[%c0_77, %c0_78], %164 {strides = array<i32>} : memref<2x16xf32, #tpu.memory_space<vmem>>, vector<2x16xf32>,
    return
  }
  func.func @transform_0(%arg0: i32) -> (i32, i32, i32) {
    %c0_i32 = arith.constant 0 : i32
    %c0_i32_0 = arith.constant 0 : i32
    %c0_i32_1 = arith.constant 0 : i32
    return %c0_i32, %arg0, %c0_i32_0 : i32, i32, i32
  }
  func.func @transform_1(%arg0: i32) -> (i32, i32) {
    %c0_i32 = arith.constant 0 : i32
    %c0_i32_0 = arith.constant 0 : i32
    %c0_i32_1 = arith.constant 0 : i32
    return %c0_i32, %c0_i32_0 : i32, i32
  }
  func.func @transform_2(%arg0: i32) -> (i32, i32) {
    %c0_i32 = arith.constant 0 : i32
    %c0_i32_0 = arith.constant 0 : i32
    %c0_i32_1 = arith.constant 0 : i32
    return %c0_i32, %c0_i32_0 : i32, i32
  }
  func.func @transform_3(%arg0: i32) -> (i32, i32, i32) {
    %c0_i32 = arith.constant 0 : i32
    %c0_i32_0 = arith.constant 0 : i32
    %c0_i32_1 = arith.constant 0 : i32
    %c0_i32_2 = arith.constant 0 : i32
    return %c0_i32, %c0_i32_0, %c0_i32_1 : i32, i32, i32
  }
  func.func @transform_4(%arg0: i32) -> (i32, i32) {
    %c0_i32 = arith.constant 0 : i32
    %c0_i32_0 = arith.constant 0 : i32
    %c0_i32_1 = arith.constant 0 : i32
    return %c0_i32, %c0_i32_0 : i32, i32
  }
  func.func @transform_5(%arg0: i32) -> (i32, i32) {
    %c0_i32 = arith.constant 0 : i32
    %c0_i32_0 = arith.constant 0 : i32
    %c0_i32_1 = arith.constant 0 : i32
    return %c0_i32, %c0_i32_0 : i32, i32
  }
  func.func @transform_6(%arg0: i32) -> (i32, i32) {
    %c0_i32 = arith.constant 0 : i32
    %c0_i32_0 = arith.constant 0 : i32
    %c0_i32_1 = arith.constant 0 : i32
    return %c0_i32, %c0_i32_0 : i32, i32
  }
  func.func @transform_7(%arg0: i32) -> (i32, i32) {
    %c0_i32 = arith.constant 0 : i32
    %c0_i32_0 = arith.constant 0 : i32
    return %arg0, %c0_i32 : i32, i32
  }
}

</mosaic_0001>

<llo_original>
// kernel: mul.1
$region0: #{mul.1}
  #allocation0 [shape = 's32[1]{0}', space=sflag, size = 0x4, scoped, tag = 'scoped memory for mul.1']
  %s0 = inlined_call_operand.vmem [shape: f32[144], index: 0, kind: input, shape index: {}]
  %s1 = inlined_call_operand.vmem [shape: f32[144], index: 1, kind: input, shape index: {}]
  %s2 = inlined_call_operand.vmem [shape: f32[144], index: 2, kind: output, shape index: {}]
  %v3 = vld [vmem:[%s0] sm:$0x3]
  %v4 = vld [vmem:[%s1] sm:$0x3]
  %5 = xla_tuple %v3, %v4
  %6 = xla_tuple %5
  %v7 = vmul.f32 %v3, %v4
  %8 = xla_tuple %v7
  %9 = vst [vmem:[%s2] sm:$0x3] %v7

// kernel: mul.3
$region0: #{mul.3}
  #allocation0 [shape = 's32[1]{0}', space=sflag, size = 0x4, scoped, tag = 'scoped memory for mul.3']
  %s0 = inlined_call_operand.vmem [shape: f32[98304], index: 0, kind: input, shape index: {}]
  %s1 = inlined_call_operand.vmem [shape: f32[98304], index: 1, kind: input, shape index: {}]
  %s2 = inlined_call_operand.vmem [shape: f32[98304], index: 2, kind: output, shape index: {}]
  %v3 = vld [vmem:[%s0] sm:$0xff]
  %v4 = vld [vmem:[%s1] sm:$0xff]
  %5 = xla_tuple %v3, %v4
  %6 = xla_tuple %5
  %v7 = vmul.f32 %v3, %v4
  %8 = xla_tuple %v7
  %9 = vst [vmem:[%s2] sm:$0xff] %v7
  %s10 = scalar_lea.vmem %s0, 8
  %v11 = vld [vmem:[%s10] sm:$0xff]
  %s12 = scalar_lea.vmem %s1, 8
  %v13 = vld [vmem:[%s12] sm:$0xff]
  %14 = xla_tuple %v11, %v13
  %15 = xla_tuple %14
  %v16 = vmul.f32 %v11, %v13
  %17 = xla_tuple %v16
  %s18 = scalar_lea.vmem %s2, 8
  %19 = vst [vmem:[%s18] sm:$0xff] %v16
  %s20 = scalar_lea.vmem %s0, 16
  %v21 = vld [vmem:[%s20] sm:$0xff]
  %s22 = scalar_lea.vmem %s1, 16
  %v23 = vld [vmem:[%s22] sm:$0xff]
  %24 = xla_tuple %v21, %v23
  %25 = xla_tuple %24
  %v26 = vmul.f32 %v21, %v23
  %27 = xla_tuple %v26
  %s28 = scalar_lea.vmem %s2, 16
  %29 = vst [vmem:[%s28] sm:$0xff] %v26
  %s30 = scalar_lea.vmem %s0, 24
  %v31 = vld [vmem:[%s30] sm:$0xff]
  %s32 = scalar_lea.vmem %s1, 24
  %v33 = vld [vmem:[%s32] sm:$0xff]
  %34 = xla_tuple %v31, %v33
  %35 = xla_tuple %34
  %v36 = vmul.f32 %v31, %v33
  %37 = xla_tuple %v36
  %s38 = scalar_lea.vmem %s2, 24
  %39 = vst [vmem:[%s38] sm:$0xff] %v36
  %s40 = scalar_lea.vmem %s0, 32
  %v41 = vld [vmem:[%s40] sm:$0xff]
  %s42 = scalar_lea.vmem %s1, 32
  %v43 = vld [vmem:[%s42] sm:$0xff]
  %44 = xla_tuple %v41, %v43
  %45 = xla_tuple %44
  %v46 = vmul.f32 %v41, %v43
  %47 = xla_tuple %v46
  %s48 = scalar_lea.vmem %s2, 32
  %49 = vst [vmem:[%s48] sm:$0xff] %v46
  %s50 = scalar_lea.vmem %s0, 40
  %v51 = vld [vmem:[%s50] sm:$0xff]
  %s52 = scalar_lea.vmem %s1, 40
  %v53 = vld [vmem:[%s52] sm:$0xff]
  %54 = xla_tuple %v51, %v53
  %55 = xla_tuple %54
  %v56 = vmul.f32 %v51, %v53
  %57 = xla_tuple %v56
  %s58 = scalar_lea.vmem %s2, 40
  %59 = vst [vmem:[%s58] sm:$0xff] %v56
  %s60 = scalar_lea.vmem %s0, 48
  %v61 = vld [vmem:[%s60] sm:$0xff]
  %s62 = scalar_lea.vmem %s1, 48
  %v63 = vld [vmem:[%s62] sm:$0xff]
  %64 = xla_tuple %v61, %v63
  %65 = xla_tuple %64
  %v66 = vmul.f32 %v61, %v63
  %67 = xla_tuple %v66
  %s68 = scalar_lea.vmem %s2, 48
  %69 = vst [vmem:[%s68] sm:$0xff] %v66
  %s70 = scalar_lea.vmem %s0, 56
  %v71 = vld [vmem:[%s70] sm:$0xff]
  %s72 = scalar_lea.vmem %s1, 56
  %v73 = vld [vmem:[%s72] sm:$0xff]
  %74 = xla_tuple %v71, %v73
  %75 = xla_tuple %74
  %v76 = vmul.f32 %v71, %v73
  %77 = xla_tuple %v76
  %s78 = scalar_lea.vmem %s2, 56
  %79 = vst [vmem:[%s78] sm:$0xff] %v76
  %s80 = scalar_lea.vmem %s0, 64
  %v81 = vld [vmem:[%s80] sm:$0xff]
  %s82 = scalar_lea.vmem %s1, 64
  %v83 = vld [vmem:[%s82] sm:$0xff]
  %84 = xla_tuple %v81, %v83
  %85 = xla_tuple %84
  %v86 = vmul.f32 %v81, %v83
  %87 = xla_tuple %v86
  %s88 = scalar_lea.vmem %s2, 64
  %89 = vst [vmem:[%s88] sm:$0xff] %v86
  %s90 = scalar_lea.vmem %s0, 72
  %v91 = vld [vmem:[%s90] sm:$0xff]
  %s92 = scalar_lea.vmem %s1, 72
  %v93 = vld [vmem:[%s92] sm:$0xff]
  %94 = xla_tuple %v91, %v93
  %95 = xla_tuple %94
  %v96 = vmul.f32 %v91, %v93
  %97 = xla_tuple %v96
  %s98 = scalar_lea.vmem %s2, 72
  %99 = vst [vmem:[%s98] sm:$0xff] %v96
  %s100 = scalar_lea.vmem %s0, 80
  %v101 = vld [vmem:[%s100] sm:$0xff]
  %s102 = scalar_lea.vmem %s1, 80
  %v103 = vld [vmem:[%s102] sm:$0xff]
  %104 = xla_tuple %v101, %v103
  %105 = xla_tuple %104
  %v106 = vmul.f32 %v101, %v103
  %107 = xla_tuple %v106
  %s108 = scalar_lea.vmem %s2, 80
  %109 = vst [vmem:[%s108] sm:$0xff] %v106
  %s110 = scalar_lea.vmem %s0, 88
  %v111 = vld [vmem:[%s110] sm:$0xff]
  %s112 = scalar_lea.vmem %s1, 88
  %v113 = vld [vmem:[%s112] sm:$0xff]
  %114 = xla_tuple %v111, %v113
  %115 = xla_tuple %114
  %v116 = vmul.f32 %v111, %v113
  %117 = xla_tuple %v116
  %s118 = scalar_lea.vmem %s2, 88
  %119 = vst [vmem:[%s118] sm:$0xff] %v116
  %s120 = scalar_lea.vmem %s0, 96
  %v121 = vld [vmem:[%s120] sm:$0xff]
  %s122 = scalar_lea.vmem %s1, 96
  %v123 = vld [vmem:[%s122] sm:$0xff]
  %124 = xla_tuple %v121, %v123
  %125 = xla_tuple %124
  %v126 = vmul.f32 %v121, %v123
  %127 = xla_tuple %v126
  %s128 = scalar_lea.vmem %s2, 96
  %129 = vst [vmem:[%s128] sm:$0xff] %v126
  %s130 = scalar_lea.vmem %s0, 104
  %v131 = vld [vmem:[%s130] sm:$0xff]
  %s132 = scalar_lea.vmem %s1, 104
  %v133 = vld [vmem:[%s132] sm:$0xff]
  %134 = xla_tuple %v131, %v133
  %135 = xla_tuple %134
  %v136 = vmul.f32 %v131, %v133
  %137 = xla_tuple %v136
  %s138 = scalar_lea.vmem %s2, 104
  %139 = vst [vmem:[%s138] sm:$0xff] %v136
  %s140 = scalar_lea.vmem %s0, 112
  %v141 = vld [vmem:[%s140] sm:$0xff]
  %s142 = scalar_lea.vmem %s1, 112
  %v143 = vld [vmem:[%s142] sm:$0xff]
  %144 = xla_tuple %v141, %v143
  %145 = xla_tuple %144
  %v146 = vmul.f32 %v141, %v143
  %147 = xla_tuple %v146
  %s148 = scalar_lea.vmem %s2, 112
  %149 = vst [vmem:[%s148] sm:$0xff] %v146
  %s150 = scalar_lea.vmem %s0, 120
  %v151 = vld [vmem:[%s150] sm:$0xff]
  %s152 = scalar_lea.vmem %s1, 120
  %v153 = vld [vmem:[%s152] sm:$0xff]
  %154 = xla_tuple %v151, %v153
  %155 = xla_tuple %154
  %v156 = vmul.f32 %v151, %v153
  %157 = xla_tuple %v156
  %s158 = scalar_lea.vmem %s2, 120
  %159 = vst [vmem:[%s158] sm:$0xff] %v156
  %s160 = scalar_lea.vmem %s0, 128
  %v161 = vld [vmem:[%s160] sm:$0xff]
  %s162 = scalar_lea.vmem %s1, 128
  %v163 = vld [vmem:[%s162] sm:$0xff]
  %164 = xla_tuple %v161, %v163
  %165 = xla_tuple %164
  %v166 = vmul.f32 %v161, %v163
  %167 = xla_tuple %v166
  %s168 = scalar_lea.vmem %s2, 128
  %169 = vst [vmem:[%s168] sm:$0xff] %v166
  %s170 = scalar_lea.vmem %s0, 136
  %v171 = vld [vmem:[%s170] sm:$0xff]
  %s172 = scalar_lea.vmem %s1, 136
  %v173 = vld [vmem:[%s172] sm:$0xff]
  %174 = xla_tuple %v171, %v173
  %175 = xla_tuple %174
  %v176 = vmul.f32 %v171, %v173
  %177 = xla_tuple %v176
  %s178 = scalar_lea.vmem %s2, 136
  %179 = vst [vmem:[%s178] sm:$0xff] %v176
  %s180 = scalar_lea.vmem %s0, 144
  %v181 = vld [vmem:[%s180] sm:$0xff]
  %s182 = scalar_lea.vmem %s1, 144
  %v183 = vld [vmem:[%s182] sm:$0xff]
  %184 = xla_tuple %v181, %v183
  %185 = xla_tuple %184
  %v186 = vmul.f32 %v181, %v183
  %187 = xla_tuple %v186
  %s188 = scalar_lea.vmem %s2, 144
  %189 = vst [vmem:[%s188] sm:$0xff] %v186
  %s190 = scalar_lea.vmem %s0, 152
  %v191 = vld [vmem:[%s190] sm:$0xff]
  %s192 = scalar_lea.vmem %s1, 152
  %v193 = vld [vmem:[%s192] sm:$0xff]
  %194 = xla_tuple %v191, %v193
  %195 = xla_tuple %194
  %v196 = vmul.f32 %v191, %v193
  %197 = xla_tuple %v196
  %s198 = scalar_lea.vmem %s2, 152
  %199 = vst [vmem:[%s198] sm:$0xff] %v196
  %s200 = scalar_lea.vmem %s0, 160
  %v201 = vld [vmem:[%s200] sm:$0xff]
  %s202 = scalar_lea.vmem %s1, 160
  %v203 = vld [vmem:[%s202] sm:$0xff]
  %204 = xla_tuple %v201, %v203
  %205 = xla_tuple %204
  %v206 = vmul.f32 %v201, %v203
  %207 = xla_tuple %v206
  %s208 = scalar_lea.vmem %s2, 160
  %209 = vst [vmem:[%s208] sm:$0xff] %v206
  %s210 = scalar_lea.vmem %s0, 168
  %v211 = vld [vmem:[%s210] sm:$0xff]
  %s212 = scalar_lea.vmem %s1, 168
  %v213 = vld [vmem:[%s212] sm:$0xff]
  %214 = xla_tuple %v211, %v213
  %215 = xla_tuple %214
  %v216 = vmul.f32 %v211, %v213
  %217 = xla_tuple %v216
  %s218 = scalar_lea.vmem %s2, 168
  %219 = vst [vmem:[%s218] sm:$0xff] %v216
  %s220 = scalar_lea.vmem %s0, 176
  %v221 = vld [vmem:[%s220] sm:$0xff]
  %s222 = scalar_lea.vmem %s1, 176
  %v223 = vld [vmem:[%s222] sm:$0xff]
  %224 = xla_tuple %v221, %v223
  %225 = xla_tuple %224
  %v226 = vmul.f32 %v221, %v223
  %227 = xla_tuple %v226
  %s228 = scalar_lea.vmem %s2, 176
  %229 = vst [vmem:[%s228] sm:$0xff] %v226
  %s230 = scalar_lea.vmem %s0, 184
  %v231 = vld [vmem:[%s230] sm:$0xff]
  %s232 = scalar_lea.vmem %s1, 184
  %v233 = vld [vmem:[%s232] sm:$0xff]
  %234 = xla_tuple %v231, %v233
  %235 = xla_tuple %234
  %v236 = vmul.f32 %v231, %v233
  %237 = xla_tuple %v236
  %s238 = scalar_lea.vmem %s2, 184
  %239 = vst [vmem:[%s238] sm:$0xff] %v236
  %s240 = scalar_lea.vmem %s0, 192
  %v241 = vld [vmem:[%s240] sm:$0xff]
  %s242 = scalar_lea.vmem %s1, 192
  %v243 = vld [vmem:[%s242] sm:$0xff]
  %244 = xla_tuple %v241, %v243
  %245 = xla_tuple %244
  %v246 = vmul.f32 %v241, %v243
  %247 = xla_tuple %v246
  %s248 = scalar_lea.vmem %s2, 192
  %249 = vst [vmem:[%s248] sm:$0xff] %v246
  %s250 = scalar_lea.vmem %s0, 200
  %v251 = vld [vmem:[%s250] sm:$0xff]
  %s252 = scalar_lea.vmem %s1, 200
  %v253 = vld [vmem:[%s252] sm:$0xff]
  %254 = xla_tuple %v251, %v253
  %255 = xla_tuple %254
  %v256 = vmul.f32 %v251, %v253
  %257 = xla_tuple %v256
  %s258 = scalar_lea.vmem %s2, 200
  %259 = vst [vmem:[%s258] sm:$0xff] %v256
  %s260 = scalar_lea.vmem %s0, 208
  %v261 = vld [vmem:[%s260] sm:$0xff]
  %s262 = scalar_lea.vmem %s1, 208
  %v263 = vld [vmem:[%s262] sm:$0xff]
  %264 = xla_tuple %v261, %v263
  %265 = xla_tuple %264
  %v266 = vmul.f32 %v261, %v263
  %267 = xla_tuple %v266
  %s268 = scalar_lea.vmem %s2, 208
  %269 = vst [vmem:[%s268] sm:$0xff] %v266
  %s270 = scalar_lea.vmem %s0, 216
  %v271 = vld [vmem:[%s270] sm:$0xff]
  %s272 = scalar_lea.vmem %s1, 216
  %v273 = vld [vmem:[%s272] sm:$0xff]
  %274 = xla_tuple %v271, %v273
  %275 = xla_tuple %274
  %v276 = vmul.f32 %v271, %v273
  %277 = xla_tuple %v276
  %s278 = scalar_lea.vmem %s2, 216
  %279 = vst [vmem:[%s278] sm:$0xff] %v276
  %s280 = scalar_lea.vmem %s0, 224
  %v281 = vld [vmem:[%s280] sm:$0xff]
  %s282 = scalar_lea.vmem %s1, 224
  %v283 = vld [vmem:[%s282] sm:$0xff]
  %284 = xla_tuple %v281, %v283
  %285 = xla_tuple %284
  %v286 = vmul.f32 %v281, %v283
  %287 = xla_tuple %v286
  %s288 = scalar_lea.vmem %s2, 224
  %289 = vst [vmem:[%s288] sm:$0xff] %v286
  %s290 = scalar_lea.vmem %s0, 232
  %v291 = vld [vmem:[%s290] sm:$0xff]
  %s292 = scalar_lea.vmem %s1, 232
  %v293 = vld [vmem:[%s292] sm:$0xff]
  %294 = xla_tuple %v291, %v293
  %295 = xla_tuple %294
  %v296 = vmul.f32 %v291, %v293
  %297 = xla_tuple %v296
  %s298 = scalar_lea.vmem %s2, 232
  %299 = vst [vmem:[%s298] sm:$0xff] %v296
  %s300 = scalar_lea.vmem %s0, 240
  %v301 = vld [vmem:[%s300] sm:$0xff]
  %s302 = scalar_lea.vmem %s1, 240
  %v303 = vld [vmem:[%s302] sm:$0xff]
  %304 = xla_tuple %v301, %v303
  %305 = xla_tuple %304
  %v306 = vmul.f32 %v301, %v303
  %307 = xla_tuple %v306
  %s308 = scalar_lea.vmem %s2, 240
  %309 = vst [vmem:[%s308] sm:$0xff] %v306
  %s310 = scalar_lea.vmem %s0, 248
  %v311 = vld [vmem:[%s310] sm:$0xff]
  %s312 = scalar_lea.vmem %s1, 248
  %v313 = vld [vmem:[%s312] sm:$0xff]
  %314 = xla_tuple %v311, %v313
  %315 = xla_tuple %314
  %v316 = vmul.f32 %v311, %v313
  %317 = xla_tuple %v316
  %s318 = scalar_lea.vmem %s2, 248
  %319 = vst [vmem:[%s318] sm:$0xff] %v316
  %s320 = scalar_lea.vmem %s0, 256
  %v321 = vld [vmem:[%s320] sm:$0xff]
  %s322 = scalar_lea.vmem %s1, 256
  %v323 = vld [vmem:[%s322] sm:$0xff]
  %324 = xla_tuple %v321, %v323
  %325 = xla_tuple %324
  %v326 = vmul.f32 %v321, %v323
  %327 = xla_tuple %v326
  %s328 = scalar_lea.vmem %s2, 256
  %329 = vst [vmem:[%s328] sm:$0xff] %v326
  %s330 = scalar_lea.vmem %s0, 264
  %v331 = vld [vmem:[%s330] sm:$0xff]
  %s332 = scalar_lea.vmem %s1, 264
  %v333 = vld [vmem:[%s332] sm:$0xff]
  %334 = xla_tuple %v331, %v333
  %335 = xla_tuple %334
  %v336 = vmul.f32 %v331, %v333
  %337 = xla_tuple %v336
  %s338 = scalar_lea.vmem %s2, 264
  %339 = vst [vmem:[%s338] sm:$0xff] %v336
  %s340 = scalar_lea.vmem %s0, 272
  %v341 = vld [vmem:[%s340] sm:$0xff]
  %s342 = scalar_lea.vmem %s1, 272
  %v343 = vld [vmem:[%s342] sm:$0xff]
  %344 = xla_tuple %v341, %v343
  %345 = xla_tuple %344
  %v346 = vmul.f32 %v341, %v343
  %347 = xla_tuple %v346
  %s348 = scalar_lea.vmem %s2, 272
  %349 = vst [vmem:[%s348] sm:$0xff] %v346
  %s350 = scalar_lea.vmem %s0, 280
  %v351 = vld [vmem:[%s350] sm:$0xff]
  %s352 = scalar_lea.vmem %s1, 280
  %v353 = vld [vmem:[%s352] sm:$0xff]
  %354 = xla_tuple %v351, %v353
  %355 = xla_tuple %354
  %v356 = vmul.f32 %v351, %v353
  %357 = xla_tuple %v356
  %s358 = scalar_lea.vmem %s2, 280
  %359 = vst [vmem:[%s358] sm:$0xff] %v356
  %s360 = scalar_lea.vmem %s0, 288
  %v361 = vld [vmem:[%s360] sm:$0xff]
  %s362 = scalar_lea.vmem %s1, 288
  %v363 = vld [vmem:[%s362] sm:$0xff]
  %364 = xla_tuple %v361, %v363
  %365 = xla_tuple %364
  %v366 = vmul.f32 %v361, %v363
  %367 = xla_tuple %v366
  %s368 = scalar_lea.vmem %s2, 288
  %369 = vst [vmem:[%s368] sm:$0xff] %v366
  %s370 = scalar_lea.vmem %s0, 296
  %v371 = vld [vmem:[%s370] sm:$0xff]
  %s372 = scalar_lea.vmem %s1, 296
  %v373 = vld [vmem:[%s372] sm:$0xff]
  %374 = xla_tuple %v371, %v373
  %375 = xla_tuple %374
  %v376 = vmul.f32 %v371, %v373
  %377 = xla_tuple %v376
  %s378 = scalar_lea.vmem %s2, 296
  %379 = vst [vmem:[%s378] sm:$0xff] %v376
  %s380 = scalar_lea.vmem %s0, 304
  %v381 = vld [vmem:[%s380] sm:$0xff]
  %s382 = scalar_lea.vmem %s1, 304
  %v383 = vld [vmem:[%s382] sm:$0xff]
  %384 = xla_tuple %v381, %v383
  %385 = xla_tuple %384
  %v386 = vmul.f32 %v381, %v383
  %387 = xla_tuple %v386
  %s388 = scalar_lea.vmem %s2, 304
  %389 = vst [vmem:[%s388] sm:$0xff] %v386
  %s390 = scalar_lea.vmem %s0, 312
  %v391 = vld [vmem:[%s390] sm:$0xff]
  %s392 = scalar_lea.vmem %s1, 312
  %v393 = vld [vmem:[%s392] sm:$0xff]
  %394 = xla_tuple %v391, %v393
  %395 = xla_tuple %394
  %v396 = vmul.f32 %v391, %v393
  %397 = xla_tuple %v396
  %s398 = scalar_lea.vmem %s2, 312
  %399 = vst [vmem:[%s398] sm:$0xff] %v396
  %s400 = scalar_lea.vmem %s0, 320
  %v401 = vld [vmem:[%s400] sm:$0xff]
  %s402 = scalar_lea.vmem %s1, 320
  %v403 = vld [vmem:[%s402] sm:$0xff]
  %404 = xla_tuple %v401, %v403
  %405 = xla_tuple %404
  %v406 = vmul.f32 %v401, %v403
  %407 = xla_tuple %v406
  %s408 = scalar_lea.vmem %s2, 320
  %409 = vst [vmem:[%s408] sm:$0xff] %v406
  %s410 = scalar_lea.vmem %s0, 328
  %v411 = vld [vmem:[%s410] sm:$0xff]
  %s412 = scalar_lea.vmem %s1, 328
  %v413 = vld [vmem:[%s412] sm:$0xff]
  %414 = xla_tuple %v411, %v413
  %415 = xla_tuple %414
  %v416 = vmul.f32 %v411, %v413
  %417 = xla_tuple %v416
  %s418 = scalar_lea.vmem %s2, 328
  %419 = vst [vmem:[%s418] sm:$0xff] %v416
  %s420 = scalar_lea.vmem %s0, 336
  %v421 = vld [vmem:[%s420] sm:$0xff]
  %s422 = scalar_lea.vmem %s1, 336
  %v423 = vld [vmem:[%s422] sm:$0xff]
  %424 = xla_tuple %v421, %v423
  %425 = xla_tuple %424
  %v426 = vmul.f32 %v421, %v423
  %427 = xla_tuple %v426
  %s428 = scalar_lea.vmem %s2, 336
  %429 = vst [vmem:[%s428] sm:$0xff] %v426
  %s430 = scalar_lea.vmem %s0, 344
  %v431 = vld [vmem:[%s430] sm:$0xff]
  %s432 = scalar_lea.vmem %s1, 344
  %v433 = vld [vmem:[%s432] sm:$0xff]
  %434 = xla_tuple %v431, %v433
  %435 = xla_tuple %434
  %v436 = vmul.f32 %v431, %v433
  %437 = xla_tuple %v436
  %s438 = scalar_lea.vmem %s2, 344
  %439 = vst [vmem:[%s438] sm:$0xff] %v436
  %s440 = scalar_lea.vmem %s0, 352
  %v441 = vld [vmem:[%s440] sm:$0xff]
  %s442 = scalar_lea.vmem %s1, 352
  %v443 = vld [vmem:[%s442] sm:$0xff]
  %444 = xla_tuple %v441, %v443
  %445 = xla_tuple %444
  %v446 = vmul.f32 %v441, %v443
  %447 = xla_tuple %v446
  %s448 = scalar_lea.vmem %s2, 352
  %449 = vst [vmem:[%s448] sm:$0xff] %v446
  %s450 = scalar_lea.vmem %s0, 360
  %v451 = vld [vmem:[%s450] sm:$0xff]
  %s452 = scalar_lea.vmem %s1, 360
  %v453 = vld [vmem:[%s452] sm:$0xff]
  %454 = xla_tuple %v451, %v453
  %455 = xla_tuple %454
  %v456 = vmul.f32 %v451, %v453
  %457 = xla_tuple %v456
  %s458 = scalar_lea.vmem %s2, 360
  %459 = vst [vmem:[%s458] sm:$0xff] %v456
  %s460 = scalar_lea.vmem %s0, 368
  %v461 = vld [vmem:[%s460] sm:$0xff]
  %s462 = scalar_lea.vmem %s1, 368
  %v463 = vld [vmem:[%s462] sm:$0xff]
  %464 = xla_tuple %v461, %v463
  %465 = xla_tuple %464
  %v466 = vmul.f32 %v461, %v463
  %467 = xla_tuple %v466
  %s468 = scalar_lea.vmem %s2, 368
  %469 = vst [vmem:[%s468] sm:$0xff] %v466
  %s470 = scalar_lea.vmem %s0, 376
  %v471 = vld [vmem:[%s470] sm:$0xff]
  %s472 = scalar_lea.vmem %s1, 376
  %v473 = vld [vmem:[%s472] sm:$0xff]
  %474 = xla_tuple %v471, %v473
  %475 = xla_tuple %474
  %v476 = vmul.f32 %v471, %v473
  %477 = xla_tuple %v476
  %s478 = scalar_lea.vmem %s2, 376
  %479 = vst [vmem:[%s478] sm:$0xff] %v476
  %s480 = scalar_lea.vmem %s0, 384
  %v481 = vld [vmem:[%s480] sm:$0xff]
  %s482 = scalar_lea.vmem %s1, 384
  %v483 = vld [vmem:[%s482] sm:$0xff]
  %484 = xla_tuple %v481, %v483
  %485 = xla_tuple %484
  %v486 = vmul.f32 %v481, %v483
  %487 = xla_tuple %v486
  %s488 = scalar_lea.vmem %s2, 384
  %489 = vst [vmem:[%s488] sm:$0xff] %v486
  %s490 = scalar_lea.vmem %s0, 392
  %v491 = vld [vmem:[%s490] sm:$0xff]
  %s492 = scalar_lea.vmem %s1, 392
  %v493 = vld [vmem:[%s492] sm:$0xff]
  %494 = xla_tuple %v491, %v493
  %495 = xla_tuple %494
  %v496 = vmul.f32 %v491, %v493
  %497 = xla_tuple %v496
  %s498 = scalar_lea.vmem %s2, 392
  %499 = vst [vmem:[%s498] sm:$0xff] %v496
  %s500 = scalar_lea.vmem %s0, 400
  %v501 = vld [vmem:[%s500] sm:$0xff]
  %s502 = scalar_lea.vmem %s1, 400
  %v503 = vld [vmem:[%s502] sm:$0xff]
  %504 = xla_tuple %v501, %v503
  %505 = xla_tuple %504
  %v506 = vmul.f32 %v501, %v503
  %507 = xla_tuple %v506
  %s508 = scalar_lea.vmem %s2, 400
  %509 = vst [vmem:[%s508] sm:$0xff] %v506
  %s510 = scalar_lea.vmem %s0, 408
  %v511 = vld [vmem:[%s510] sm:$0xff]
  %s512 = scalar_lea.vmem %s1, 408
  %v513 = vld [vmem:[%s512] sm:$0xff]
  %514 = xla_tuple %v511, %v513
  %515 = xla_tuple %514
  %v516 = vmul.f32 %v511, %v513
  %517 = xla_tuple %v516
  %s518 = scalar_lea.vmem %s2, 408
  %519 = vst [vmem:[%s518] sm:$0xff] %v516
  %s520 = scalar_lea.vmem %s0, 416
  %v521 = vld [vmem:[%s520] sm:$0xff]
  %s522 = scalar_lea.vmem %s1, 416
  %v523 = vld [vmem:[%s522] sm:$0xff]
  %524 = xla_tuple %v521, %v523
  %525 = xla_tuple %524
  %v526 = vmul.f32 %v521, %v523
  %527 = xla_tuple %v526
  %s528 = scalar_lea.vmem %s2, 416
  %529 = vst [vmem:[%s528] sm:$0xff] %v526
  %s530 = scalar_lea.vmem %s0, 424
  %v531 = vld [vmem:[%s530] sm:$0xff]
  %s532 = scalar_lea.vmem %s1, 424
  %v533 = vld [vmem:[%s532] sm:$0xff]
  %534 = xla_tuple %v531, %v533
  %535 = xla_tuple %534
  %v536 = vmul.f32 %v531, %v533
  %537 = xla_tuple %v536
  %s538 = scalar_lea.vmem %s2, 424
  %539 = vst [vmem:[%s538] sm:$0xff] %v536
  %s540 = scalar_lea.vmem %s0, 432
  %v541 = vld [vmem:[%s540] sm:$0xff]
  %s542 = scalar_lea.vmem %s1, 432
  %v543 = vld [vmem:[%s542] sm:$0xff]
  %544 = xla_tuple %v541, %v543
  %545 = xla_tuple %544
  %v546 = vmul.f32 %v541, %v543
  %547 = xla_tuple %v546
  %s548 = scalar_lea.vmem %s2, 432
  %549 = vst [vmem:[%s548] sm:$0xff] %v546
  %s550 = scalar_lea.vmem %s0, 440
  %v551 = vld [vmem:[%s550] sm:$0xff]
  %s552 = scalar_lea.vmem %s1, 440
  %v553 = vld [vmem:[%s552] sm:$0xff]
  %554 = xla_tuple %v551, %v553
  %555 = xla_tuple %554
  %v556 = vmul.f32 %v551, %v553
  %557 = xla_tuple %v556
  %s558 = scalar_lea.vmem %s2, 440
  %559 = vst [vmem:[%s558] sm:$0xff] %v556
  %s560 = scalar_lea.vmem %s0, 448
  %v561 = vld [vmem:[%s560] sm:$0xff]
  %s562 = scalar_lea.vmem %s1, 448
  %v563 = vld [vmem:[%s562] sm:$0xff]
  %564 = xla_tuple %v561, %v563
  %565 = xla_tuple %564
  %v566 = vmul.f32 %v561, %v563
  %567 = xla_tuple %v566
  %s568 = scalar_lea.vmem %s2, 448
  %569 = vst [vmem:[%s568] sm:$0xff] %v566
  %s570 = scalar_lea.vmem %s0, 456
  %v571 = vld [vmem:[%s570] sm:$0xff]
  %s572 = scalar_lea.vmem %s1, 456
  %v573 = vld [vmem:[%s572] sm:$0xff]
  %574 = xla_tuple %v571, %v573
  %575 = xla_tuple %574
  %v576 = vmul.f32 %v571, %v573
  %577 = xla_tuple %v576
  %s578 = scalar_lea.vmem %s2, 456
  %579 = vst [vmem:[%s578] sm:$0xff] %v576
  %s580 = scalar_lea.vmem %s0, 464
  %v581 = vld [vmem:[%s580] sm:$0xff]
  %s582 = scalar_lea.vmem %s1, 464
  %v583 = vld [vmem:[%s582] sm:$0xff]
  %584 = xla_tuple %v581, %v583
  %585 = xla_tuple %584
  %v586 = vmul.f32 %v581, %v583
  %587 = xla_tuple %v586
  %s588 = scalar_lea.vmem %s2, 464
  %589 = vst [vmem:[%s588] sm:$0xff] %v586
  %s590 = scalar_lea.vmem %s0, 472
  %v591 = vld [vmem:[%s590] sm:$0xff]
  %s592 = scalar_lea.vmem %s1, 472
  %v593 = vld [vmem:[%s592] sm:$0xff]
  %594 = xla_tuple %v591, %v593
  %595 = xla_tuple %594
  %v596 = vmul.f32 %v591, %v593
  %597 = xla_tuple %v596
  %s598 = scalar_lea.vmem %s2, 472
  %599 = vst [vmem:[%s598] sm:$0xff] %v596
  %s600 = scalar_lea.vmem %s0, 480
  %v601 = vld [vmem:[%s600] sm:$0xff]
  %s602 = scalar_lea.vmem %s1, 480
  %v603 = vld [vmem:[%s602] sm:$0xff]
  %604 = xla_tuple %v601, %v603
  %605 = xla_tuple %604
  %v606 = vmul.f32 %v601, %v603
  %607 = xla_tuple %v606
  %s608 = scalar_lea.vmem %s2, 480
  %609 = vst [vmem:[%s608] sm:$0xff] %v606
  %s610 = scalar_lea.vmem %s0, 488
  %v611 = vld [vmem:[%s610] sm:$0xff]
  %s612 = scalar_lea.vmem %s1, 488
  %v613 = vld [vmem:[%s612] sm:$0xff]
  %614 = xla_tuple %v611, %v613
  %615 = xla_tuple %614
  %v616 = vmul.f32 %v611, %v613
  %617 = xla_tuple %v616
  %s618 = scalar_lea.vmem %s2, 488
  %619 = vst [vmem:[%s618] sm:$0xff] %v616
  %s620 = scalar_lea.vmem %s0, 496
  %v621 = vld [vmem:[%s620] sm:$0xff]
  %s622 = scalar_lea.vmem %s1, 496
  %v623 = vld [vmem:[%s622] sm:$0xff]
  %624 = xla_tuple %v621, %v623
  %625 = xla_tuple %624
  %v626 = vmul.f32 %v621, %v623
  %627 = xla_tuple %v626
  %s628 = scalar_lea.vmem %s2, 496
  %629 = vst [vmem:[%s628] sm:$0xff] %v626
  %s630 = scalar_lea.vmem %s0, 504
  %v631 = vld [vmem:[%s630] sm:$0xff]
  %s632 = scalar_lea.vmem %s1, 504
  %v633 = vld [vmem:[%s632] sm:$0xff]
  %634 = xla_tuple %v631, %v633
  %635 = xla_tuple %634
  %v636 = vmul.f32 %v631, %v633
  %637 = xla_tuple %v636
  %s638 = scalar_lea.vmem %s2, 504
  %639 = vst [vmem:[%s638] sm:$0xff] %v636
  %s640 = scalar_lea.vmem %s0, 512
  %v641 = vld [vmem:[%s640] sm:$0xff]
  %s642 = scalar_lea.vmem %s1, 512
  %v643 = vld [vmem:[%s642] sm:$0xff]
  %644 = xla_tuple %v641, %v643
  %645 = xla_tuple %644
  %v646 = vmul.f32 %v641, %v643
  %647 = xla_tuple %v646
  %s648 = scalar_lea.vmem %s2, 512
  %649 = vst [vmem:[%s648] sm:$0xff] %v646
  %s650 = scalar_lea.vmem %s0, 520
  %v651 = vld [vmem:[%s650] sm:$0xff]
  %s652 = scalar_lea.vmem %s1, 520
  %v653 = vld [vmem:[%s652] sm:$0xff]
  %654 = xla_tuple %v651, %v653
  %655 = xla_tuple %654
  %v656 = vmul.f32 %v651, %v653
  %657 = xla_tuple %v656
  %s658 = scalar_lea.vmem %s2, 520
  %659 = vst [vmem:[%s658] sm:$0xff] %v656
  %s660 = scalar_lea.vmem %s0, 528
  %v661 = vld [vmem:[%s660] sm:$0xff]
  %s662 = scalar_lea.vmem %s1, 528
  %v663 = vld [vmem:[%s662] sm:$0xff]
  %664 = xla_tuple %v661, %v663
  %665 = xla_tuple %664
  %v666 = vmul.f32 %v661, %v663
  %667 = xla_tuple %v666
  %s668 = scalar_lea.vmem %s2, 528
  %669 = vst [vmem:[%s668] sm:$0xff] %v666
  %s670 = scalar_lea.vmem %s0, 536
  %v671 = vld [vmem:[%s670] sm:$0xff]
  %s672 = scalar_lea.vmem %s1, 536
  %v673 = vld [vmem:[%s672] sm:$0xff]
  %674 = xla_tuple %v671, %v673
  %675 = xla_tuple %674
  %v676 = vmul.f32 %v671, %v673
  %677 = xla_tuple %v676
  %s678 = scalar_lea.vmem %s2, 536
  %679 = vst [vmem:[%s678] sm:$0xff] %v676
  %s680 = scalar_lea.vmem %s0, 544
  %v681 = vld [vmem:[%s680] sm:$0xff]
  %s682 = scalar_lea.vmem %s1, 544
  %v683 = vld [vmem:[%s682] sm:$0xff]
  %684 = xla_tuple %v681, %v683
  %685 = xla_tuple %684
  %v686 = vmul.f32 %v681, %v683
  %687 = xla_tuple %v686
  %s688 = scalar_lea.vmem %s2, 544
  %689 = vst [vmem:[%s688] sm:$0xff] %v686
  %s690 = scalar_lea.vmem %s0, 552
  %v691 = vld [vmem:[%s690] sm:$0xff]
  %s692 = scalar_lea.vmem %s1, 552
  %v693 = vld [vmem:[%s692] sm:$0xff]
  %694 = xla_tuple %v691, %v693
  %695 = xla_tuple %694
  %v696 = vmul.f32 %v691, %v693
  %697 = xla_tuple %v696
  %s698 = scalar_lea.vmem %s2, 552
  %699 = vst [vmem:[%s698] sm:$0xff] %v696
  %s700 = scalar_lea.vmem %s0, 560
  %v701 = vld [vmem:[%s700] sm:$0xff]
  %s702 = scalar_lea.vmem %s1, 560
  %v703 = vld [vmem:[%s702] sm:$0xff]
  %704 = xla_tuple %v701, %v703
  %705 = xla_tuple %704
  %v706 = vmul.f32 %v701, %v703
  %707 = xla_tuple %v706
  %s708 = scalar_lea.vmem %s2, 560
  %709 = vst [vmem:[%s708] sm:$0xff] %v706
  %s710 = scalar_lea.vmem %s0, 568
  %v711 = vld [vmem:[%s710] sm:$0xff]
  %s712 = scalar_lea.vmem %s1, 568
  %v713 = vld [vmem:[%s712] sm:$0xff]
  %714 = xla_tuple %v711, %v713
  %715 = xla_tuple %714
  %v716 = vmul.f32 %v711, %v713
  %717 = xla_tuple %v716
  %s718 = scalar_lea.vmem %s2, 568
  %719 = vst [vmem:[%s718] sm:$0xff] %v716
  %s720 = scalar_lea.vmem %s0, 576
  %v721 = vld [vmem:[%s720] sm:$0xff]
  %s722 = scalar_lea.vmem %s1, 576
  %v723 = vld [vmem:[%s722] sm:$0xff]
  %724 = xla_tuple %v721, %v723
  %725 = xla_tuple %724
  %v726 = vmul.f32 %v721, %v723
  %727 = xla_tuple %v726
  %s728 = scalar_lea.vmem %s2, 576
  %729 = vst [vmem:[%s728] sm:$0xff] %v726
  %s730 = scalar_lea.vmem %s0, 584
  %v731 = vld [vmem:[%s730] sm:$0xff]
  %s732 = scalar_lea.vmem %s1, 584
  %v733 = vld [vmem:[%s732] sm:$0xff]
  %734 = xla_tuple %v731, %v733
  %735 = xla_tuple %734
  %v736 = vmul.f32 %v731, %v733
  %737 = xla_tuple %v736
  %s738 = scalar_lea.vmem %s2, 584
  %739 = vst [vmem:[%s738] sm:$0xff] %v736
  %s740 = scalar_lea.vmem %s0, 592
  %v741 = vld [vmem:[%s740] sm:$0xff]
  %s742 = scalar_lea.vmem %s1, 592
  %v743 = vld [vmem:[%s742] sm:$0xff]
  %744 = xla_tuple %v741, %v743
  %745 = xla_tuple %744
  %v746 = vmul.f32 %v741, %v743
  %747 = xla_tuple %v746
  %s748 = scalar_lea.vmem %s2, 592
  %749 = vst [vmem:[%s748] sm:$0xff] %v746
  %s750 = scalar_lea.vmem %s0, 600
  %v751 = vld [vmem:[%s750] sm:$0xff]
  %s752 = scalar_lea.vmem %s1, 600
  %v753 = vld [vmem:[%s752] sm:$0xff]
  %754 = xla_tuple %v751, %v753
  %755 = xla_tuple %754
  %v756 = vmul.f32 %v751, %v753
  %757 = xla_tuple %v756
  %s758 = scalar_lea.vmem %s2, 600
  %759 = vst [vmem:[%s758] sm:$0xff] %v756
  %s760 = scalar_lea.vmem %s0, 608
  %v761 = vld [vmem:[%s760] sm:$0xff]
  %s762 = scalar_lea.vmem %s1, 608
  %v763 = vld [vmem:[%s762] sm:$0xff]
  %764 = xla_tuple %v761, %v763
  %765 = xla_tuple %764
  %v766 = vmul.f32 %v761, %v763
  %767 = xla_tuple %v766
  %s768 = scalar_lea.vmem %s2, 608
  %769 = vst [vmem:[%s768] sm:$0xff] %v766
  %s770 = scalar_lea.vmem %s0, 616
  %v771 = vld [vmem:[%s770] sm:$0xff]
  %s772 = scalar_lea.vmem %s1, 616
  %v773 = vld [vmem:[%s772] sm:$0xff]
  %774 = xla_tuple %v771, %v773
  %775 = xla_tuple %774
  %v776 = vmul.f32 %v771, %v773
  %777 = xla_tuple %v776
  %s778 = scalar_lea.vmem %s2, 616
  %779 = vst [vmem:[%s778] sm:$0xff] %v776
  %s780 = scalar_lea.vmem %s0, 624
  %v781 = vld [vmem:[%s780] sm:$0xff]
  %s782 = scalar_lea.vmem %s1, 624
  %v783 = vld [vmem:[%s782] sm:$0xff]
  %784 = xla_tuple %v781, %v783
  %785 = xla_tuple %784
  %v786 = vmul.f32 %v781, %v783
  %787 = xla_tuple %v786
  %s788 = scalar_lea.vmem %s2, 624
  %789 = vst [vmem:[%s788] sm:$0xff] %v786
  %s790 = scalar_lea.vmem %s0, 632
  %v791 = vld [vmem:[%s790] sm:$0xff]
  %s792 = scalar_lea.vmem %s1, 632
  %v793 = vld [vmem:[%s792] sm:$0xff]
  %794 = xla_tuple %v791, %v793
  %795 = xla_tuple %794
  %v796 = vmul.f32 %v791, %v793
  %797 = xla_tuple %v796
  %s798 = scalar_lea.vmem %s2, 632
  %799 = vst [vmem:[%s798] sm:$0xff] %v796
  %s800 = scalar_lea.vmem %s0, 640
  %v801 = vld [vmem:[%s800] sm:$0xff]
  %s802 = scalar_lea.vmem %s1, 640
  %v803 = vld [vmem:[%s802] sm:$0xff]
  %804 = xla_tuple %v801, %v803
  %805 = xla_tuple %804
  %v806 = vmul.f32 %v801, %v803
  %807 = xla_tuple %v806
  %s808 = scalar_lea.vmem %s2, 640
  %809 = vst [vmem:[%s808] sm:$0xff] %v806
  %s810 = scalar_lea.vmem %s0, 648
  %v811 = vld [vmem:[%s810] sm:$0xff]
  %s812 = scalar_lea.vmem %s1, 648
  %v813 = vld [vmem:[%s812] sm:$0xff]
  %814 = xla_tuple %v811, %v813
  %815 = xla_tuple %814
  %v816 = vmul.f32 %v811, %v813
  %817 = xla_tuple %v816
  %s818 = scalar_lea.vmem %s2, 648
  %819 = vst [vmem:[%s818] sm:$0xff] %v816
  %s820 = scalar_lea.vmem %s0, 656
  %v821 = vld [vmem:[%s820] sm:$0xff]
  %s822 = scalar_lea.vmem %s1, 656
  %v823 = vld [vmem:[%s822] sm:$0xff]
  %824 = xla_tuple %v821, %v823
  %825 = xla_tuple %824
  %v826 = vmul.f32 %v821, %v823
  %827 = xla_tuple %v826
  %s828 = scalar_lea.vmem %s2, 656
  %829 = vst [vmem:[%s828] sm:$0xff] %v826
  %s830 = scalar_lea.vmem %s0, 664
  %v831 = vld [vmem:[%s830] sm:$0xff]
  %s832 = scalar_lea.vmem %s1, 664
  %v833 = vld [vmem:[%s832] sm:$0xff]
  %834 = xla_tuple %v831, %v833
  %835 = xla_tuple %834
  %v836 = vmul.f32 %v831, %v833
  %837 = xla_tuple %v836
  %s838 = scalar_lea.vmem %s2, 664
  %839 = vst [vmem:[%s838] sm:$0xff] %v836
  %s840 = scalar_lea.vmem %s0, 672
  %v841 = vld [vmem:[%s840] sm:$0xff]
  %s842 = scalar_lea.vmem %s1, 672
  %v843 = vld [vmem:[%s842] sm:$0xff]
  %844 = xla_tuple %v841, %v843
  %845 = xla_tuple %844
  %v846 = vmul.f32 %v841, %v843
  %847 = xla_tuple %v846
  %s848 = scalar_lea.vmem %s2, 672
  %849 = vst [vmem:[%s848] sm:$0xff] %v846
  %s850 = scalar_lea.vmem %s0, 680
  %v851 = vld [vmem:[%s850] sm:$0xff]
  %s852 = scalar_lea.vmem %s1, 680
  %v853 = vld [vmem:[%s852] sm:$0xff]
  %854 = xla_tuple %v851, %v853
  %855 = xla_tuple %854
  %v856 = vmul.f32 %v851, %v853
  %857 = xla_tuple %v856
  %s858 = scalar_lea.vmem %s2, 680
  %859 = vst [vmem:[%s858] sm:$0xff] %v856
  %s860 = scalar_lea.vmem %s0, 688
  %v861 = vld [vmem:[%s860] sm:$0xff]
  %s862 = scalar_lea.vmem %s1, 688
  %v863 = vld [vmem:[%s862] sm:$0xff]
  %864 = xla_tuple %v861, %v863
  %865 = xla_tuple %864
  %v866 = vmul.f32 %v861, %v863
  %867 = xla_tuple %v866
  %s868 = scalar_lea.vmem %s2, 688
  %869 = vst [vmem:[%s868] sm:$0xff] %v866
  %s870 = scalar_lea.vmem %s0, 696
  %v871 = vld [vmem:[%s870] sm:$0xff]
  %s872 = scalar_lea.vmem %s1, 696
  %v873 = vld [vmem:[%s872] sm:$0xff]
  %874 = xla_tuple %v871, %v873
  %875 = xla_tuple %874
  %v876 = vmul.f32 %v871, %v873
  %877 = xla_tuple %v876
  %s878 = scalar_lea.vmem %s2, 696
  %879 = vst [vmem:[%s878] sm:$0xff] %v876
  %s880 = scalar_lea.vmem %s0, 704
  %v881 = vld [vmem:[%s880] sm:$0xff]
  %s882 = scalar_lea.vmem %s1, 704
  %v883 = vld [vmem:[%s882] sm:$0xff]
  %884 = xla_tuple %v881, %v883
  %885 = xla_tuple %884
  %v886 = vmul.f32 %v881, %v883
  %887 = xla_tuple %v886
  %s888 = scalar_lea.vmem %s2, 704
  %889 = vst [vmem:[%s888] sm:$0xff] %v886
  %s890 = scalar_lea.vmem %s0, 712
  %v891 = vld [vmem:[%s890] sm:$0xff]
  %s892 = scalar_lea.vmem %s1, 712
  %v893 = vld [vmem:[%s892] sm:$0xff]
  %894 = xla_tuple %v891, %v893
  %895 = xla_tuple %894
  %v896 = vmul.f32 %v891, %v893
  %897 = xla_tuple %v896
  %s898 = scalar_lea.vmem %s2, 712
  %899 = vst [vmem:[%s898] sm:$0xff] %v896
  %s900 = scalar_lea.vmem %s0, 720
  %v901 = vld [vmem:[%s900] sm:$0xff]
  %s902 = scalar_lea.vmem %s1, 720
  %v903 = vld [vmem:[%s902] sm:$0xff]
  %904 = xla_tuple %v901, %v903
  %905 = xla_tuple %904
  %v906 = vmul.f32 %v901, %v903
  %907 = xla_tuple %v906
  %s908 = scalar_lea.vmem %s2, 720
  %909 = vst [vmem:[%s908] sm:$0xff] %v906
  %s910 = scalar_lea.vmem %s0, 728
  %v911 = vld [vmem:[%s910] sm:$0xff]
  %s912 = scalar_lea.vmem %s1, 728
  %v913 = vld [vmem:[%s912] sm:$0xff]
  %914 = xla_tuple %v911, %v913
  %915 = xla_tuple %914
  %v916 = vmul.f32 %v911, %v913
  %917 = xla_tuple %v916
  %s918 = scalar_lea.vmem %s2, 728
  %919 = vst [vmem:[%s918] sm:$0xff] %v916
  %s920 = scalar_lea.vmem %s0, 736
  %v921 = vld [vmem:[%s920] sm:$0xff]
  %s922 = scalar_lea.vmem %s1, 736
  %v923 = vld [vmem:[%s922] sm:$0xff]
  %924 = xla_tuple %v921, %v923
  %925 = xla_tuple %924
  %v926 = vmul.f32 %v921, %v923
  %927 = xla_tuple %v926
  %s928 = scalar_lea.vmem %s2, 736
  %929 = vst [vmem:[%s928] sm:$0xff] %v926
  %s930 = scalar_lea.vmem %s0, 744
  %v931 = vld [vmem:[%s930] sm:$0xff]
  %s932 = scalar_lea.vmem %s1, 744
  %v933 = vld [vmem:[%s932] sm:$0xff]
  %934 = xla_tuple %v931, %v933
  %935 = xla_tuple %934
  %v936 = vmul.f32 %v931, %v933
  %937 = xla_tuple %v936
  %s938 = scalar_lea.vmem %s2, 744
  %939 = vst [vmem:[%s938] sm:$0xff] %v936
  %s940 = scalar_lea.vmem %s0, 752
  %v941 = vld [vmem:[%s940] sm:$0xff]
  %s942 = scalar_lea.vmem %s1, 752
  %v943 = vld [vmem:[%s942] sm:$0xff]
  %944 = xla_tuple %v941, %v943
  %945 = xla_tuple %944
  %v946 = vmul.f32 %v941, %v943
  %947 = xla_tuple %v946
  %s948 = scalar_lea.vmem %s2, 752
  %949 = vst [vmem:[%s948] sm:$0xff] %v946
  %s950 = scalar_lea.vmem %s0, 760
  %v951 = vld [vmem:[%s950] sm:$0xff]
  %s952 = scalar_lea.vmem %s1, 760
  %v953 = vld [vmem:[%s952] sm:$0xff]
  %954 = xla_tuple %v951, %v953
  %955 = xla_tuple %954
  %v956 = vmul.f32 %v951, %v953
  %957 = xla_tuple %v956
  %s958 = scalar_lea.vmem %s2, 760
  %959 = vst [vmem:[%s958] sm:$0xff] %v956

// kernel: mul.0
$region0: #{mul.0}
  #allocation0 [shape = 's32[1]{0}', space=sflag, size = 0x4, scoped, tag = 'scoped memory for mul.0']
  %s0 = inlined_call_operand.vmem [shape: f32[36], index: 0, kind: input, shape index: {}]
  %s1 = inlined_call_operand.vmem [shape: f32[36], index: 1, kind: input, shape index: {}]
  %s2 = inlined_call_operand.vmem [shape: f32[36], index: 2, kind: output, shape index: {}]
  %v3 = vld [vmem:[%s0] sm:$0x1]
  %v4 = vld [vmem:[%s1] sm:$0x1]
  %5 = xla_tuple %v3, %v4
  %6 = xla_tuple %5
  %v7 = vmul.f32 %v3, %v4
  %8 = xla_tuple %v7
  %9 = vst [vmem:[%s2] sm:$0x1] %v7

// kernel: mul.2
$region0: #{mul.2}
  #allocation0 [shape = 's32[1]{0}', space=sflag, size = 0x4, scoped, tag = 'scoped memory for mul.2']
  %s0 = inlined_call_operand.vmem [shape: f32[24576], index: 0, kind: input, shape index: {}]
  %s1 = inlined_call_operand.vmem [shape: f32[24576], index: 1, kind: input, shape index: {}]
  %s2 = inlined_call_operand.vmem [shape: f32[24576], index: 2, kind: output, shape index: {}]
  %v3 = vld [vmem:[%s0] sm:$0xff]
  %v4 = vld [vmem:[%s1] sm:$0xff]
  %5 = xla_tuple %v3, %v4
  %6 = xla_tuple %5
  %v7 = vmul.f32 %v3, %v4
  %8 = xla_tuple %v7
  %9 = vst [vmem:[%s2] sm:$0xff] %v7
  %s10 = scalar_lea.vmem %s0, 8
  %v11 = vld [vmem:[%s10] sm:$0xff]
  %s12 = scalar_lea.vmem %s1, 8
  %v13 = vld [vmem:[%s12] sm:$0xff]
  %14 = xla_tuple %v11, %v13
  %15 = xla_tuple %14
  %v16 = vmul.f32 %v11, %v13
  %17 = xla_tuple %v16
  %s18 = scalar_lea.vmem %s2, 8
  %19 = vst [vmem:[%s18] sm:$0xff] %v16
  %s20 = scalar_lea.vmem %s0, 16
  %v21 = vld [vmem:[%s20] sm:$0xff]
  %s22 = scalar_lea.vmem %s1, 16
  %v23 = vld [vmem:[%s22] sm:$0xff]
  %24 = xla_tuple %v21, %v23
  %25 = xla_tuple %24
  %v26 = vmul.f32 %v21, %v23
  %27 = xla_tuple %v26
  %s28 = scalar_lea.vmem %s2, 16
  %29 = vst [vmem:[%s28] sm:$0xff] %v26
  %s30 = scalar_lea.vmem %s0, 24
  %v31 = vld [vmem:[%s30] sm:$0xff]
  %s32 = scalar_lea.vmem %s1, 24
  %v33 = vld [vmem:[%s32] sm:$0xff]
  %34 = xla_tuple %v31, %v33
  %35 = xla_tuple %34
  %v36 = vmul.f32 %v31, %v33
  %37 = xla_tuple %v36
  %s38 = scalar_lea.vmem %s2, 24
  %39 = vst [vmem:[%s38] sm:$0xff] %v36
  %s40 = scalar_lea.vmem %s0, 32
  %v41 = vld [vmem:[%s40] sm:$0xff]
  %s42 = scalar_lea.vmem %s1, 32
  %v43 = vld [vmem:[%s42] sm:$0xff]
  %44 = xla_tuple %v41, %v43
  %45 = xla_tuple %44
  %v46 = vmul.f32 %v41, %v43
  %47 = xla_tuple %v46
  %s48 = scalar_lea.vmem %s2, 32
  %49 = vst [vmem:[%s48] sm:$0xff] %v46
  %s50 = scalar_lea.vmem %s0, 40
  %v51 = vld [vmem:[%s50] sm:$0xff]
  %s52 = scalar_lea.vmem %s1, 40
  %v53 = vld [vmem:[%s52] sm:$0xff]
  %54 = xla_tuple %v51, %v53
  %55 = xla_tuple %54
  %v56 = vmul.f32 %v51, %v53
  %57 = xla_tuple %v56
  %s58 = scalar_lea.vmem %s2, 40
  %59 = vst [vmem:[%s58] sm:$0xff] %v56
  %s60 = scalar_lea.vmem %s0, 48
  %v61 = vld [vmem:[%s60] sm:$0xff]
  %s62 = scalar_lea.vmem %s1, 48
  %v63 = vld [vmem:[%s62] sm:$0xff]
  %64 = xla_tuple %v61, %v63
  %65 = xla_tuple %64
  %v66 = vmul.f32 %v61, %v63
  %67 = xla_tuple %v66
  %s68 = scalar_lea.vmem %s2, 48
  %69 = vst [vmem:[%s68] sm:$0xff] %v66
  %s70 = scalar_lea.vmem %s0, 56
  %v71 = vld [vmem:[%s70] sm:$0xff]
  %s72 = scalar_lea.vmem %s1, 56
  %v73 = vld [vmem:[%s72] sm:$0xff]
  %74 = xla_tuple %v71, %v73
  %75 = xla_tuple %74
  %v76 = vmul.f32 %v71, %v73
  %77 = xla_tuple %v76
  %s78 = scalar_lea.vmem %s2, 56
  %79 = vst [vmem:[%s78] sm:$0xff] %v76
  %s80 = scalar_lea.vmem %s0, 64
  %v81 = vld [vmem:[%s80] sm:$0xff]
  %s82 = scalar_lea.vmem %s1, 64
  %v83 = vld [vmem:[%s82] sm:$0xff]
  %84 = xla_tuple %v81, %v83
  %85 = xla_tuple %84
  %v86 = vmul.f32 %v81, %v83
  %87 = xla_tuple %v86
  %s88 = scalar_lea.vmem %s2, 64
  %89 = vst [vmem:[%s88] sm:$0xff] %v86
  %s90 = scalar_lea.vmem %s0, 72
  %v91 = vld [vmem:[%s90] sm:$0xff]
  %s92 = scalar_lea.vmem %s1, 72
  %v93 = vld [vmem:[%s92] sm:$0xff]
  %94 = xla_tuple %v91, %v93
  %95 = xla_tuple %94
  %v96 = vmul.f32 %v91, %v93
  %97 = xla_tuple %v96
  %s98 = scalar_lea.vmem %s2, 72
  %99 = vst [vmem:[%s98] sm:$0xff] %v96
  %s100 = scalar_lea.vmem %s0, 80
  %v101 = vld [vmem:[%s100] sm:$0xff]
  %s102 = scalar_lea.vmem %s1, 80
  %v103 = vld [vmem:[%s102] sm:$0xff]
  %104 = xla_tuple %v101, %v103
  %105 = xla_tuple %104
  %v106 = vmul.f32 %v101, %v103
  %107 = xla_tuple %v106
  %s108 = scalar_lea.vmem %s2, 80
  %109 = vst [vmem:[%s108] sm:$0xff] %v106
  %s110 = scalar_lea.vmem %s0, 88
  %v111 = vld [vmem:[%s110] sm:$0xff]
  %s112 = scalar_lea.vmem %s1, 88
  %v113 = vld [vmem:[%s112] sm:$0xff]
  %114 = xla_tuple %v111, %v113
  %115 = xla_tuple %114
  %v116 = vmul.f32 %v111, %v113
  %117 = xla_tuple %v116
  %s118 = scalar_lea.vmem %s2, 88
  %119 = vst [vmem:[%s118] sm:$0xff] %v116
  %s120 = scalar_lea.vmem %s0, 96
  %v121 = vld [vmem:[%s120] sm:$0xff]
  %s122 = scalar_lea.vmem %s1, 96
  %v123 = vld [vmem:[%s122] sm:$0xff]
  %124 = xla_tuple %v121, %v123
  %125 = xla_tuple %124
  %v126 = vmul.f32 %v121, %v123
  %127 = xla_tuple %v126
  %s128 = scalar_lea.vmem %s2, 96
  %129 = vst [vmem:[%s128] sm:$0xff] %v126
  %s130 = scalar_lea.vmem %s0, 104
  %v131 = vld [vmem:[%s130] sm:$0xff]
  %s132 = scalar_lea.vmem %s1, 104
  %v133 = vld [vmem:[%s132] sm:$0xff]
  %134 = xla_tuple %v131, %v133
  %135 = xla_tuple %134
  %v136 = vmul.f32 %v131, %v133
  %137 = xla_tuple %v136
  %s138 = scalar_lea.vmem %s2, 104
  %139 = vst [vmem:[%s138] sm:$0xff] %v136
  %s140 = scalar_lea.vmem %s0, 112
  %v141 = vld [vmem:[%s140] sm:$0xff]
  %s142 = scalar_lea.vmem %s1, 112
  %v143 = vld [vmem:[%s142] sm:$0xff]
  %144 = xla_tuple %v141, %v143
  %145 = xla_tuple %144
  %v146 = vmul.f32 %v141, %v143
  %147 = xla_tuple %v146
  %s148 = scalar_lea.vmem %s2, 112
  %149 = vst [vmem:[%s148] sm:$0xff] %v146
  %s150 = scalar_lea.vmem %s0, 120
  %v151 = vld [vmem:[%s150] sm:$0xff]
  %s152 = scalar_lea.vmem %s1, 120
  %v153 = vld [vmem:[%s152] sm:$0xff]
  %154 = xla_tuple %v151, %v153
  %155 = xla_tuple %154
  %v156 = vmul.f32 %v151, %v153
  %157 = xla_tuple %v156
  %s158 = scalar_lea.vmem %s2, 120
  %159 = vst [vmem:[%s158] sm:$0xff] %v156
  %s160 = scalar_lea.vmem %s0, 128
  %v161 = vld [vmem:[%s160] sm:$0xff]
  %s162 = scalar_lea.vmem %s1, 128
  %v163 = vld [vmem:[%s162] sm:$0xff]
  %164 = xla_tuple %v161, %v163
  %165 = xla_tuple %164
  %v166 = vmul.f32 %v161, %v163
  %167 = xla_tuple %v166
  %s168 = scalar_lea.vmem %s2, 128
  %169 = vst [vmem:[%s168] sm:$0xff] %v166
  %s170 = scalar_lea.vmem %s0, 136
  %v171 = vld [vmem:[%s170] sm:$0xff]
  %s172 = scalar_lea.vmem %s1, 136
  %v173 = vld [vmem:[%s172] sm:$0xff]
  %174 = xla_tuple %v171, %v173
  %175 = xla_tuple %174
  %v176 = vmul.f32 %v171, %v173
  %177 = xla_tuple %v176
  %s178 = scalar_lea.vmem %s2, 136
  %179 = vst [vmem:[%s178] sm:$0xff] %v176
  %s180 = scalar_lea.vmem %s0, 144
  %v181 = vld [vmem:[%s180] sm:$0xff]
  %s182 = scalar_lea.vmem %s1, 144
  %v183 = vld [vmem:[%s182] sm:$0xff]
  %184 = xla_tuple %v181, %v183
  %185 = xla_tuple %184
  %v186 = vmul.f32 %v181, %v183
  %187 = xla_tuple %v186
  %s188 = scalar_lea.vmem %s2, 144
  %189 = vst [vmem:[%s188] sm:$0xff] %v186
  %s190 = scalar_lea.vmem %s0, 152
  %v191 = vld [vmem:[%s190] sm:$0xff]
  %s192 = scalar_lea.vmem %s1, 152
  %v193 = vld [vmem:[%s192] sm:$0xff]
  %194 = xla_tuple %v191, %v193
  %195 = xla_tuple %194
  %v196 = vmul.f32 %v191, %v193
  %197 = xla_tuple %v196
  %s198 = scalar_lea.vmem %s2, 152
  %199 = vst [vmem:[%s198] sm:$0xff] %v196
  %s200 = scalar_lea.vmem %s0, 160
  %v201 = vld [vmem:[%s200] sm:$0xff]
  %s202 = scalar_lea.vmem %s1, 160
  %v203 = vld [vmem:[%s202] sm:$0xff]
  %204 = xla_tuple %v201, %v203
  %205 = xla_tuple %204
  %v206 = vmul.f32 %v201, %v203
  %207 = xla_tuple %v206
  %s208 = scalar_lea.vmem %s2, 160
  %209 = vst [vmem:[%s208] sm:$0xff] %v206
  %s210 = scalar_lea.vmem %s0, 168
  %v211 = vld [vmem:[%s210] sm:$0xff]
  %s212 = scalar_lea.vmem %s1, 168
  %v213 = vld [vmem:[%s212] sm:$0xff]
  %214 = xla_tuple %v211, %v213
  %215 = xla_tuple %214
  %v216 = vmul.f32 %v211, %v213
  %217 = xla_tuple %v216
  %s218 = scalar_lea.vmem %s2, 168
  %219 = vst [vmem:[%s218] sm:$0xff] %v216
  %s220 = scalar_lea.vmem %s0, 176
  %v221 = vld [vmem:[%s220] sm:$0xff]
  %s222 = scalar_lea.vmem %s1, 176
  %v223 = vld [vmem:[%s222] sm:$0xff]
  %224 = xla_tuple %v221, %v223
  %225 = xla_tuple %224
  %v226 = vmul.f32 %v221, %v223
  %227 = xla_tuple %v226
  %s228 = scalar_lea.vmem %s2, 176
  %229 = vst [vmem:[%s228] sm:$0xff] %v226
  %s230 = scalar_lea.vmem %s0, 184
  %v231 = vld [vmem:[%s230] sm:$0xff]
  %s232 = scalar_lea.vmem %s1, 184
  %v233 = vld [vmem:[%s232] sm:$0xff]
  %234 = xla_tuple %v231, %v233
  %235 = xla_tuple %234
  %v236 = vmul.f32 %v231, %v233
  %237 = xla_tuple %v236
  %s238 = scalar_lea.vmem %s2, 184
  %239 = vst [vmem:[%s238] sm:$0xff] %v236

// kernel: mul.4
$region0: #{mul.4}
  #allocation0 [shape = 's32[1]{0}', space=sflag, size = 0x4, scoped, tag = 'scoped memory for mul.4']
  %s0 = inlined_call_operand.vmem [shape: f32[14336], index: 0, kind: input, shape index: {}]
  %s1 = inlined_call_operand.vmem [shape: f32[14336], index: 1, kind: input, shape index: {}]
  %s2 = inlined_call_operand.vmem [shape: f32[14336], index: 2, kind: output, shape index: {}]
  %v3 = vld [vmem:[%s0] sm:$0xff]
  %v4 = vld [vmem:[%s1] sm:$0xff]
  %5 = xla_tuple %v3, %v4
  %6 = xla_tuple %5
  %v7 = vmul.f32 %v3, %v4
  %8 = xla_tuple %v7
  %9 = vst [vmem:[%s2] sm:$0xff] %v7
  %s10 = scalar_lea.vmem %s0, 8
  %v11 = vld [vmem:[%s10] sm:$0xff]
  %s12 = scalar_lea.vmem %s1, 8
  %v13 = vld [vmem:[%s12] sm:$0xff]
  %14 = xla_tuple %v11, %v13
  %15 = xla_tuple %14
  %v16 = vmul.f32 %v11, %v13
  %17 = xla_tuple %v16
  %s18 = scalar_lea.vmem %s2, 8
  %19 = vst [vmem:[%s18] sm:$0xff] %v16
  %s20 = scalar_lea.vmem %s0, 16
  %v21 = vld [vmem:[%s20] sm:$0xff]
  %s22 = scalar_lea.vmem %s1, 16
  %v23 = vld [vmem:[%s22] sm:$0xff]
  %24 = xla_tuple %v21, %v23
  %25 = xla_tuple %24
  %v26 = vmul.f32 %v21, %v23
  %27 = xla_tuple %v26
  %s28 = scalar_lea.vmem %s2, 16
  %29 = vst [vmem:[%s28] sm:$0xff] %v26
  %s30 = scalar_lea.vmem %s0, 24
  %v31 = vld [vmem:[%s30] sm:$0xff]
  %s32 = scalar_lea.vmem %s1, 24
  %v33 = vld [vmem:[%s32] sm:$0xff]
  %34 = xla_tuple %v31, %v33
  %35 = xla_tuple %34
  %v36 = vmul.f32 %v31, %v33
  %37 = xla_tuple %v36
  %s38 = scalar_lea.vmem %s2, 24
  %39 = vst [vmem:[%s38] sm:$0xff] %v36
  %s40 = scalar_lea.vmem %s0, 32
  %v41 = vld [vmem:[%s40] sm:$0xff]
  %s42 = scalar_lea.vmem %s1, 32
  %v43 = vld [vmem:[%s42] sm:$0xff]
  %44 = xla_tuple %v41, %v43
  %45 = xla_tuple %44
  %v46 = vmul.f32 %v41, %v43
  %47 = xla_tuple %v46
  %s48 = scalar_lea.vmem %s2, 32
  %49 = vst [vmem:[%s48] sm:$0xff] %v46
  %s50 = scalar_lea.vmem %s0, 40
  %v51 = vld [vmem:[%s50] sm:$0xff]
  %s52 = scalar_lea.vmem %s1, 40
  %v53 = vld [vmem:[%s52] sm:$0xff]
  %54 = xla_tuple %v51, %v53
  %55 = xla_tuple %54
  %v56 = vmul.f32 %v51, %v53
  %57 = xla_tuple %v56
  %s58 = scalar_lea.vmem %s2, 40
  %59 = vst [vmem:[%s58] sm:$0xff] %v56
  %s60 = scalar_lea.vmem %s0, 48
  %v61 = vld [vmem:[%s60] sm:$0xff]
  %s62 = scalar_lea.vmem %s1, 48
  %v63 = vld [vmem:[%s62] sm:$0xff]
  %64 = xla_tuple %v61, %v63
  %65 = xla_tuple %64
  %v66 = vmul.f32 %v61, %v63
  %67 = xla_tuple %v66
  %s68 = scalar_lea.vmem %s2, 48
  %69 = vst [vmem:[%s68] sm:$0xff] %v66
  %s70 = scalar_lea.vmem %s0, 56
  %v71 = vld [vmem:[%s70] sm:$0xff]
  %s72 = scalar_lea.vmem %s1, 56
  %v73 = vld [vmem:[%s72] sm:$0xff]
  %74 = xla_tuple %v71, %v73
  %75 = xla_tuple %74
  %v76 = vmul.f32 %v71, %v73
  %77 = xla_tuple %v76
  %s78 = scalar_lea.vmem %s2, 56
  %79 = vst [vmem:[%s78] sm:$0xff] %v76
  %s80 = scalar_lea.vmem %s0, 64
  %v81 = vld [vmem:[%s80] sm:$0xff]
  %s82 = scalar_lea.vmem %s1, 64
  %v83 = vld [vmem:[%s82] sm:$0xff]
  %84 = xla_tuple %v81, %v83
  %85 = xla_tuple %84
  %v86 = vmul.f32 %v81, %v83
  %87 = xla_tuple %v86
  %s88 = scalar_lea.vmem %s2, 64
  %89 = vst [vmem:[%s88] sm:$0xff] %v86
  %s90 = scalar_lea.vmem %s0, 72
  %v91 = vld [vmem:[%s90] sm:$0xff]
  %s92 = scalar_lea.vmem %s1, 72
  %v93 = vld [vmem:[%s92] sm:$0xff]
  %94 = xla_tuple %v91, %v93
  %95 = xla_tuple %94
  %v96 = vmul.f32 %v91, %v93
  %97 = xla_tuple %v96
  %s98 = scalar_lea.vmem %s2, 72
  %99 = vst [vmem:[%s98] sm:$0xff] %v96
  %s100 = scalar_lea.vmem %s0, 80
  %v101 = vld [vmem:[%s100] sm:$0xff]
  %s102 = scalar_lea.vmem %s1, 80
  %v103 = vld [vmem:[%s102] sm:$0xff]
  %104 = xla_tuple %v101, %v103
  %105 = xla_tuple %104
  %v106 = vmul.f32 %v101, %v103
  %107 = xla_tuple %v106
  %s108 = scalar_lea.vmem %s2, 80
  %109 = vst [vmem:[%s108] sm:$0xff] %v106
  %s110 = scalar_lea.vmem %s0, 88
  %v111 = vld [vmem:[%s110] sm:$0xff]
  %s112 = scalar_lea.vmem %s1, 88
  %v113 = vld [vmem:[%s112] sm:$0xff]
  %114 = xla_tuple %v111, %v113
  %115 = xla_tuple %114
  %v116 = vmul.f32 %v111, %v113
  %117 = xla_tuple %v116
  %s118 = scalar_lea.vmem %s2, 88
  %119 = vst [vmem:[%s118] sm:$0xff] %v116
  %s120 = scalar_lea.vmem %s0, 96
  %v121 = vld [vmem:[%s120] sm:$0xff]
  %s122 = scalar_lea.vmem %s1, 96
  %v123 = vld [vmem:[%s122] sm:$0xff]
  %124 = xla_tuple %v121, %v123
  %125 = xla_tuple %124
  %v126 = vmul.f32 %v121, %v123
  %127 = xla_tuple %v126
  %s128 = scalar_lea.vmem %s2, 96
  %129 = vst [vmem:[%s128] sm:$0xff] %v126
  %s130 = scalar_lea.vmem %s0, 104
  %v131 = vld [vmem:[%s130] sm:$0xff]
  %s132 = scalar_lea.vmem %s1, 104
  %v133 = vld [vmem:[%s132] sm:$0xff]
  %134 = xla_tuple %v131, %v133
  %135 = xla_tuple %134
  %v136 = vmul.f32 %v131, %v133
  %137 = xla_tuple %v136
  %s138 = scalar_lea.vmem %s2, 104
  %139 = vst [vmem:[%s138] sm:$0xff] %v136

// kernel: net_forward.1
$region0: #{net_forward.1}
  #allocation0 [shape = 'u32[]', space=smem, size = 0x4, offset = 0x4, fixed_abs, tag = 'smem constant byte address 0x4 - core index']
  #allocation1 [shape = 'u32[144,128]{1,0:T(1,128)}', space=vmem, size = 0x12000, scoped, tag = 'internal scratch']
  #allocation2 [shape = 'f32[2,8,128]{2,1,0:T(8,128)}', space=vmem, size = 0x2000, scoped, tag = 'scratch operand']
  #allocation3 [shape = 'f32[2,8,128]{2,1,0:T(8,128)}', space=vmem, size = 0x2000, scoped, tag = 'scratch operand']
  %s0 = inlined_call_operand.vmem [shape: f32[4,16,32], index: 0, kind: input, shape index: {}]
  %s1 = inlined_call_operand.vmem [shape: f32[32,768], index: 1, kind: input, shape index: {}]
  %s2 = inlined_call_operand.vmem [shape: f32[128,768], index: 2, kind: input, shape index: {}]
  %s3 = inlined_call_operand.vmem [shape: f32[7,128,16], index: 3, kind: input, shape index: {}]
  %s4 = inlined_call_operand.vmem [shape: f32[1,128], index: 4, kind: input, shape index: {}]
  %s5 = inlined_call_operand.vmem [shape: f32[1,128], index: 5, kind: input, shape index: {}]
  %s6 = inlined_call_operand.vmem [shape: f32[1,16], index: 6, kind: input, shape index: {}]
  %s7 = inlined_call_operand.hbm [shape: f32[2,16], index: 7, kind: output, shape index: {}]
  %s8 = sld [smem:[#allocation0]]
  $region38: #{net_forward.1} parent=0
    _
  %s10 = ssub.s32 1, %s8
  %s11 = scalar_select 0, %s10, %s8
  $region1: #{net_forward.1} parent=0
    #allocation4 [shape = 'u8[1024]{0}', space=vmem, size = 0x400, scoped, tag = 'output window, operand 0, single buffered']
    #allocation5 [shape = 's32[1]{0}', space=sflag, size = 0x4, scoped, tag = 'scoped memory for net_forward.1']
    %12 = vsyncpa [#allocation5], 0
    // Predicated region
    $region2: #{net_forward.1} parent=1 // pred_check
      _
    $region3: #{net_forward.1} parent=1 // pred_check_branch
      %14 = sbr.rel (0) target = $region5
    $region4: #{net_forward.1} parent=1 // pred_region
      _
    $region5: #{net_forward.1} parent=1 // pred_fallthru
      _
    // Predicated region
    $region6: #{net_forward.1} parent=1 // pred_check
      _
    $region7: #{net_forward.1} parent=1 // pred_check_branch
      %16 = sbr.rel (0) target = $region9
    $region8: #{net_forward.1} parent=1 // pred_region
      _
    $region9: #{net_forward.1} parent=1 // pred_fallthru
      _
    // Predicated region
    $region10: #{net_forward.1} parent=1 // pred_check
      _
    $region11: #{net_forward.1} parent=1 // pred_check_branch
      %18 = sbr.rel (0) target = $region13
    $region12: #{net_forward.1} parent=1 // pred_region
      _
    $region13: #{net_forward.1} parent=1 // pred_fallthru
      _
    // Predicated region
    $region14: #{net_forward.1} parent=1 // pred_check
      _
    $region15: #{net_forward.1} parent=1 // pred_check_branch
      %20 = sbr.rel (0) target = $region17
    $region16: #{net_forward.1} parent=1 // pred_region
      _
    $region17: #{net_forward.1} parent=1 // pred_fallthru
      _
    // Predicated region
    $region18: #{net_forward.1} parent=1 // pred_check
      _
    $region19: #{net_forward.1} parent=1 // pred_check_branch
      %22 = sbr.rel (0) target = $region21
    $region20: #{net_forward.1} parent=1 // pred_region
      _
    $region21: #{net_forward.1} parent=1 // pred_fallthru
      _
    // Predicated region
    $region22: #{net_forward.1} parent=1 // pred_check
      _
    $region23: #{net_forward.1} parent=1 // pred_check_branch
      %24 = sbr.rel (0) target = $region25
    $region24: #{net_forward.1} parent=1 // pred_region
      _
    $region25: #{net_forward.1} parent=1 // pred_fallthru
      _
    // Predicated region
    $region26: #{net_forward.1} parent=1 // pred_check
      _
    $region27: #{net_forward.1} parent=1 // pred_check_branch
      %26 = sbr.rel (0) target = $region29
    $region28: #{net_forward.1} parent=1 // pred_region
      _
    $region29: #{net_forward.1} parent=1 // pred_fallthru
      _
    %v27 = vld [vmem:[%s0] sm:$0xff]
    %v28 = vld [vmem:[%s0 + $0x8] sm:$0xff]
    %v29 = vld [vmem:[%s1] sm:$0xff]
    %v30 = vld [vmem:[%s1 + $0x8] sm:$0xff]
    %v31 = vld [vmem:[%s1 + $0x10] sm:$0xff]
    %v32 = vld [vmem:[%s1 + $0x18] sm:$0xff]
    %v33 = vld [vmem:[%s1 + $0x20] sm:$0xff]
    %v34 = vld [vmem:[%s1 + $0x28] sm:$0xff]
    %v35 = vld [vmem:[%s1 + $0x30] sm:$0xff]
    %v36 = vld [vmem:[%s1 + $0x38] sm:$0xff]
    %v37 = vld [vmem:[%s1 + $0x40] sm:$0xff]
    %v38 = vld [vmem:[%s1 + $0x48] sm:$0xff]
    %v39 = vld [vmem:[%s1 + $0x50] sm:$0xff]
    %v40 = vld [vmem:[%s1 + $0x58] sm:$0xff]
    %v41 = vld [vmem:[%s1 + $0x60] sm:$0xff]
    %v42 = vld [vmem:[%s1 + $0x68] sm:$0xff]
    %v43 = vld [vmem:[%s1 + $0x70] sm:$0xff]
    %v44 = vld [vmem:[%s1 + $0x78] sm:$0xff]
    %v45 = vld [vmem:[%s1 + $0x80] sm:$0xff]
    %v46 = vld [vmem:[%s1 + $0x88] sm:$0xff]
    %v47 = vld [vmem:[%s1 + $0x90] sm:$0xff]
    %v48 = vld [vmem:[%s1 + $0x98] sm:$0xff]
    %v49 = vld [vmem:[%s1 + $0xa0] sm:$0xff]
    %v50 = vld [vmem:[%s1 + $0xa8] sm:$0xff]
    %v51 = vld [vmem:[%s1 + $0xb0] sm:$0xff]
    %v52 = vld [vmem:[%s1 + $0xb8] sm:$0xff]
    %vm53 = vcmask 261120
    %v55 = vsel %vm53, %v27, 0
    %v58 = vsel %vm53, %v28, 0
    %60 = vmatprep.subr.mxu0 0.0
    %61 = vmatpush1.msra.mxu0 0.0
    %62 = vmatprep.subr.mxu0 0.0
    %63 = vmatpush1.msra.mxu0 0.0
    %64 = vmatprep.subr.mxu0 0.0
    %65 = vmatpush1.msra.mxu0 0.0
    %66 = vmatprep.subr.mxu0 0.0
    %67 = vmatpush1.msra.mxu0 0.0
    %68 = vmatprep.subr.mxu0 0.0
    %69 = vmatpush1.msra.mxu0 0.0
    %70 = vmatprep.subr.mxu0 0.0
    %71 = vmatpush1.msra.mxu0 0.0
    %72 = vmatprep.subr.mxu0 0.0
    %73 = vmatpush1.msra.mxu0 0.0
    %74 = vmatprep.subr.mxu0 0.0
    %75 = vmatpush1.msra.mxu0 0.0
    %76 = vmatprep.subr.mxu0 0.0
    %77 = vmatpush1.msra.mxu0 0.0
    %78 = vmatprep.subr.mxu0 0.0
    %79 = vmatpush1.msra.mxu0 0.0
    %80 = vmatprep.subr.mxu0 0.0
    %81 = vmatpush1.msra.mxu0 0.0
    %82 = vmatprep.subr.mxu0 0.0
    %83 = vmatpush1.msra.mxu0 0.0
    %84 = vmatprep.subr.mxu0 %v48
    %85 = vmatpush1.msra.mxu0 %v47
    %86 = vmatprep.subr.mxu0 %v42
    %87 = vmatpush1.msra.mxu0 %v41
    %88 = vmatprep.subr.mxu0 %v36
    %89 = vmatpush1.msra.mxu0 %v35
    %90 = vmatprep.subr.mxu0 %v30
    %91 = vmatpush1.msra.mxu0 %v29
    %92 = vmatprep.subr.mxu0 0.0
    %93 = vmatpush2.msra.mxu0 0.0
    %94 = vmatprep.subr.mxu0 0.0
    %95 = vmatpush2.msra.mxu0 0.0
    %96 = vmatprep.subr.mxu0 0.0
    %97 = vmatpush2.msra.mxu0 0.0
    %98 = vmatprep.subr.mxu0 0.0
    %99 = vmatpush2.msra.mxu0 0.0
    %100 = vmatprep.subr.mxu0 0.0
    %101 = vmatpush2.msra.mxu0 0.0
    %102 = vmatprep.subr.mxu0 0.0
    %103 = vmatpush2.msra.mxu0 0.0
    %104 = vmatprep.subr.mxu0 0.0
    %105 = vmatpush2.msra.mxu0 0.0
    %106 = vmatprep.subr.mxu0 0.0
    %107 = vmatpush2.msra.mxu0 0.0
    %108 = vmatprep.subr.mxu0 0.0
    %109 = vmatpush2.msra.mxu0 0.0
    %110 = vmatprep.subr.mxu0 0.0
    %111 = vmatpush2.msra.mxu0 0.0
    %112 = vmatprep.subr.mxu0 0.0
    %113 = vmatpush2.msra.mxu0 0.0
    %114 = vmatprep.subr.mxu0 0.0
    %115 = vmatpush2.msra.mxu0 0.0
    %116 = vmatprep.subr.mxu0 0.0
    %117 = vmatpush2.msra.mxu0 0.0
    %118 = vmatprep.subr.mxu0 0.0
    %119 = vmatpush2.msra.mxu0 0.0
    %120 = vmatprep.subr.mxu0 0.0
    %121 = vmatpush2.msra.mxu0 0.0
    %122 = vmatprep.subr.mxu0 0.0
    %123 = vmatpush2.msra.mxu0 0.0
    %124 = vmatprep.mubr.f32.mxu0 0.0
    %125 = vmatmul.mubr.f32.gmra.mxu0 %v55
    %v126 = vpop.f32.mrf.mxu0
    %v127 = vadd.f32 0.0, %v126
    %v128 = vpop.f32.mrf.mxu0
    %v129 = vadd.f32 0.0, %v128
    %130 = vmatprep.mubr.f32.mxu0 0.0
    %131 = vmatmul.mubr.f32.gmra.mxu0 %v58
    %v132 = vpop.f32.mrf.mxu0
    %v133 = vadd.f32 0.0, %v132
    %v134 = vpop.f32.mrf.mxu0
    %v135 = vadd.f32 0.0, %v134
    %136 = vdwg.mxu0
    %137 = vmatprep.subr.mxu0 0.0
    %138 = vmatpush1.msra.mxu0 0.0
    %139 = vmatprep.subr.mxu0 0.0
    %140 = vmatpush1.msra.mxu0 0.0
    %141 = vmatprep.subr.mxu0 0.0
    %142 = vmatpush1.msra.mxu0 0.0
    %143 = vmatprep.subr.mxu0 0.0
    %144 = vmatpush1.msra.mxu0 0.0
    %145 = vmatprep.subr.mxu0 0.0
    %146 = vmatpush1.msra.mxu0 0.0
    %147 = vmatprep.subr.mxu0 0.0
    %148 = vmatpush1.msra.mxu0 0.0
    %149 = vmatprep.subr.mxu0 0.0
    %150 = vmatpush1.msra.mxu0 0.0
    %151 = vmatprep.subr.mxu0 0.0
    %152 = vmatpush1.msra.mxu0 0.0
    %153 = vmatprep.subr.mxu0 0.0
    %154 = vmatpush1.msra.mxu0 0.0
    %155 = vmatprep.subr.mxu0 0.0
    %156 = vmatpush1.msra.mxu0 0.0
    %157 = vmatprep.subr.mxu0 0.0
    %158 = vmatpush1.msra.mxu0 0.0
    %159 = vmatprep.subr.mxu0 0.0
    %160 = vmatpush1.msra.mxu0 0.0
    %161 = vmatprep.subr.mxu0 %v50
    %162 = vmatpush1.msra.mxu0 %v49
    %163 = vmatprep.subr.mxu0 %v44
    %164 = vmatpush1.msra.mxu0 %v43
    %165 = vmatprep.subr.mxu0 %v38
    %166 = vmatpush1.msra.mxu0 %v37
    %167 = vmatprep.subr.mxu0 %v32
    %168 = vmatpush1.msra.mxu0 %v31
    %169 = vmatprep.subr.mxu0 0.0
    %170 = vmatpush2.msra.mxu0 0.0
    %171 = vmatprep.subr.mxu0 0.0
    %172 = vmatpush2.msra.mxu0 0.0
    %173 = vmatprep.subr.mxu0 0.0
    %174 = vmatpush2.msra.mxu0 0.0
    %175 = vmatprep.subr.mxu0 0.0
    %176 = vmatpush2.msra.mxu0 0.0
    %177 = vmatprep.subr.mxu0 0.0
    %178 = vmatpush2.msra.mxu0 0.0
    %179 = vmatprep.subr.mxu0 0.0
    %180 = vmatpush2.msra.mxu0 0.0
    %181 = vmatprep.subr.mxu0 0.0
    %182 = vmatpush2.msra.mxu0 0.0
    %183 = vmatprep.subr.mxu0 0.0
    %184 = vmatpush2.msra.mxu0 0.0
    %185 = vmatprep.subr.mxu0 0.0
    %186 = vmatpush2.msra.mxu0 0.0
    %187 = vmatprep.subr.mxu0 0.0
    %188 = vmatpush2.msra.mxu0 0.0
    %189 = vmatprep.subr.mxu0 0.0
    %190 = vmatpush2.msra.mxu0 0.0
    %191 = vmatprep.subr.mxu0 0.0
    %192 = vmatpush2.msra.mxu0 0.0
    %193 = vmatprep.subr.mxu0 0.0
    %194 = vmatpush2.msra.mxu0 0.0
    %195 = vmatprep.subr.mxu0 0.0
    %196 = vmatpush2.msra.mxu0 0.0
    %197 = vmatprep.subr.mxu0 0.0
    %198 = vmatpush2.msra.mxu0 0.0
    %199 = vmatprep.subr.mxu0 0.0
    %200 = vmatpush2.msra.mxu0 0.0
    %201 = vmatprep.mubr.f32.mxu0 0.0
    %202 = vmatmul.mubr.f32.gmra.mxu0 %v55
    %v203 = vpop.f32.mrf.mxu0
    %v204 = vadd.f32 0.0, %v203
    %v205 = vpop.f32.mrf.mxu0
    %v206 = vadd.f32 0.0, %v205
    %207 = vmatprep.mubr.f32.mxu0 0.0
    %208 = vmatmul.mubr.f32.gmra.mxu0 %v58
    %v209 = vpop.f32.mrf.mxu0
    %v210 = vadd.f32 0.0, %v209
    %v211 = vpop.f32.mrf.mxu0
    %v212 = vadd.f32 0.0, %v211
    %213 = vdwg.mxu0
    %214 = vmatprep.subr.mxu0 0.0
    %215 = vmatpush1.msra.mxu0 0.0
    %216 = vmatprep.subr.mxu0 0.0
    %217 = vmatpush1.msra.mxu0 0.0
    %218 = vmatprep.subr.mxu0 0.0
    %219 = vmatpush1.msra.mxu0 0.0
    %220 = vmatprep.subr.mxu0 0.0
    %221 = vmatpush1.msra.mxu0 0.0
    %222 = vmatprep.subr.mxu0 0.0
    %223 = vmatpush1.msra.mxu0 0.0
    %224 = vmatprep.subr.mxu0 0.0
    %225 = vmatpush1.msra.mxu0 0.0
    %226 = vmatprep.subr.mxu0 0.0
    %227 = vmatpush1.msra.mxu0 0.0
    %228 = vmatprep.subr.mxu0 0.0
    %229 = vmatpush1.msra.mxu0 0.0
    %230 = vmatprep.subr.mxu0 0.0
    %231 = vmatpush1.msra.mxu0 0.0
    %232 = vmatprep.subr.mxu0 0.0
    %233 = vmatpush1.msra.mxu0 0.0
    %234 = vmatprep.subr.mxu0 0.0
    %235 = vmatpush1.msra.mxu0 0.0
    %236 = vmatprep.subr.mxu0 0.0
    %237 = vmatpush1.msra.mxu0 0.0
    %238 = vmatprep.subr.mxu0 %v52
    %239 = vmatpush1.msra.mxu0 %v51
    %240 = vmatprep.subr.mxu0 %v46
    %241 = vmatpush1.msra.mxu0 %v45
    %242 = vmatprep.subr.mxu0 %v40
    %243 = vmatpush1.msra.mxu0 %v39
    %244 = vmatprep.subr.mxu0 %v34
    %245 = vmatpush1.msra.mxu0 %v33
    %246 = vmatprep.subr.mxu0 0.0
    %247 = vmatpush2.msra.mxu0 0.0
    %248 = vmatprep.subr.mxu0 0.0
    %249 = vmatpush2.msra.mxu0 0.0
    %250 = vmatprep.subr.mxu0 0.0
    %251 = vmatpush2.msra.mxu0 0.0
    %252 = vmatprep.subr.mxu0 0.0
    %253 = vmatpush2.msra.mxu0 0.0
    %254 = vmatprep.subr.mxu0 0.0
    %255 = vmatpush2.msra.mxu0 0.0
    %256 = vmatprep.subr.mxu0 0.0
    %257 = vmatpush2.msra.mxu0 0.0
    %258 = vmatprep.subr.mxu0 0.0
    %259 = vmatpush2.msra.mxu0 0.0
    %260 = vmatprep.subr.mxu0 0.0
    %261 = vmatpush2.msra.mxu0 0.0
    %262 = vmatprep.subr.mxu0 0.0
    %263 = vmatpush2.msra.mxu0 0.0
    %264 = vmatprep.subr.mxu0 0.0
    %265 = vmatpush2.msra.mxu0 0.0
    %266 = vmatprep.subr.mxu0 0.0
    %267 = vmatpush2.msra.mxu0 0.0
    %268 = vmatprep.subr.mxu0 0.0
    %269 = vmatpush2.msra.mxu0 0.0
    %270 = vmatprep.subr.mxu0 0.0
    %271 = vmatpush2.msra.mxu0 0.0
    %272 = vmatprep.subr.mxu0 0.0
    %273 = vmatpush2.msra.mxu0 0.0
    %274 = vmatprep.subr.mxu0 0.0
    %275 = vmatpush2.msra.mxu0 0.0
    %276 = vmatprep.subr.mxu0 0.0
    %277 = vmatpush2.msra.mxu0 0.0
    %278 = vmatprep.mubr.f32.mxu0 0.0
    %279 = vmatmul.mubr.f32.gmra.mxu0 %v55
    %v280 = vpop.f32.mrf.mxu0
    %v281 = vadd.f32 0.0, %v280
    %v282 = vpop.f32.mrf.mxu0
    %v283 = vadd.f32 0.0, %v282
    %284 = vmatprep.mubr.f32.mxu0 0.0
    %285 = vmatmul.mubr.f32.gmra.mxu0 %v58
    %v286 = vpop.f32.mrf.mxu0
    %v287 = vadd.f32 0.0, %v286
    %v288 = vpop.f32.mrf.mxu0
    %v289 = vadd.f32 0.0, %v288
    %290 = vdwg.mxu0
    %s291 = scalar_lea.vmem %s0, 16
    %v292 = vld [vmem:[%s291] sm:$0xff]
    %v293 = vld [vmem:[%s291 + $0x8] sm:$0xff]
    %v295 = vsel %vm53, %v292, 0
    %v298 = vsel %vm53, %v293, 0
    %300 = vmatprep.subr.mxu0 0.0
    %301 = vmatpush1.msra.mxu0 0.0
    %302 = vmatprep.subr.mxu0 0.0
    %303 = vmatpush1.msra.mxu0 0.0
    %304 = vmatprep.subr.mxu0 0.0
    %305 = vmatpush1.msra.mxu0 0.0
    %306 = vmatprep.subr.mxu0 0.0
    %307 = vmatpush1.msra.mxu0 0.0
    %308 = vmatprep.subr.mxu0 0.0
    %309 = vmatpush1.msra.mxu0 0.0
    %310 = vmatprep.subr.mxu0 0.0
    %311 = vmatpush1.msra.mxu0 0.0
    %312 = vmatprep.subr.mxu0 0.0
    %313 = vmatpush1.msra.mxu0 0.0
    %314 = vmatprep.subr.mxu0 0.0
    %315 = vmatpush1.msra.mxu0 0.0
    %316 = vmatprep.subr.mxu0 0.0
    %317 = vmatpush1.msra.mxu0 0.0
    %318 = vmatprep.subr.mxu0 0.0
    %319 = vmatpush1.msra.mxu0 0.0
    %320 = vmatprep.subr.mxu0 0.0
    %321 = vmatpush1.msra.mxu0 0.0
    %322 = vmatprep.subr.mxu0 0.0
    %323 = vmatpush1.msra.mxu0 0.0
    %324 = vmatprep.subr.mxu0 %v48
    %325 = vmatpush1.msra.mxu0 %v47
    %326 = vmatprep.subr.mxu0 %v42
    %327 = vmatpush1.msra.mxu0 %v41
    %328 = vmatprep.subr.mxu0 %v36
    %329 = vmatpush1.msra.mxu0 %v35
    %330 = vmatprep.subr.mxu0 %v30
    %331 = vmatpush1.msra.mxu0 %v29
    %332 = vmatprep.subr.mxu0 0.0
    %333 = vmatpush2.msra.mxu0 0.0
    %334 = vmatprep.subr.mxu0 0.0
    %335 = vmatpush2.msra.mxu0 0.0
    %336 = vmatprep.subr.mxu0 0.0
    %337 = vmatpush2.msra.mxu0 0.0
    %338 = vmatprep.subr.mxu0 0.0
    %339 = vmatpush2.msra.mxu0 0.0
    %340 = vmatprep.subr.mxu0 0.0
    %341 = vmatpush2.msra.mxu0 0.0
    %342 = vmatprep.subr.mxu0 0.0
    %343 = vmatpush2.msra.mxu0 0.0
    %344 = vmatprep.subr.mxu0 0.0
    %345 = vmatpush2.msra.mxu0 0.0
    %346 = vmatprep.subr.mxu0 0.0
    %347 = vmatpush2.msra.mxu0 0.0
    %348 = vmatprep.subr.mxu0 0.0
    %349 = vmatpush2.msra.mxu0 0.0
    %350 = vmatprep.subr.mxu0 0.0
    %351 = vmatpush2.msra.mxu0 0.0
    %352 = vmatprep.subr.mxu0 0.0
    %353 = vmatpush2.msra.mxu0 0.0
    %354 = vmatprep.subr.mxu0 0.0
    %355 = vmatpush2.msra.mxu0 0.0
    %356 = vmatprep.subr.mxu0 0.0
    %357 = vmatpush2.msra.mxu0 0.0
    %358 = vmatprep.subr.mxu0 0.0
    %359 = vmatpush2.msra.mxu0 0.0
    %360 = vmatprep.subr.mxu0 0.0
    %361 = vmatpush2.msra.mxu0 0.0
    %362 = vmatprep.subr.mxu0 0.0
    %363 = vmatpush2.msra.mxu0 0.0
    %364 = vmatprep.mubr.f32.mxu0 0.0
    %365 = vmatmul.mubr.f32.gmra.mxu0 %v295
    %v366 = vpop.f32.mrf.mxu0
    %v367 = vadd.f32 0.0, %v366
    %v368 = vpop.f32.mrf.mxu0
    %v369 = vadd.f32 0.0, %v368
    %370 = vmatprep.mubr.f32.mxu0 0.0
    %371 = vmatmul.mubr.f32.gmra.mxu0 %v298
    %v372 = vpop.f32.mrf.mxu0
    %v373 = vadd.f32 0.0, %v372
    %v374 = vpop.f32.mrf.mxu0
    %v375 = vadd.f32 0.0, %v374
    %376 = vdwg.mxu0
    %377 = vmatprep.subr.mxu0 0.0
    %378 = vmatpush1.msra.mxu0 0.0
    %379 = vmatprep.subr.mxu0 0.0
    %380 = vmatpush1.msra.mxu0 0.0
    %381 = vmatprep.subr.mxu0 0.0
    %382 = vmatpush1.msra.mxu0 0.0
    %383 = vmatprep.subr.mxu0 0.0
    %384 = vmatpush1.msra.mxu0 0.0
    %385 = vmatprep.subr.mxu0 0.0
    %386 = vmatpush1.msra.mxu0 0.0
    %387 = vmatprep.subr.mxu0 0.0
    %388 = vmatpush1.msra.mxu0 0.0
    %389 = vmatprep.subr.mxu0 0.0
    %390 = vmatpush1.msra.mxu0 0.0
    %391 = vmatprep.subr.mxu0 0.0
    %392 = vmatpush1.msra.mxu0 0.0
    %393 = vmatprep.subr.mxu0 0.0
    %394 = vmatpush1.msra.mxu0 0.0
    %395 = vmatprep.subr.mxu0 0.0
    %396 = vmatpush1.msra.mxu0 0.0
    %397 = vmatprep.subr.mxu0 0.0
    %398 = vmatpush1.msra.mxu0 0.0
    %399 = vmatprep.subr.mxu0 0.0
    %400 = vmatpush1.msra.mxu0 0.0
    %401 = vmatprep.subr.mxu0 %v50
    %402 = vmatpush1.msra.mxu0 %v49
    %403 = vmatprep.subr.mxu0 %v44
    %404 = vmatpush1.msra.mxu0 %v43
    %405 = vmatprep.subr.mxu0 %v38
    %406 = vmatpush1.msra.mxu0 %v37
    %407 = vmatprep.subr.mxu0 %v32
    %408 = vmatpush1.msra.mxu0 %v31
    %409 = vmatprep.subr.mxu0 0.0
    %410 = vmatpush2.msra.mxu0 0.0
    %411 = vmatprep.subr.mxu0 0.0
    %412 = vmatpush2.msra.mxu0 0.0
    %413 = vmatprep.subr.mxu0 0.0
    %414 = vmatpush2.msra.mxu0 0.0
    %415 = vmatprep.subr.mxu0 0.0
    %416 = vmatpush2.msra.mxu0 0.0
    %417 = vmatprep.subr.mxu0 0.0
    %418 = vmatpush2.msra.mxu0 0.0
    %419 = vmatprep.subr.mxu0 0.0
    %420 = vmatpush2.msra.mxu0 0.0
    %421 = vmatprep.subr.mxu0 0.0
    %422 = vmatpush2.msra.mxu0 0.0
    %423 = vmatprep.subr.mxu0 0.0
    %424 = vmatpush2.msra.mxu0 0.0
    %425 = vmatprep.subr.mxu0 0.0
    %426 = vmatpush2.msra.mxu0 0.0
    %427 = vmatprep.subr.mxu0 0.0
    %428 = vmatpush2.msra.mxu0 0.0
    %429 = vmatprep.subr.mxu0 0.0
    %430 = vmatpush2.msra.mxu0 0.0
    %431 = vmatprep.subr.mxu0 0.0
    %432 = vmatpush2.msra.mxu0 0.0
    %433 = vmatprep.subr.mxu0 0.0
    %434 = vmatpush2.msra.mxu0 0.0
    %435 = vmatprep.subr.mxu0 0.0
    %436 = vmatpush2.msra.mxu0 0.0
    %437 = vmatprep.subr.mxu0 0.0
    %438 = vmatpush2.msra.mxu0 0.0
    %439 = vmatprep.subr.mxu0 0.0
    %440 = vmatpush2.msra.mxu0 0.0
    %441 = vmatprep.mubr.f32.mxu0 0.0
    %442 = vmatmul.mubr.f32.gmra.mxu0 %v295
    %v443 = vpop.f32.mrf.mxu0
    %v444 = vadd.f32 0.0, %v443
    %v445 = vpop.f32.mrf.mxu0
    %v446 = vadd.f32 0.0, %v445
    %447 = vmatprep.mubr.f32.mxu0 0.0
    %448 = vmatmul.mubr.f32.gmra.mxu0 %v298
    %v449 = vpop.f32.mrf.mxu0
    %v450 = vadd.f32 0.0, %v449
    %v451 = vpop.f32.mrf.mxu0
    %v452 = vadd.f32 0.0, %v451
    %453 = vdwg.mxu0
    %454 = vmatprep.subr.mxu0 0.0
    %455 = vmatpush1.msra.mxu0 0.0
    %456 = vmatprep.subr.mxu0 0.0
    %457 = vmatpush1.msra.mxu0 0.0
    %458 = vmatprep.subr.mxu0 0.0
    %459 = vmatpush1.msra.mxu0 0.0
    %460 = vmatprep.subr.mxu0 0.0
    %461 = vmatpush1.msra.mxu0 0.0
    %462 = vmatprep.subr.mxu0 0.0
    %463 = vmatpush1.msra.mxu0 0.0
    %464 = vmatprep.subr.mxu0 0.0
    %465 = vmatpush1.msra.mxu0 0.0
    %466 = vmatprep.subr.mxu0 0.0
    %467 = vmatpush1.msra.mxu0 0.0
    %468 = vmatprep.subr.mxu0 0.0
    %469 = vmatpush1.msra.mxu0 0.0
    %470 = vmatprep.subr.mxu0 0.0
    %471 = vmatpush1.msra.mxu0 0.0
    %472 = vmatprep.subr.mxu0 0.0
    %473 = vmatpush1.msra.mxu0 0.0
    %474 = vmatprep.subr.mxu0 0.0
    %475 = vmatpush1.msra.mxu0 0.0
    %476 = vmatprep.subr.mxu0 0.0
    %477 = vmatpush1.msra.mxu0 0.0
    %478 = vmatprep.subr.mxu0 %v52
    %479 = vmatpush1.msra.mxu0 %v51
    %480 = vmatprep.subr.mxu0 %v46
    %481 = vmatpush1.msra.mxu0 %v45
    %482 = vmatprep.subr.mxu0 %v40
    %483 = vmatpush1.msra.mxu0 %v39
    %484 = vmatprep.subr.mxu0 %v34
    %485 = vmatpush1.msra.mxu0 %v33
    %486 = vmatprep.subr.mxu0 0.0
    %487 = vmatpush2.msra.mxu0 0.0
    %488 = vmatprep.subr.mxu0 0.0
    %489 = vmatpush2.msra.mxu0 0.0
    %490 = vmatprep.subr.mxu0 0.0
    %491 = vmatpush2.msra.mxu0 0.0
    %492 = vmatprep.subr.mxu0 0.0
    %493 = vmatpush2.msra.mxu0 0.0
    %494 = vmatprep.subr.mxu0 0.0
    %495 = vmatpush2.msra.mxu0 0.0
    %496 = vmatprep.subr.mxu0 0.0
    %497 = vmatpush2.msra.mxu0 0.0
    %498 = vmatprep.subr.mxu0 0.0
    %499 = vmatpush2.msra.mxu0 0.0
    %500 = vmatprep.subr.mxu0 0.0
    %501 = vmatpush2.msra.mxu0 0.0
    %502 = vmatprep.subr.mxu0 0.0
    %503 = vmatpush2.msra.mxu0 0.0
    %504 = vmatprep.subr.mxu0 0.0
    %505 = vmatpush2.msra.mxu0 0.0
    %506 = vmatprep.subr.mxu0 0.0
    %507 = vmatpush2.msra.mxu0 0.0
    %508 = vmatprep.subr.mxu0 0.0
    %509 = vmatpush2.msra.mxu0 0.0
    %510 = vmatprep.subr.mxu0 0.0
    %511 = vmatpush2.msra.mxu0 0.0
    %512 = vmatprep.subr.mxu0 0.0
    %513 = vmatpush2.msra.mxu0 0.0
    %514 = vmatprep.subr.mxu0 0.0
    %515 = vmatpush2.msra.mxu0 0.0
    %516 = vmatprep.subr.mxu0 0.0
    %517 = vmatpush2.msra.mxu0 0.0
    %518 = vmatprep.mubr.f32.mxu0 0.0
    %519 = vmatmul.mubr.f32.gmra.mxu0 %v295
    %v520 = vpop.f32.mrf.mxu0
    %v521 = vadd.f32 0.0, %v520
    %v522 = vpop.f32.mrf.mxu0
    %v523 = vadd.f32 0.0, %v522
    %524 = vmatprep.mubr.f32.mxu0 0.0
    %525 = vmatmul.mubr.f32.gmra.mxu0 %v298
    %v526 = vpop.f32.mrf.mxu0
    %v527 = vadd.f32 0.0, %v526
    %v528 = vpop.f32.mrf.mxu0
    %v529 = vadd.f32 0.0, %v528
    %530 = vdwg.mxu0
    %s531 = scalar_lea.vmem %s0, 32
    %v532 = vld [vmem:[%s531] sm:$0xff]
    %v533 = vld [vmem:[%s531 + $0x8] sm:$0xff]
    %v535 = vsel %vm53, %v532, 0
    %v538 = vsel %vm53, %v533, 0
    %540 = vmatprep.subr.mxu0 0.0
    %541 = vmatpush1.msra.mxu0 0.0
    %542 = vmatprep.subr.mxu0 0.0
    %543 = vmatpush1.msra.mxu0 0.0
    %544 = vmatprep.subr.mxu0 0.0
    %545 = vmatpush1.msra.mxu0 0.0
    %546 = vmatprep.subr.mxu0 0.0
    %547 = vmatpush1.msra.mxu0 0.0
    %548 = vmatprep.subr.mxu0 0.0
    %549 = vmatpush1.msra.mxu0 0.0
    %550 = vmatprep.subr.mxu0 0.0
    %551 = vmatpush1.msra.mxu0 0.0
    %552 = vmatprep.subr.mxu0 0.0
    %553 = vmatpush1.msra.mxu0 0.0
    %554 = vmatprep.subr.mxu0 0.0
    %555 = vmatpush1.msra.mxu0 0.0
    %556 = vmatprep.subr.mxu0 0.0
    %557 = vmatpush1.msra.mxu0 0.0
    %558 = vmatprep.subr.mxu0 0.0
    %559 = vmatpush1.msra.mxu0 0.0
    %560 = vmatprep.subr.mxu0 0.0
    %561 = vmatpush1.msra.mxu0 0.0
    %562 = vmatprep.subr.mxu0 0.0
    %563 = vmatpush1.msra.mxu0 0.0
    %564 = vmatprep.subr.mxu0 %v48
    %565 = vmatpush1.msra.mxu0 %v47
    %566 = vmatprep.subr.mxu0 %v42
    %567 = vmatpush1.msra.mxu0 %v41
    %568 = vmatprep.subr.mxu0 %v36
    %569 = vmatpush1.msra.mxu0 %v35
    %570 = vmatprep.subr.mxu0 %v30
    %571 = vmatpush1.msra.mxu0 %v29
    %572 = vmatprep.subr.mxu0 0.0
    %573 = vmatpush2.msra.mxu0 0.0
    %574 = vmatprep.subr.mxu0 0.0
    %575 = vmatpush2.msra.mxu0 0.0
    %576 = vmatprep.subr.mxu0 0.0
    %577 = vmatpush2.msra.mxu0 0.0
    %578 = vmatprep.subr.mxu0 0.0
    %579 = vmatpush2.msra.mxu0 0.0
    %580 = vmatprep.subr.mxu0 0.0
    %581 = vmatpush2.msra.mxu0 0.0
    %582 = vmatprep.subr.mxu0 0.0
    %583 = vmatpush2.msra.mxu0 0.0
    %584 = vmatprep.subr.mxu0 0.0
    %585 = vmatpush2.msra.mxu0 0.0
    %586 = vmatprep.subr.mxu0 0.0
    %587 = vmatpush2.msra.mxu0 0.0
    %588 = vmatprep.subr.mxu0 0.0
    %589 = vmatpush2.msra.mxu0 0.0
    %590 = vmatprep.subr.mxu0 0.0
    %591 = vmatpush2.msra.mxu0 0.0
    %592 = vmatprep.subr.mxu0 0.0
    %593 = vmatpush2.msra.mxu0 0.0
    %594 = vmatprep.subr.mxu0 0.0
    %595 = vmatpush2.msra.mxu0 0.0
    %596 = vmatprep.subr.mxu0 0.0
    %597 = vmatpush2.msra.mxu0 0.0
    %598 = vmatprep.subr.mxu0 0.0
    %599 = vmatpush2.msra.mxu0 0.0
    %600 = vmatprep.subr.mxu0 0.0
    %601 = vmatpush2.msra.mxu0 0.0
    %602 = vmatprep.subr.mxu0 0.0
    %603 = vmatpush2.msra.mxu0 0.0
    %604 = vmatprep.mubr.f32.mxu0 0.0
    %605 = vmatmul.mubr.f32.gmra.mxu0 %v535
    %v606 = vpop.f32.mrf.mxu0
    %v607 = vadd.f32 0.0, %v606
    %v608 = vpop.f32.mrf.mxu0
    %v609 = vadd.f32 0.0, %v608
    %610 = vmatprep.mubr.f32.mxu0 0.0
    %611 = vmatmul.mubr.f32.gmra.mxu0 %v538
    %v612 = vpop.f32.mrf.mxu0
    %v613 = vadd.f32 0.0, %v612
    %v614 = vpop.f32.mrf.mxu0
    %v615 = vadd.f32 0.0, %v614
    %616 = vdwg.mxu0
    %617 = vmatprep.subr.mxu0 0.0
    %618 = vmatpush1.msra.mxu0 0.0
    %619 = vmatprep.subr.mxu0 0.0
    %620 = vmatpush1.msra.mxu0 0.0
    %621 = vmatprep.subr.mxu0 0.0
    %622 = vmatpush1.msra.mxu0 0.0
    %623 = vmatprep.subr.mxu0 0.0
    %624 = vmatpush1.msra.mxu0 0.0
    %625 = vmatprep.subr.mxu0 0.0
    %626 = vmatpush1.msra.mxu0 0.0
    %627 = vmatprep.subr.mxu0 0.0
    %628 = vmatpush1.msra.mxu0 0.0
    %629 = vmatprep.subr.mxu0 0.0
    %630 = vmatpush1.msra.mxu0 0.0
    %631 = vmatprep.subr.mxu0 0.0
    %632 = vmatpush1.msra.mxu0 0.0
    %633 = vmatprep.subr.mxu0 0.0
    %634 = vmatpush1.msra.mxu0 0.0
    %635 = vmatprep.subr.mxu0 0.0
    %636 = vmatpush1.msra.mxu0 0.0
    %637 = vmatprep.subr.mxu0 0.0
    %638 = vmatpush1.msra.mxu0 0.0
    %639 = vmatprep.subr.mxu0 0.0
    %640 = vmatpush1.msra.mxu0 0.0
    %641 = vmatprep.subr.mxu0 %v50
    %642 = vmatpush1.msra.mxu0 %v49
    %643 = vmatprep.subr.mxu0 %v44
    %644 = vmatpush1.msra.mxu0 %v43
    %645 = vmatprep.subr.mxu0 %v38
    %646 = vmatpush1.msra.mxu0 %v37
    %647 = vmatprep.subr.mxu0 %v32
    %648 = vmatpush1.msra.mxu0 %v31
    %649 = vmatprep.subr.mxu0 0.0
    %650 = vmatpush2.msra.mxu0 0.0
    %651 = vmatprep.subr.mxu0 0.0
    %652 = vmatpush2.msra.mxu0 0.0
    %653 = vmatprep.subr.mxu0 0.0
    %654 = vmatpush2.msra.mxu0 0.0
    %655 = vmatprep.subr.mxu0 0.0
    %656 = vmatpush2.msra.mxu0 0.0
    %657 = vmatprep.subr.mxu0 0.0
    %658 = vmatpush2.msra.mxu0 0.0
    %659 = vmatprep.subr.mxu0 0.0
    %660 = vmatpush2.msra.mxu0 0.0
    %661 = vmatprep.subr.mxu0 0.0
    %662 = vmatpush2.msra.mxu0 0.0
    %663 = vmatprep.subr.mxu0 0.0
    %664 = vmatpush2.msra.mxu0 0.0
    %665 = vmatprep.subr.mxu0 0.0
    %666 = vmatpush2.msra.mxu0 0.0
    %667 = vmatprep.subr.mxu0 0.0
    %668 = vmatpush2.msra.mxu0 0.0
    %669 = vmatprep.subr.mxu0 0.0
    %670 = vmatpush2.msra.mxu0 0.0
    %671 = vmatprep.subr.mxu0 0.0
    %672 = vmatpush2.msra.mxu0 0.0
    %673 = vmatprep.subr.mxu0 0.0
    %674 = vmatpush2.msra.mxu0 0.0
    %675 = vmatprep.subr.mxu0 0.0
    %676 = vmatpush2.msra.mxu0 0.0
    %677 = vmatprep.subr.mxu0 0.0
    %678 = vmatpush2.msra.mxu0 0.0
    %679 = vmatprep.subr.mxu0 0.0
    %680 = vmatpush2.msra.mxu0 0.0
    %681 = vmatprep.mubr.f32.mxu0 0.0
    %682 = vmatmul.mubr.f32.gmra.mxu0 %v535
    %v683 = vpop.f32.mrf.mxu0
    %v684 = vadd.f32 0.0, %v683
    %v685 = vpop.f32.mrf.mxu0
    %v686 = vadd.f32 0.0, %v685
    %687 = vmatprep.mubr.f32.mxu0 0.0
    %688 = vmatmul.mubr.f32.gmra.mxu0 %v538
    %v689 = vpop.f32.mrf.mxu0
    %v690 = vadd.f32 0.0, %v689
    %v691 = vpop.f32.mrf.mxu0
    %v692 = vadd.f32 0.0, %v691
    %693 = vdwg.mxu0
    %694 = vmatprep.subr.mxu0 0.0
    %695 = vmatpush1.msra.mxu0 0.0
    %696 = vmatprep.subr.mxu0 0.0
    %697 = vmatpush1.msra.mxu0 0.0
    %698 = vmatprep.subr.mxu0 0.0
    %699 = vmatpush1.msra.mxu0 0.0
    %700 = vmatprep.subr.mxu0 0.0
    %701 = vmatpush1.msra.mxu0 0.0
    %702 = vmatprep.subr.mxu0 0.0
    %703 = vmatpush1.msra.mxu0 0.0
    %704 = vmatprep.subr.mxu0 0.0
    %705 = vmatpush1.msra.mxu0 0.0
    %706 = vmatprep.subr.mxu0 0.0
    %707 = vmatpush1.msra.mxu0 0.0
    %708 = vmatprep.subr.mxu0 0.0
    %709 = vmatpush1.msra.mxu0 0.0
    %710 = vmatprep.subr.mxu0 0.0
    %711 = vmatpush1.msra.mxu0 0.0
    %712 = vmatprep.subr.mxu0 0.0
    %713 = vmatpush1.msra.mxu0 0.0
    %714 = vmatprep.subr.mxu0 0.0
    %715 = vmatpush1.msra.mxu0 0.0
    %716 = vmatprep.subr.mxu0 0.0
    %717 = vmatpush1.msra.mxu0 0.0
    %718 = vmatprep.subr.mxu0 %v52
    %719 = vmatpush1.msra.mxu0 %v51
    %720 = vmatprep.subr.mxu0 %v46
    %721 = vmatpush1.msra.mxu0 %v45
    %722 = vmatprep.subr.mxu0 %v40
    %723 = vmatpush1.msra.mxu0 %v39
    %724 = vmatprep.subr.mxu0 %v34
    %725 = vmatpush1.msra.mxu0 %v33
    %726 = vmatprep.subr.mxu0 0.0
    %727 = vmatpush2.msra.mxu0 0.0
    %728 = vmatprep.subr.mxu0 0.0
    %729 = vmatpush2.msra.mxu0 0.0
    %730 = vmatprep.subr.mxu0 0.0
    %731 = vmatpush2.msra.mxu0 0.0
    %732 = vmatprep.subr.mxu0 0.0
    %733 = vmatpush2.msra.mxu0 0.0
    %734 = vmatprep.subr.mxu0 0.0
    %735 = vmatpush2.msra.mxu0 0.0
    %736 = vmatprep.subr.mxu0 0.0
    %737 = vmatpush2.msra.mxu0 0.0
    %738 = vmatprep.subr.mxu0 0.0
    %739 = vmatpush2.msra.mxu0 0.0
    %740 = vmatprep.subr.mxu0 0.0
    %741 = vmatpush2.msra.mxu0 0.0
    %742 = vmatprep.subr.mxu0 0.0
    %743 = vmatpush2.msra.mxu0 0.0
    %744 = vmatprep.subr.mxu0 0.0
    %745 = vmatpush2.msra.mxu0 0.0
    %746 = vmatprep.subr.mxu0 0.0
    %747 = vmatpush2.msra.mxu0 0.0
    %748 = vmatprep.subr.mxu0 0.0
    %749 = vmatpush2.msra.mxu0 0.0
    %750 = vmatprep.subr.mxu0 0.0
    %751 = vmatpush2.msra.mxu0 0.0
    %752 = vmatprep.subr.mxu0 0.0
    %753 = vmatpush2.msra.mxu0 0.0
    %754 = vmatprep.subr.mxu0 0.0
    %755 = vmatpush2.msra.mxu0 0.0
    %756 = vmatprep.subr.mxu0 0.0
    %757 = vmatpush2.msra.mxu0 0.0
    %758 = vmatprep.mubr.f32.mxu0 0.0
    %759 = vmatmul.mubr.f32.gmra.mxu0 %v535
    %v760 = vpop.f32.mrf.mxu0
    %v761 = vadd.f32 0.0, %v760
    %v762 = vpop.f32.mrf.mxu0
    %v763 = vadd.f32 0.0, %v762
    %764 = vmatprep.mubr.f32.mxu0 0.0
    %765 = vmatmul.mubr.f32.gmra.mxu0 %v538
    %v766 = vpop.f32.mrf.mxu0
    %v767 = vadd.f32 0.0, %v766
    %v768 = vpop.f32.mrf.mxu0
    %v769 = vadd.f32 0.0, %v768
    %770 = vdwg.mxu0
    %s771 = scalar_lea.vmem %s0, 48
    %v772 = vld [vmem:[%s771] sm:$0xff]
    %v773 = vld [vmem:[%s771 + $0x8] sm:$0xff]
    %v775 = vsel %vm53, %v772, 0
    %v778 = vsel %vm53, %v773, 0
    %780 = vmatprep.subr.mxu0 0.0
    %781 = vmatpush1.msra.mxu0 0.0
    %782 = vmatprep.subr.mxu0 0.0
    %783 = vmatpush1.msra.mxu0 0.0
    %784 = vmatprep.subr.mxu0 0.0
    %785 = vmatpush1.msra.mxu0 0.0
    %786 = vmatprep.subr.mxu0 0.0
    %787 = vmatpush1.msra.mxu0 0.0
    %788 = vmatprep.subr.mxu0 0.0
    %789 = vmatpush1.msra.mxu0 0.0
    %790 = vmatprep.subr.mxu0 0.0
    %791 = vmatpush1.msra.mxu0 0.0
    %792 = vmatprep.subr.mxu0 0.0
    %793 = vmatpush1.msra.mxu0 0.0
    %794 = vmatprep.subr.mxu0 0.0
    %795 = vmatpush1.msra.mxu0 0.0
    %796 = vmatprep.subr.mxu0 0.0
    %797 = vmatpush1.msra.mxu0 0.0
    %798 = vmatprep.subr.mxu0 0.0
    %799 = vmatpush1.msra.mxu0 0.0
    %800 = vmatprep.subr.mxu0 0.0
    %801 = vmatpush1.msra.mxu0 0.0
    %802 = vmatprep.subr.mxu0 0.0
    %803 = vmatpush1.msra.mxu0 0.0
    %804 = vmatprep.subr.mxu0 %v48
    %805 = vmatpush1.msra.mxu0 %v47
    %806 = vmatprep.subr.mxu0 %v42
    %807 = vmatpush1.msra.mxu0 %v41
    %808 = vmatprep.subr.mxu0 %v36
    %809 = vmatpush1.msra.mxu0 %v35
    %810 = vmatprep.subr.mxu0 %v30
    %811 = vmatpush1.msra.mxu0 %v29
    %812 = vmatprep.subr.mxu0 0.0
    %813 = vmatpush2.msra.mxu0 0.0
    %814 = vmatprep.subr.mxu0 0.0
    %815 = vmatpush2.msra.mxu0 0.0
    %816 = vmatprep.subr.mxu0 0.0
    %817 = vmatpush2.msra.mxu0 0.0
    %818 = vmatprep.subr.mxu0 0.0
    %819 = vmatpush2.msra.mxu0 0.0
    %820 = vmatprep.subr.mxu0 0.0
    %821 = vmatpush2.msra.mxu0 0.0
    %822 = vmatprep.subr.mxu0 0.0
    %823 = vmatpush2.msra.mxu0 0.0
    %824 = vmatprep.subr.mxu0 0.0
    %825 = vmatpush2.msra.mxu0 0.0
    %826 = vmatprep.subr.mxu0 0.0
    %827 = vmatpush2.msra.mxu0 0.0
    %828 = vmatprep.subr.mxu0 0.0
    %829 = vmatpush2.msra.mxu0 0.0
    %830 = vmatprep.subr.mxu0 0.0
    %831 = vmatpush2.msra.mxu0 0.0
    %832 = vmatprep.subr.mxu0 0.0
    %833 = vmatpush2.msra.mxu0 0.0
    %834 = vmatprep.subr.mxu0 0.0
    %835 = vmatpush2.msra.mxu0 0.0
    %836 = vmatprep.subr.mxu0 0.0
    %837 = vmatpush2.msra.mxu0 0.0
    %838 = vmatprep.subr.mxu0 0.0
    %839 = vmatpush2.msra.mxu0 0.0
    %840 = vmatprep.subr.mxu0 0.0
    %841 = vmatpush2.msra.mxu0 0.0
    %842 = vmatprep.subr.mxu0 0.0
    %843 = vmatpush2.msra.mxu0 0.0
    %844 = vmatprep.mubr.f32.mxu0 0.0
    %845 = vmatmul.mubr.f32.gmra.mxu0 %v775
    %v846 = vpop.f32.mrf.mxu0
    %v847 = vadd.f32 0.0, %v846
    %v848 = vpop.f32.mrf.mxu0
    %v849 = vadd.f32 0.0, %v848
    %850 = vmatprep.mubr.f32.mxu0 0.0
    %851 = vmatmul.mubr.f32.gmra.mxu0 %v778
    %v852 = vpop.f32.mrf.mxu0
    %v853 = vadd.f32 0.0, %v852
    %v854 = vpop.f32.mrf.mxu0
    %v855 = vadd.f32 0.0, %v854
    %856 = vdwg.mxu0
    %857 = vmatprep.subr.mxu0 0.0
    %858 = vmatpush1.msra.mxu0 0.0
    %859 = vmatprep.subr.mxu0 0.0
    %860 = vmatpush1.msra.mxu0 0.0
    %861 = vmatprep.subr.mxu0 0.0
    %862 = vmatpush1.msra.mxu0 0.0
    %863 = vmatprep.subr.mxu0 0.0
    %864 = vmatpush1.msra.mxu0 0.0
    %865 = vmatprep.subr.mxu0 0.0
    %866 = vmatpush1.msra.mxu0 0.0
    %867 = vmatprep.subr.mxu0 0.0
    %868 = vmatpush1.msra.mxu0 0.0
    %869 = vmatprep.subr.mxu0 0.0
    %870 = vmatpush1.msra.mxu0 0.0
    %871 = vmatprep.subr.mxu0 0.0
    %872 = vmatpush1.msra.mxu0 0.0
    %873 = vmatprep.subr.mxu0 0.0
    %874 = vmatpush1.msra.mxu0 0.0
    %875 = vmatprep.subr.mxu0 0.0
    %876 = vmatpush1.msra.mxu0 0.0
    %877 = vmatprep.subr.mxu0 0.0
    %878 = vmatpush1.msra.mxu0 0.0
    %879 = vmatprep.subr.mxu0 0.0
    %880 = vmatpush1.msra.mxu0 0.0
    %881 = vmatprep.subr.mxu0 %v50
    %882 = vmatpush1.msra.mxu0 %v49
    %883 = vmatprep.subr.mxu0 %v44
    %884 = vmatpush1.msra.mxu0 %v43
    %885 = vmatprep.subr.mxu0 %v38
    %886 = vmatpush1.msra.mxu0 %v37
    %887 = vmatprep.subr.mxu0 %v32
    %888 = vmatpush1.msra.mxu0 %v31
    %889 = vmatprep.subr.mxu0 0.0
    %890 = vmatpush2.msra.mxu0 0.0
    %891 = vmatprep.subr.mxu0 0.0
    %892 = vmatpush2.msra.mxu0 0.0
    %893 = vmatprep.subr.mxu0 0.0
    %894 = vmatpush2.msra.mxu0 0.0
    %895 = vmatprep.subr.mxu0 0.0
    %896 = vmatpush2.msra.mxu0 0.0
    %897 = vmatprep.subr.mxu0 0.0
    %898 = vmatpush2.msra.mxu0 0.0
    %899 = vmatprep.subr.mxu0 0.0
    %900 = vmatpush2.msra.mxu0 0.0
    %901 = vmatprep.subr.mxu0 0.0
    %902 = vmatpush2.msra.mxu0 0.0
    %903 = vmatprep.subr.mxu0 0.0
    %904 = vmatpush2.msra.mxu0 0.0
    %905 = vmatprep.subr.mxu0 0.0
    %906 = vmatpush2.msra.mxu0 0.0
    %907 = vmatprep.subr.mxu0 0.0
    %908 = vmatpush2.msra.mxu0 0.0
    %909 = vmatprep.subr.mxu0 0.0
    %910 = vmatpush2.msra.mxu0 0.0
    %911 = vmatprep.subr.mxu0 0.0
    %912 = vmatpush2.msra.mxu0 0.0
    %913 = vmatprep.subr.mxu0 0.0
    %914 = vmatpush2.msra.mxu0 0.0
    %915 = vmatprep.subr.mxu0 0.0
    %916 = vmatpush2.msra.mxu0 0.0
    %917 = vmatprep.subr.mxu0 0.0
    %918 = vmatpush2.msra.mxu0 0.0
    %919 = vmatprep.subr.mxu0 0.0
    %920 = vmatpush2.msra.mxu0 0.0
    %921 = vmatprep.mubr.f32.mxu0 0.0
    %922 = vmatmul.mubr.f32.gmra.mxu0 %v775
    %v923 = vpop.f32.mrf.mxu0
    %v924 = vadd.f32 0.0, %v923
    %v925 = vpop.f32.mrf.mxu0
    %v926 = vadd.f32 0.0, %v925
    %927 = vmatprep.mubr.f32.mxu0 0.0
    %928 = vmatmul.mubr.f32.gmra.mxu0 %v778
    %v929 = vpop.f32.mrf.mxu0
    %v930 = vadd.f32 0.0, %v929
    %v931 = vpop.f32.mrf.mxu0
    %v932 = vadd.f32 0.0, %v931
    %933 = vdwg.mxu0
    %934 = vmatprep.subr.mxu0 0.0
    %935 = vmatpush1.msra.mxu0 0.0
    %936 = vmatprep.subr.mxu0 0.0
    %937 = vmatpush1.msra.mxu0 0.0
    %938 = vmatprep.subr.mxu0 0.0
    %939 = vmatpush1.msra.mxu0 0.0
    %940 = vmatprep.subr.mxu0 0.0
    %941 = vmatpush1.msra.mxu0 0.0
    %942 = vmatprep.subr.mxu0 0.0
    %943 = vmatpush1.msra.mxu0 0.0
    %944 = vmatprep.subr.mxu0 0.0
    %945 = vmatpush1.msra.mxu0 0.0
    %946 = vmatprep.subr.mxu0 0.0
    %947 = vmatpush1.msra.mxu0 0.0
    %948 = vmatprep.subr.mxu0 0.0
    %949 = vmatpush1.msra.mxu0 0.0
    %950 = vmatprep.subr.mxu0 0.0
    %951 = vmatpush1.msra.mxu0 0.0
    %952 = vmatprep.subr.mxu0 0.0
    %953 = vmatpush1.msra.mxu0 0.0
    %954 = vmatprep.subr.mxu0 0.0
    %955 = vmatpush1.msra.mxu0 0.0
    %956 = vmatprep.subr.mxu0 0.0
    %957 = vmatpush1.msra.mxu0 0.0
    %958 = vmatprep.subr.mxu0 %v52
    %959 = vmatpush1.msra.mxu0 %v51
    %960 = vmatprep.subr.mxu0 %v46
    %961 = vmatpush1.msra.mxu0 %v45
    %962 = vmatprep.subr.mxu0 %v40
    %963 = vmatpush1.msra.mxu0 %v39
    %964 = vmatprep.subr.mxu0 %v34
    %965 = vmatpush1.msra.mxu0 %v33
    %966 = vmatprep.subr.mxu0 0.0
    %967 = vmatpush2.msra.mxu0 0.0
    %968 = vmatprep.subr.mxu0 0.0
    %969 = vmatpush2.msra.mxu0 0.0
    %970 = vmatprep.subr.mxu0 0.0
    %971 = vmatpush2.msra.mxu0 0.0
    %972 = vmatprep.subr.mxu0 0.0
    %973 = vmatpush2.msra.mxu0 0.0
    %974 = vmatprep.subr.mxu0 0.0
    %975 = vmatpush2.msra.mxu0 0.0
    %976 = vmatprep.subr.mxu0 0.0
    %977 = vmatpush2.msra.mxu0 0.0
    %978 = vmatprep.subr.mxu0 0.0
    %979 = vmatpush2.msra.mxu0 0.0
    %980 = vmatprep.subr.mxu0 0.0
    %981 = vmatpush2.msra.mxu0 0.0
    %982 = vmatprep.subr.mxu0 0.0
    %983 = vmatpush2.msra.mxu0 0.0
    %984 = vmatprep.subr.mxu0 0.0
    %985 = vmatpush2.msra.mxu0 0.0
    %986 = vmatprep.subr.mxu0 0.0
    %987 = vmatpush2.msra.mxu0 0.0
    %988 = vmatprep.subr.mxu0 0.0
    %989 = vmatpush2.msra.mxu0 0.0
    %990 = vmatprep.subr.mxu0 0.0
    %991 = vmatpush2.msra.mxu0 0.0
    %992 = vmatprep.subr.mxu0 0.0
    %993 = vmatpush2.msra.mxu0 0.0
    %994 = vmatprep.subr.mxu0 0.0
    %995 = vmatpush2.msra.mxu0 0.0
    %996 = vmatprep.subr.mxu0 0.0
    %997 = vmatpush2.msra.mxu0 0.0
    %998 = vmatprep.mubr.f32.mxu0 0.0
    %999 = vmatmul.mubr.f32.gmra.mxu0 %v775
    %v1000 = vpop.f32.mrf.mxu0
    %v1001 = vadd.f32 0.0, %v1000
    %v1002 = vpop.f32.mrf.mxu0
    %v1003 = vadd.f32 0.0, %v1002
    %1004 = vmatprep.mubr.f32.mxu0 0.0
    %1005 = vmatmul.mubr.f32.gmra.mxu0 %v778
    %v1006 = vpop.f32.mrf.mxu0
    %v1007 = vadd.f32 0.0, %v1006
    %v1008 = vpop.f32.mrf.mxu0
    %v1009 = vadd.f32 0.0, %v1008
    %1010 = vdwg.mxu0
    %v1011 = vld [vmem:[%s4] sm:$0x1]
    %v1012 = vadd.f32 %v127, %v369
    %v1013 = vadd.f32 %v133, %v375
    %v1014 = vadd.f32 %v1012, %v684
    %v1015 = vadd.f32 %v1013, %v690
    %v1016 = vadd.f32 %v206, %v521
    %v1017 = vadd.f32 %v212, %v527
    %v1018 = vadd.f32 %v1016, %v763
    %v1019 = vadd.f32 %v1017, %v769
    %v1020 = vmax.f32 %v1014, %v1018
    %v1021 = vmax.f32 %v1015, %v1019
    %v1022 = vadd.f32 %v367, %v609
    %v1023 = vadd.f32 %v373, %v615
    %v1024 = vadd.f32 %v1022, %v924
    %v1025 = vadd.f32 %v1023, %v930
    %v1026 = vmax.f32 %v1020, %v1024
    %v1027 = vmax.f32 %v1021, %v1025
    %v1028 = vadd.f32 %v446, %v761
    %v1029 = vadd.f32 %v452, %v767
    %v1030 = vadd.f32 %v1028, %v1003
    %v1031 = vadd.f32 %v1029, %v1009
    %v1032 = vmax.f32 %v1026, %v1030
    %v1033 = vmax.f32 %v1027, %v1031
    %v1035 = vlaneseq
    %v1036 = vshrl.u32 %v1035, 7
    %v1037 = vsub.s32 0, %v1036
    %v1038 = vrot.slane %v1011, %v1037
    %v1040 = vadd.f32 %v1032, %v1038
    %v1041 = vadd.f32 %v1033, %v1038
    %v1042 = vmax.f32 %v1040, 0.0
    %v1043 = vmax.f32 %v1041, 0.0
    %v1044 = vadd.f32 %v607, %v849
    %v1045 = vadd.f32 %v613, %v855
    %v1048 = vrot.slane %v204, 1
    %v1049 = vrot.slane %v210, 1
    %v1052 = vadd.f32 %v1044, %v1048
    %v1053 = vadd.f32 %v1045, %v1049
    %v1054 = vadd.f32 %v686, %v1001
    %v1055 = vadd.f32 %v692, %v1007
    %v1058 = vrot.slane %v283, 1
    %v1059 = vrot.slane %v289, 1
    %v1062 = vadd.f32 %v1054, %v1058
    %v1063 = vadd.f32 %v1055, %v1059
    %v1064 = vmax.f32 %v1052, %v1062
    %v1065 = vmax.f32 %v1053, %v1063
    %v1068 = vrot.slane %v129, 1
    %v1069 = vrot.slane %v135, 1
    %v1072 = vadd.f32 %v847, %v1068
    %v1073 = vadd.f32 %v853, %v1069
    %v1076 = vrot.slane %v444, 1
    %v1077 = vrot.slane %v450, 1
    %v1080 = vadd.f32 %v1072, %v1076
    %v1081 = vadd.f32 %v1073, %v1077
    %v1082 = vmax.f32 %v1064, %v1080
    %v1083 = vmax.f32 %v1065, %v1081
    %v1086 = vrot.slane %v281, 1
    %v1087 = vrot.slane %v287, 1
    %v1090 = vadd.f32 %v926, %v1086
    %v1091 = vadd.f32 %v932, %v1087
    %v1094 = vrot.slane %v523, 1
    %v1095 = vrot.slane %v529, 1
    %v1098 = vadd.f32 %v1090, %v1094
    %v1099 = vadd.f32 %v1091, %v1095
    %v1100 = vmax.f32 %v1082, %v1098
    %v1101 = vmax.f32 %v1083, %v1099
    %v1102 = vadd.f32 %v1100, %v1038
    %v1103 = vadd.f32 %v1101, %v1038
    %v1104 = vmax.f32 %v1102, 0.0
    %v1105 = vmax.f32 %v1103, 0.0
    %1106 = vst [vmem:[#allocation2] sm:$0x7f] %v1042
    %1107 = vst [vmem:[#allocation2 + $0x8] sm:$0x7f] %v1043
    %1108 = vst [vmem:[#allocation2 + $0x7] sm:$0x1] 0.0
    %1109 = vst [vmem:[#allocation2 + $0xf] sm:$0x1] 0.0
    %1110 = vst [vmem:[#allocation3 + $0x1] sm:$0x7f] %v1104
    %1111 = vst [vmem:[#allocation3 + $0x9] sm:$0x7f] %v1105
    %1112 = vst [vmem:[#allocation3] sm:$0x1] 0.0
    %1113 = vst [vmem:[#allocation3 + $0x8] sm:$0x1] 0.0
    %v1114 = vld [vmem:[#allocation2] sm:$0xff]
    %v1115 = vld [vmem:[#allocation2 + $0x8] sm:$0xff]
    %v1116 = vld [vmem:[%s2] sm:$0xff]
    %v1117 = vld [vmem:[%s2 + $0x8] sm:$0xff]
    %v1118 = vld [vmem:[%s2 + $0x10] sm:$0xff]
    %v1119 = vld [vmem:[%s2 + $0x18] sm:$0xff]
    %v1120 = vld [vmem:[%s2 + $0x20] sm:$0xff]
    %v1121 = vld [vmem:[%s2 + $0x28] sm:$0xff]
    %v1122 = vld [vmem:[%s2 + $0x30] sm:$0xff]
    %v1123 = vld [vmem:[%s2 + $0x38] sm:$0xff]
    %v1124 = vld [vmem:[%s2 + $0x40] sm:$0xff]
    %v1125 = vld [vmem:[%s2 + $0x48] sm:$0xff]
    %v1126 = vld [vmem:[%s2 + $0x50] sm:$0xff]
    %v1127 = vld [vmem:[%s2 + $0x58] sm:$0xff]
    %v1128 = vld [vmem:[%s2 + $0x60] sm:$0xff]
    %v1129 = vld [vmem:[%s2 + $0x68] sm:$0xff]
    %v1130 = vld [vmem:[%s2 + $0x70] sm:$0xff]
    %v1131 = vld [vmem:[%s2 + $0x78] sm:$0xff]
    %v1132 = vld [vmem:[%s2 + $0x80] sm:$0xff]
    %v1133 = vld [vmem:[%s2 + $0x88] sm:$0xff]
    %v1134 = vld [vmem:[%s2 + $0x90] sm:$0xff]
    %v1135 = vld [vmem:[%s2 + $0x98] sm:$0xff]
    %v1136 = vld [vmem:[%s2 + $0xa0] sm:$0xff]
    %v1137 = vld [vmem:[%s2 + $0xa8] sm:$0xff]
    %v1138 = vld [vmem:[%s2 + $0xb0] sm:$0xff]
    %v1139 = vld [vmem:[%s2 + $0xb8] sm:$0xff]
    %v1140 = vld [vmem:[%s2 + $0xc0] sm:$0xff]
    %v1141 = vld [vmem:[%s2 + $0xc8] sm:$0xff]
    %v1142 = vld [vmem:[%s2 + $0xd0] sm:$0xff]
    %v1143 = vld [vmem:[%s2 + $0xd8] sm:$0xff]
    %v1144 = vld [vmem:[%s2 + $0xe0] sm:$0xff]
    %v1145 = vld [vmem:[%s2 + $0xe8] sm:$0xff]
    %v1146 = vld [vmem:[%s2 + $0xf0] sm:$0xff]
    %v1147 = vld [vmem:[%s2 + $0xf8] sm:$0xff]
    %v1148 = vld [vmem:[%s2 + $0x100] sm:$0xff]
    %v1149 = vld [vmem:[%s2 + $0x108] sm:$0xff]
    %v1150 = vld [vmem:[%s2 + $0x110] sm:$0xff]
    %v1151 = vld [vmem:[%s2 + $0x118] sm:$0xff]
    %v1152 = vld [vmem:[%s2 + $0x120] sm:$0xff]
    %v1153 = vld [vmem:[%s2 + $0x128] sm:$0xff]
    %v1154 = vld [vmem:[%s2 + $0x130] sm:$0xff]
    %v1155 = vld [vmem:[%s2 + $0x138] sm:$0xff]
    %v1156 = vld [vmem:[%s2 + $0x140] sm:$0xff]
    %v1157 = vld [vmem:[%s2 + $0x148] sm:$0xff]
    %v1158 = vld [vmem:[%s2 + $0x150] sm:$0xff]
    %v1159 = vld [vmem:[%s2 + $0x158] sm:$0xff]
    %v1160 = vld [vmem:[%s2 + $0x160] sm:$0xff]
    %v1161 = vld [vmem:[%s2 + $0x168] sm:$0xff]
    %v1162 = vld [vmem:[%s2 + $0x170] sm:$0xff]
    %v1163 = vld [vmem:[%s2 + $0x178] sm:$0xff]
    %v1164 = vld [vmem:[%s2 + $0x180] sm:$0xff]
    %v1165 = vld [vmem:[%s2 + $0x188] sm:$0xff]
    %v1166 = vld [vmem:[%s2 + $0x190] sm:$0xff]
    %v1167 = vld [vmem:[%s2 + $0x198] sm:$0xff]
    %v1168 = vld [vmem:[%s2 + $0x1a0] sm:$0xff]
    %v1169 = vld [vmem:[%s2 + $0x1a8] sm:$0xff]
    %v1170 = vld [vmem:[%s2 + $0x1b0] sm:$0xff]
    %v1171 = vld [vmem:[%s2 + $0x1b8] sm:$0xff]
    %v1172 = vld [vmem:[%s2 + $0x1c0] sm:$0xff]
    %v1173 = vld [vmem:[%s2 + $0x1c8] sm:$0xff]
    %v1174 = vld [vmem:[%s2 + $0x1d0] sm:$0xff]
    %v1175 = vld [vmem:[%s2 + $0x1d8] sm:$0xff]
    %v1176 = vld [vmem:[%s2 + $0x1e0] sm:$0xff]
    %v1177 = vld [vmem:[%s2 + $0x1e8] sm:$0xff]
    %v1178 = vld [vmem:[%s2 + $0x1f0] sm:$0xff]
    %v1179 = vld [vmem:[%s2 + $0x1f8] sm:$0xff]
    %v1180 = vld [vmem:[%s2 + $0x200] sm:$0xff]
    %v1181 = vld [vmem:[%s2 + $0x208] sm:$0xff]
    %v1182 = vld [vmem:[%s2 + $0x210] sm:$0xff]
    %v1183 = vld [vmem:[%s2 + $0x218] sm:$0xff]
    %v1184 = vld [vmem:[%s2 + $0x220] sm:$0xff]
    %v1185 = vld [vmem:[%s2 + $0x228] sm:$0xff]
    %v1186 = vld [vmem:[%s2 + $0x230] sm:$0xff]
    %v1187 = vld [vmem:[%s2 + $0x238] sm:$0xff]
    %v1188 = vld [vmem:[%s2 + $0x240] sm:$0xff]
    %v1189 = vld [vmem:[%s2 + $0x248] sm:$0xff]
    %v1190 = vld [vmem:[%s2 + $0x250] sm:$0xff]
    %v1191 = vld [vmem:[%s2 + $0x258] sm:$0xff]
    %v1192 = vld [vmem:[%s2 + $0x260] sm:$0xff]
    %v1193 = vld [vmem:[%s2 + $0x268] sm:$0xff]
    %v1194 = vld [vmem:[%s2 + $0x270] sm:$0xff]
    %v1195 = vld [vmem:[%s2 + $0x278] sm:$0xff]
    %v1196 = vld [vmem:[%s2 + $0x280] sm:$0xff]
    %v1197 = vld [vmem:[%s2 + $0x288] sm:$0xff]
    %v1198 = vld [vmem:[%s2 + $0x290] sm:$0xff]
    %v1199 = vld [vmem:[%s2 + $0x298] sm:$0xff]
    %v1200 = vld [vmem:[%s2 + $0x2a0] sm:$0xff]
    %v1201 = vld [vmem:[%s2 + $0x2a8] sm:$0xff]
    %v1202 = vld [vmem:[%s2 + $0x2b0] sm:$0xff]
    %v1203 = vld [vmem:[%s2 + $0x2b8] sm:$0xff]
    %v1204 = vld [vmem:[%s2 + $0x2c0] sm:$0xff]
    %v1205 = vld [vmem:[%s2 + $0x2c8] sm:$0xff]
    %v1206 = vld [vmem:[%s2 + $0x2d0] sm:$0xff]
    %v1207 = vld [vmem:[%s2 + $0x2d8] sm:$0xff]
    %v1208 = vld [vmem:[%s2 + $0x2e0] sm:$0xff]
    %v1209 = vld [vmem:[%s2 + $0x2e8] sm:$0xff]
    %v1210 = vld [vmem:[%s2 + $0x2f0] sm:$0xff]
    %v1211 = vld [vmem:[%s2 + $0x2f8] sm:$0xff]
    %1212 = vmatprep.subr.mxu0 %v1207
    %1213 = vmatpush1.msra.mxu0 %v1206
    %1214 = vmatprep.subr.mxu0 %v1201
    %1215 = vmatpush1.msra.mxu0 %v1200
    %1216 = vmatprep.subr.mxu0 %v1195
    %1217 = vmatpush1.msra.mxu0 %v1194
    %1218 = vmatprep.subr.mxu0 %v1189
    %1219 = vmatpush1.msra.mxu0 %v1188
    %1220 = vmatprep.subr.mxu0 %v1183
    %1221 = vmatpush1.msra.mxu0 %v1182
    %1222 = vmatprep.subr.mxu0 %v1177
    %1223 = vmatpush1.msra.mxu0 %v1176
    %1224 = vmatprep.subr.mxu0 %v1171
    %1225 = vmatpush1.msra.mxu0 %v1170
    %1226 = vmatprep.subr.mxu0 %v1165
    %1227 = vmatpush1.msra.mxu0 %v1164
    %1228 = vmatprep.subr.mxu0 %v1159
    %1229 = vmatpush1.msra.mxu0 %v1158
    %1230 = vmatprep.subr.mxu0 %v1153
    %1231 = vmatpush1.msra.mxu0 %v1152
    %1232 = vmatprep.subr.mxu0 %v1147
    %1233 = vmatpush1.msra.mxu0 %v1146
    %1234 = vmatprep.subr.mxu0 %v1141
    %1235 = vmatpush1.msra.mxu0 %v1140
    %1236 = vmatprep.subr.mxu0 %v1135
    %1237 = vmatpush1.msra.mxu0 %v1134
    %1238 = vmatprep.subr.mxu0 %v1129
    %1239 = vmatpush1.msra.mxu0 %v1128
    %1240 = vmatprep.subr.mxu0 %v1123
    %1241 = vmatpush1.msra.mxu0 %v1122
    %1242 = vmatprep.subr.mxu0 %v1117
    %1243 = vmatpush1.msra.mxu0 %v1116
    %1244 = vmatprep.subr.mxu0 0.0
    %1245 = vmatpush2.msra.mxu0 0.0
    %1246 = vmatprep.subr.mxu0 0.0
    %1247 = vmatpush2.msra.mxu0 0.0
    %1248 = vmatprep.subr.mxu0 0.0
    %1249 = vmatpush2.msra.mxu0 0.0
    %1250 = vmatprep.subr.mxu0 0.0
    %1251 = vmatpush2.msra.mxu0 0.0
    %1252 = vmatprep.subr.mxu0 0.0
    %1253 = vmatpush2.msra.mxu0 0.0
    %1254 = vmatprep.subr.mxu0 0.0
    %1255 = vmatpush2.msra.mxu0 0.0
    %1256 = vmatprep.subr.mxu0 0.0
    %1257 = vmatpush2.msra.mxu0 0.0
    %1258 = vmatprep.subr.mxu0 0.0
    %1259 = vmatpush2.msra.mxu0 0.0
    %1260 = vmatprep.subr.mxu0 0.0
    %1261 = vmatpush2.msra.mxu0 0.0
    %1262 = vmatprep.subr.mxu0 0.0
    %1263 = vmatpush2.msra.mxu0 0.0
    %1264 = vmatprep.subr.mxu0 0.0
    %1265 = vmatpush2.msra.mxu0 0.0
    %1266 = vmatprep.subr.mxu0 0.0
    %1267 = vmatpush2.msra.mxu0 0.0
    %1268 = vmatprep.subr.mxu0 0.0
    %1269 = vmatpush2.msra.mxu0 0.0
    %1270 = vmatprep.subr.mxu0 0.0
    %1271 = vmatpush2.msra.mxu0 0.0
    %1272 = vmatprep.subr.mxu0 0.0
    %1273 = vmatpush2.msra.mxu0 0.0
    %1274 = vmatprep.subr.mxu0 0.0
    %1275 = vmatpush2.msra.mxu0 0.0
    %1276 = vmatprep.mubr.f32.mxu0 0.0
    %1277 = vmatmul.mubr.f32.gmra.mxu0 %v1114
    %v1278 = vpop.f32.mrf.mxu0
    %v1279 = vadd.f32 0.0, %v1278
    %v1280 = vpop.f32.mrf.mxu0
    %v1281 = vadd.f32 0.0, %v1280
    %1282 = vmatprep.mubr.f32.mxu0 0.0
    %1283 = vmatmul.mubr.f32.gmra.mxu0 %v1115
    %v1284 = vpop.f32.mrf.mxu0
    %v1285 = vadd.f32 0.0, %v1284
    %v1286 = vpop.f32.mrf.mxu0
    %v1287 = vadd.f32 0.0, %v1286
    %1288 = vdwg.mxu0
    %1289 = vmatprep.subr.mxu0 %v1209
    %1290 = vmatpush1.msra.mxu0 %v1208
    %1291 = vmatprep.subr.mxu0 %v1203
    %1292 = vmatpush1.msra.mxu0 %v1202
    %1293 = vmatprep.subr.mxu0 %v1197
    %1294 = vmatpush1.msra.mxu0 %v1196
    %1295 = vmatprep.subr.mxu0 %v1191
    %1296 = vmatpush1.msra.mxu0 %v1190
    %1297 = vmatprep.subr.mxu0 %v1185
    %1298 = vmatpush1.msra.mxu0 %v1184
    %1299 = vmatprep.subr.mxu0 %v1179
    %1300 = vmatpush1.msra.mxu0 %v1178
    %1301 = vmatprep.subr.mxu0 %v1173
    %1302 = vmatpush1.msra.mxu0 %v1172
    %1303 = vmatprep.subr.mxu0 %v1167
    %1304 = vmatpush1.msra.mxu0 %v1166
    %1305 = vmatprep.subr.mxu0 %v1161
    %1306 = vmatpush1.msra.mxu0 %v1160
    %1307 = vmatprep.subr.mxu0 %v1155
    %1308 = vmatpush1.msra.mxu0 %v1154
    %1309 = vmatprep.subr.mxu0 %v1149
    %1310 = vmatpush1.msra.mxu0 %v1148
    %1311 = vmatprep.subr.mxu0 %v1143
    %1312 = vmatpush1.msra.mxu0 %v1142
    %1313 = vmatprep.subr.mxu0 %v1137
    %1314 = vmatpush1.msra.mxu0 %v1136
    %1315 = vmatprep.subr.mxu0 %v1131
    %1316 = vmatpush1.msra.mxu0 %v1130
    %1317 = vmatprep.subr.mxu0 %v1125
    %1318 = vmatpush1.msra.mxu0 %v1124
    %1319 = vmatprep.subr.mxu0 %v1119
    %1320 = vmatpush1.msra.mxu0 %v1118
    %1321 = vmatprep.subr.mxu0 0.0
    %1322 = vmatpush2.msra.mxu0 0.0
    %1323 = vmatprep.subr.mxu0 0.0
    %1324 = vmatpush2.msra.mxu0 0.0
    %1325 = vmatprep.subr.mxu0 0.0
    %1326 = vmatpush2.msra.mxu0 0.0
    %1327 = vmatprep.subr.mxu0 0.0
    %1328 = vmatpush2.msra.mxu0 0.0
    %1329 = vmatprep.subr.mxu0 0.0
    %1330 = vmatpush2.msra.mxu0 0.0
    %1331 = vmatprep.subr.mxu0 0.0
    %1332 = vmatpush2.msra.mxu0 0.0
    %1333 = vmatprep.subr.mxu0 0.0
    %1334 = vmatpush2.msra.mxu0 0.0
    %1335 = vmatprep.subr.mxu0 0.0
    %1336 = vmatpush2.msra.mxu0 0.0
    %1337 = vmatprep.subr.mxu0 0.0
    %1338 = vmatpush2.msra.mxu0 0.0
    %1339 = vmatprep.subr.mxu0 0.0
    %1340 = vmatpush2.msra.mxu0 0.0
    %1341 = vmatprep.subr.mxu0 0.0
    %1342 = vmatpush2.msra.mxu0 0.0
    %1343 = vmatprep.subr.mxu0 0.0
    %1344 = vmatpush2.msra.mxu0 0.0
    %1345 = vmatprep.subr.mxu0 0.0
    %1346 = vmatpush2.msra.mxu0 0.0
    %1347 = vmatprep.subr.mxu0 0.0
    %1348 = vmatpush2.msra.mxu0 0.0
    %1349 = vmatprep.subr.mxu0 0.0
    %1350 = vmatpush2.msra.mxu0 0.0
    %1351 = vmatprep.subr.mxu0 0.0
    %1352 = vmatpush2.msra.mxu0 0.0
    %1353 = vmatprep.mubr.f32.mxu0 0.0
    %1354 = vmatmul.mubr.f32.gmra.mxu0 %v1114
    %v1355 = vpop.f32.mrf.mxu0
    %v1356 = vadd.f32 0.0, %v1355
    %v1357 = vpop.f32.mrf.mxu0
    %v1358 = vadd.f32 0.0, %v1357
    %1359 = vmatprep.mubr.f32.mxu0 0.0
    %1360 = vmatmul.mubr.f32.gmra.mxu0 %v1115
    %v1361 = vpop.f32.mrf.mxu0
    %v1362 = vadd.f32 0.0, %v1361
    %v1363 = vpop.f32.mrf.mxu0
    %v1364 = vadd.f32 0.0, %v1363
    %1365 = vdwg.mxu0
    %1366 = vmatprep.subr.mxu0 %v1211
    %1367 = vmatpush1.msra.mxu0 %v1210
    %1368 = vmatprep.subr.mxu0 %v1205
    %1369 = vmatpush1.msra.mxu0 %v1204
    %1370 = vmatprep.subr.mxu0 %v1199
    %1371 = vmatpush1.msra.mxu0 %v1198
    %1372 = vmatprep.subr.mxu0 %v1193
    %1373 = vmatpush1.msra.mxu0 %v1192
    %1374 = vmatprep.subr.mxu0 %v1187
    %1375 = vmatpush1.msra.mxu0 %v1186
    %1376 = vmatprep.subr.mxu0 %v1181
    %1377 = vmatpush1.msra.mxu0 %v1180
    %1378 = vmatprep.subr.mxu0 %v1175
    %1379 = vmatpush1.msra.mxu0 %v1174
    %1380 = vmatprep.subr.mxu0 %v1169
    %1381 = vmatpush1.msra.mxu0 %v1168
    %1382 = vmatprep.subr.mxu0 %v1163
    %1383 = vmatpush1.msra.mxu0 %v1162
    %1384 = vmatprep.subr.mxu0 %v1157
    %1385 = vmatpush1.msra.mxu0 %v1156
    %1386 = vmatprep.subr.mxu0 %v1151
    %1387 = vmatpush1.msra.mxu0 %v1150
    %1388 = vmatprep.subr.mxu0 %v1145
    %1389 = vmatpush1.msra.mxu0 %v1144
    %1390 = vmatprep.subr.mxu0 %v1139
    %1391 = vmatpush1.msra.mxu0 %v1138
    %1392 = vmatprep.subr.mxu0 %v1133
    %1393 = vmatpush1.msra.mxu0 %v1132
    %1394 = vmatprep.subr.mxu0 %v1127
    %1395 = vmatpush1.msra.mxu0 %v1126
    %1396 = vmatprep.subr.mxu0 %v1121
    %1397 = vmatpush1.msra.mxu0 %v1120
    %1398 = vmatprep.subr.mxu0 0.0
    %1399 = vmatpush2.msra.mxu0 0.0
    %1400 = vmatprep.subr.mxu0 0.0
    %1401 = vmatpush2.msra.mxu0 0.0
    %1402 = vmatprep.subr.mxu0 0.0
    %1403 = vmatpush2.msra.mxu0 0.0
    %1404 = vmatprep.subr.mxu0 0.0
    %1405 = vmatpush2.msra.mxu0 0.0
    %1406 = vmatprep.subr.mxu0 0.0
    %1407 = vmatpush2.msra.mxu0 0.0
    %1408 = vmatprep.subr.mxu0 0.0
    %1409 = vmatpush2.msra.mxu0 0.0
    %1410 = vmatprep.subr.mxu0 0.0
    %1411 = vmatpush2.msra.mxu0 0.0
    %1412 = vmatprep.subr.mxu0 0.0
    %1413 = vmatpush2.msra.mxu0 0.0
    %1414 = vmatprep.subr.mxu0 0.0
    %1415 = vmatpush2.msra.mxu0 0.0
    %1416 = vmatprep.subr.mxu0 0.0
    %1417 = vmatpush2.msra.mxu0 0.0
    %1418 = vmatprep.subr.mxu0 0.0
    %1419 = vmatpush2.msra.mxu0 0.0
    %1420 = vmatprep.subr.mxu0 0.0
    %1421 = vmatpush2.msra.mxu0 0.0
    %1422 = vmatprep.subr.mxu0 0.0
    %1423 = vmatpush2.msra.mxu0 0.0
    %1424 = vmatprep.subr.mxu0 0.0
    %1425 = vmatpush2.msra.mxu0 0.0
    %1426 = vmatprep.subr.mxu0 0.0
    %1427 = vmatpush2.msra.mxu0 0.0
    %1428 = vmatprep.subr.mxu0 0.0
    %1429 = vmatpush2.msra.mxu0 0.0
    %1430 = vmatprep.mubr.f32.mxu0 0.0
    %1431 = vmatmul.mubr.f32.gmra.mxu0 %v1114
    %v1432 = vpop.f32.mrf.mxu0
    %v1433 = vadd.f32 0.0, %v1432
    %v1434 = vpop.f32.mrf.mxu0
    %v1435 = vadd.f32 0.0, %v1434
    %1436 = vmatprep.mubr.f32.mxu0 0.0
    %1437 = vmatmul.mubr.f32.gmra.mxu0 %v1115
    %v1438 = vpop.f32.mrf.mxu0
    %v1439 = vadd.f32 0.0, %v1438
    %v1440 = vpop.f32.mrf.mxu0
    %v1441 = vadd.f32 0.0, %v1440
    %1442 = vdwg.mxu0
    %v1443 = vld [vmem:[#allocation3] sm:$0xff]
    %v1444 = vld [vmem:[#allocation3 + $0x8] sm:$0xff]
    %1445 = vmatprep.subr.mxu0 %v1207
    %1446 = vmatpush1.msra.mxu0 %v1206
    %1447 = vmatprep.subr.mxu0 %v1201
    %1448 = vmatpush1.msra.mxu0 %v1200
    %1449 = vmatprep.subr.mxu0 %v1195
    %1450 = vmatpush1.msra.mxu0 %v1194
    %1451 = vmatprep.subr.mxu0 %v1189
    %1452 = vmatpush1.msra.mxu0 %v1188
    %1453 = vmatprep.subr.mxu0 %v1183
    %1454 = vmatpush1.msra.mxu0 %v1182
    %1455 = vmatprep.subr.mxu0 %v1177
    %1456 = vmatpush1.msra.mxu0 %v1176
    %1457 = vmatprep.subr.mxu0 %v1171
    %1458 = vmatpush1.msra.mxu0 %v1170
    %1459 = vmatprep.subr.mxu0 %v1165
    %1460 = vmatpush1.msra.mxu0 %v1164
    %1461 = vmatprep.subr.mxu0 %v1159
    %1462 = vmatpush1.msra.mxu0 %v1158
    %1463 = vmatprep.subr.mxu0 %v1153
    %1464 = vmatpush1.msra.mxu0 %v1152
    %1465 = vmatprep.subr.mxu0 %v1147
    %1466 = vmatpush1.msra.mxu0 %v1146
    %1467 = vmatprep.subr.mxu0 %v1141
    %1468 = vmatpush1.msra.mxu0 %v1140
    %1469 = vmatprep.subr.mxu0 %v1135
    %1470 = vmatpush1.msra.mxu0 %v1134
    %1471 = vmatprep.subr.mxu0 %v1129
    %1472 = vmatpush1.msra.mxu0 %v1128
    %1473 = vmatprep.subr.mxu0 %v1123
    %1474 = vmatpush1.msra.mxu0 %v1122
    %1475 = vmatprep.subr.mxu0 %v1117
    %1476 = vmatpush1.msra.mxu0 %v1116
    %1477 = vmatprep.subr.mxu0 0.0
    %1478 = vmatpush2.msra.mxu0 0.0
    %1479 = vmatprep.subr.mxu0 0.0
    %1480 = vmatpush2.msra.mxu0 0.0
    %1481 = vmatprep.subr.mxu0 0.0
    %1482 = vmatpush2.msra.mxu0 0.0
    %1483 = vmatprep.subr.mxu0 0.0
    %1484 = vmatpush2.msra.mxu0 0.0
    %1485 = vmatprep.subr.mxu0 0.0
    %1486 = vmatpush2.msra.mxu0 0.0
    %1487 = vmatprep.subr.mxu0 0.0
    %1488 = vmatpush2.msra.mxu0 0.0
    %1489 = vmatprep.subr.mxu0 0.0
    %1490 = vmatpush2.msra.mxu0 0.0
    %1491 = vmatprep.subr.mxu0 0.0
    %1492 = vmatpush2.msra.mxu0 0.0
    %1493 = vmatprep.subr.mxu0 0.0
    %1494 = vmatpush2.msra.mxu0 0.0
    %1495 = vmatprep.subr.mxu0 0.0
    %1496 = vmatpush2.msra.mxu0 0.0
    %1497 = vmatprep.subr.mxu0 0.0
    %1498 = vmatpush2.msra.mxu0 0.0
    %1499 = vmatprep.subr.mxu0 0.0
    %1500 = vmatpush2.msra.mxu0 0.0
    %1501 = vmatprep.subr.mxu0 0.0
    %1502 = vmatpush2.msra.mxu0 0.0
    %1503 = vmatprep.subr.mxu0 0.0
    %1504 = vmatpush2.msra.mxu0 0.0
    %1505 = vmatprep.subr.mxu0 0.0
    %1506 = vmatpush2.msra.mxu0 0.0
    %1507 = vmatprep.subr.mxu0 0.0
    %1508 = vmatpush2.msra.mxu0 0.0
    %1509 = vmatprep.mubr.f32.mxu0 0.0
    %1510 = vmatmul.mubr.f32.gmra.mxu0 %v1443
    %v1511 = vpop.f32.mrf.mxu0
    %v1512 = vadd.f32 0.0, %v1511
    %v1513 = vpop.f32.mrf.mxu0
    %v1514 = vadd.f32 0.0, %v1513
    %1515 = vmatprep.mubr.f32.mxu0 0.0
    %1516 = vmatmul.mubr.f32.gmra.mxu0 %v1444
    %v1517 = vpop.f32.mrf.mxu0
    %v1518 = vadd.f32 0.0, %v1517
    %v1519 = vpop.f32.mrf.mxu0
    %v1520 = vadd.f32 0.0, %v1519
    %1521 = vdwg.mxu0
    %1522 = vmatprep.subr.mxu0 %v1209
    %1523 = vmatpush1.msra.mxu0 %v1208
    %1524 = vmatprep.subr.mxu0 %v1203
    %1525 = vmatpush1.msra.mxu0 %v1202
    %1526 = vmatprep.subr.mxu0 %v1197
    %1527 = vmatpush1.msra.mxu0 %v1196
    %1528 = vmatprep.subr.mxu0 %v1191
    %1529 = vmatpush1.msra.mxu0 %v1190
    %1530 = vmatprep.subr.mxu0 %v1185
    %1531 = vmatpush1.msra.mxu0 %v1184
    %1532 = vmatprep.subr.mxu0 %v1179
    %1533 = vmatpush1.msra.mxu0 %v1178
    %1534 = vmatprep.subr.mxu0 %v1173
    %1535 = vmatpush1.msra.mxu0 %v1172
    %1536 = vmatprep.subr.mxu0 %v1167
    %1537 = vmatpush1.msra.mxu0 %v1166
    %1538 = vmatprep.subr.mxu0 %v1161
    %1539 = vmatpush1.msra.mxu0 %v1160
    %1540 = vmatprep.subr.mxu0 %v1155
    %1541 = vmatpush1.msra.mxu0 %v1154
    %1542 = vmatprep.subr.mxu0 %v1149
    %1543 = vmatpush1.msra.mxu0 %v1148
    %1544 = vmatprep.subr.mxu0 %v1143
    %1545 = vmatpush1.msra.mxu0 %v1142
    %1546 = vmatprep.subr.mxu0 %v1137
    %1547 = vmatpush1.msra.mxu0 %v1136
    %1548 = vmatprep.subr.mxu0 %v1131
    %1549 = vmatpush1.msra.mxu0 %v1130
    %1550 = vmatprep.subr.mxu0 %v1125
    %1551 = vmatpush1.msra.mxu0 %v1124
    %1552 = vmatprep.subr.mxu0 %v1119
    %1553 = vmatpush1.msra.mxu0 %v1118
    %1554 = vmatprep.subr.mxu0 0.0
    %1555 = vmatpush2.msra.mxu0 0.0
    %1556 = vmatprep.subr.mxu0 0.0
    %1557 = vmatpush2.msra.mxu0 0.0
    %1558 = vmatprep.subr.mxu0 0.0
    %1559 = vmatpush2.msra.mxu0 0.0
    %1560 = vmatprep.subr.mxu0 0.0
    %1561 = vmatpush2.msra.mxu0 0.0
    %1562 = vmatprep.subr.mxu0 0.0
    %1563 = vmatpush2.msra.mxu0 0.0
    %1564 = vmatprep.subr.mxu0 0.0
    %1565 = vmatpush2.msra.mxu0 0.0
    %1566 = vmatprep.subr.mxu0 0.0
    %1567 = vmatpush2.msra.mxu0 0.0
    %1568 = vmatprep.subr.mxu0 0.0
    %1569 = vmatpush2.msra.mxu0 0.0
    %1570 = vmatprep.subr.mxu0 0.0
    %1571 = vmatpush2.msra.mxu0 0.0
    %1572 = vmatprep.subr.mxu0 0.0
    %1573 = vmatpush2.msra.mxu0 0.0
    %1574 = vmatprep.subr.mxu0 0.0
    %1575 = vmatpush2.msra.mxu0 0.0
    %1576 = vmatprep.subr.mxu0 0.0
    %1577 = vmatpush2.msra.mxu0 0.0
    %1578 = vmatprep.subr.mxu0 0.0
    %1579 = vmatpush2.msra.mxu0 0.0
    %1580 = vmatprep.subr.mxu0 0.0
    %1581 = vmatpush2.msra.mxu0 0.0
    %1582 = vmatprep.subr.mxu0 0.0
    %1583 = vmatpush2.msra.mxu0 0.0
    %1584 = vmatprep.subr.mxu0 0.0
    %1585 = vmatpush2.msra.mxu0 0.0
    %1586 = vmatprep.mubr.f32.mxu0 0.0
    %1587 = vmatmul.mubr.f32.gmra.mxu0 %v1443
    %v1588 = vpop.f32.mrf.mxu0
    %v1589 = vadd.f32 0.0, %v1588
    %v1590 = vpop.f32.mrf.mxu0
    %v1591 = vadd.f32 0.0, %v1590
    %1592 = vmatprep.mubr.f32.mxu0 0.0
    %1593 = vmatmul.mubr.f32.gmra.mxu0 %v1444
    %v1594 = vpop.f32.mrf.mxu0
    %v1595 = vadd.f32 0.0, %v1594
    %v1596 = vpop.f32.mrf.mxu0
    %v1597 = vadd.f32 0.0, %v1596
    %1598 = vdwg.mxu0
    %1599 = vmatprep.subr.mxu0 %v1211
    %1600 = vmatpush1.msra.mxu0 %v1210
    %1601 = vmatprep.subr.mxu0 %v1205
    %1602 = vmatpush1.msra.mxu0 %v1204
    %1603 = vmatprep.subr.mxu0 %v1199
    %1604 = vmatpush1.msra.mxu0 %v1198
    %1605 = vmatprep.subr.mxu0 %v1193
    %1606 = vmatpush1.msra.mxu0 %v1192
    %1607 = vmatprep.subr.mxu0 %v1187
    %1608 = vmatpush1.msra.mxu0 %v1186
    %1609 = vmatprep.subr.mxu0 %v1181
    %1610 = vmatpush1.msra.mxu0 %v1180
    %1611 = vmatprep.subr.mxu0 %v1175
    %1612 = vmatpush1.msra.mxu0 %v1174
    %1613 = vmatprep.subr.mxu0 %v1169
    %1614 = vmatpush1.msra.mxu0 %v1168
    %1615 = vmatprep.subr.mxu0 %v1163
    %1616 = vmatpush1.msra.mxu0 %v1162
    %1617 = vmatprep.subr.mxu0 %v1157
    %1618 = vmatpush1.msra.mxu0 %v1156
    %1619 = vmatprep.subr.mxu0 %v1151
    %1620 = vmatpush1.msra.mxu0 %v1150
    %1621 = vmatprep.subr.mxu0 %v1145
    %1622 = vmatpush1.msra.mxu0 %v1144
    %1623 = vmatprep.subr.mxu0 %v1139
    %1624 = vmatpush1.msra.mxu0 %v1138
    %1625 = vmatprep.subr.mxu0 %v1133
    %1626 = vmatpush1.msra.mxu0 %v1132
    %1627 = vmatprep.subr.mxu0 %v1127
    %1628 = vmatpush1.msra.mxu0 %v1126
    %1629 = vmatprep.subr.mxu0 %v1121
    %1630 = vmatpush1.msra.mxu0 %v1120
    %1631 = vmatprep.subr.mxu0 0.0
    %1632 = vmatpush2.msra.mxu0 0.0
    %1633 = vmatprep.subr.mxu0 0.0
    %1634 = vmatpush2.msra.mxu0 0.0
    %1635 = vmatprep.subr.mxu0 0.0
    %1636 = vmatpush2.msra.mxu0 0.0
    %1637 = vmatprep.subr.mxu0 0.0
    %1638 = vmatpush2.msra.mxu0 0.0
    %1639 = vmatprep.subr.mxu0 0.0
    %1640 = vmatpush2.msra.mxu0 0.0
    %1641 = vmatprep.subr.mxu0 0.0
    %1642 = vmatpush2.msra.mxu0 0.0
    %1643 = vmatprep.subr.mxu0 0.0
    %1644 = vmatpush2.msra.mxu0 0.0
    %1645 = vmatprep.subr.mxu0 0.0
    %1646 = vmatpush2.msra.mxu0 0.0
    %1647 = vmatprep.subr.mxu0 0.0
    %1648 = vmatpush2.msra.mxu0 0.0
    %1649 = vmatprep.subr.mxu0 0.0
    %1650 = vmatpush2.msra.mxu0 0.0
    %1651 = vmatprep.subr.mxu0 0.0
    %1652 = vmatpush2.msra.mxu0 0.0
    %1653 = vmatprep.subr.mxu0 0.0
    %1654 = vmatpush2.msra.mxu0 0.0
    %1655 = vmatprep.subr.mxu0 0.0
    %1656 = vmatpush2.msra.mxu0 0.0
    %1657 = vmatprep.subr.mxu0 0.0
    %1658 = vmatpush2.msra.mxu0 0.0
    %1659 = vmatprep.subr.mxu0 0.0
    %1660 = vmatpush2.msra.mxu0 0.0
    %1661 = vmatprep.subr.mxu0 0.0
    %1662 = vmatpush2.msra.mxu0 0.0
    %1663 = vmatprep.mubr.f32.mxu0 0.0
    %1664 = vmatmul.mubr.f32.gmra.mxu0 %v1443
    %v1665 = vpop.f32.mrf.mxu0
    %v1666 = vadd.f32 0.0, %v1665
    %v1667 = vpop.f32.mrf.mxu0
    %v1668 = vadd.f32 0.0, %v1667
    %1669 = vmatprep.mubr.f32.mxu0 0.0
    %1670 = vmatmul.mubr.f32.gmra.mxu0 %v1444
    %v1671 = vpop.f32.mrf.mxu0
    %v1672 = vadd.f32 0.0, %v1671
    %v1673 = vpop.f32.mrf.mxu0
    %v1674 = vadd.f32 0.0, %v1673
    %1675 = vdwg.mxu0
    %v1676 = vld [vmem:[%s5] sm:$0x1]
    %v1677 = vadd.f32 %v1512, %v1281
    %v1678 = vadd.f32 %v1518, %v1287
    %v1681 = vrot.slane %v1589, 1
    %v1682 = vrot.slane %v1595, 1
    %v1685 = vadd.f32 %v1677, %v1681
    %v1686 = vadd.f32 %v1678, %v1682
    %v1687 = vadd.f32 %v1591, %v1433
    %v1688 = vadd.f32 %v1597, %v1439
    %v1691 = vrot.slane %v1668, 1
    %v1692 = vrot.slane %v1674, 1
    %v1695 = vadd.f32 %v1687, %v1691
    %v1696 = vadd.f32 %v1688, %v1692
    %v1697 = vmax.f32 %v1685, %v1695
    %v1698 = vmax.f32 %v1686, %v1696
    %v1701 = vrot.slane %v1514, 1
    %v1702 = vrot.slane %v1520, 1
    %v1705 = vadd.f32 %v1279, %v1701
    %v1706 = vadd.f32 %v1285, %v1702
    %v1709 = vrot.slane %v1356, 1
    %v1710 = vrot.slane %v1362, 1
    %v1713 = vadd.f32 %v1705, %v1709
    %v1714 = vadd.f32 %v1706, %v1710
    %v1715 = vmax.f32 %v1697, %v1713
    %v1716 = vmax.f32 %v1698, %v1714
    %v1719 = vrot.slane %v1666, 1
    %v1720 = vrot.slane %v1672, 1
    %v1723 = vadd.f32 %v1358, %v1719
    %v1724 = vadd.f32 %v1364, %v1720
    %v1727 = vrot.slane %v1435, 1
    %v1728 = vrot.slane %v1441, 1
    %v1731 = vadd.f32 %v1723, %v1727
    %v1732 = vadd.f32 %v1724, %v1728
    %v1733 = vmax.f32 %v1715, %v1731
    %v1734 = vmax.f32 %v1716, %v1732
    %v1736 = vlaneseq
    %v1737 = vshrl.u32 %v1736, 7
    %v1738 = vsub.s32 0, %v1737
    %v1739 = vrot.slane %v1676, %v1738
    %v1741 = vadd.f32 %v1733, %v1739
    %v1742 = vadd.f32 %v1734, %v1739
    %v1743 = vmax.f32 %v1741, 0.0
    %v1744 = vmax.f32 %v1742, 0.0
    %v1745 = vld [vmem:[%s3] sm:$0xff]
    %v1746 = vld [vmem:[%s3 + $0x8] sm:$0xff]
    %v1747 = vld [vmem:[%s3 + $0x10] sm:$0xff]
    %v1748 = vld [vmem:[%s3 + $0x18] sm:$0xff]
    %v1749 = vld [vmem:[%s3 + $0x20] sm:$0xff]
    %v1750 = vld [vmem:[%s3 + $0x28] sm:$0xff]
    %v1751 = vld [vmem:[%s3 + $0x30] sm:$0xff]
    %v1752 = vld [vmem:[%s3 + $0x38] sm:$0xff]
    %v1753 = vld [vmem:[%s3 + $0x40] sm:$0xff]
    %v1754 = vld [vmem:[%s3 + $0x48] sm:$0xff]
    %v1755 = vld [vmem:[%s3 + $0x50] sm:$0xff]
    %v1756 = vld [vmem:[%s3 + $0x58] sm:$0xff]
    %v1757 = vld [vmem:[%s3 + $0x60] sm:$0xff]
    %v1758 = vld [vmem:[%s3 + $0x68] sm:$0xff]
    %v1759 = vld [vmem:[%s3 + $0x70] sm:$0xff]
    %v1760 = vld [vmem:[%s3 + $0x78] sm:$0xff]
    %s1761 = scalar_lea.vmem %s3, 128
    %v1762 = vld [vmem:[%s1761] sm:$0xff]
    %v1763 = vld [vmem:[%s1761 + $0x8] sm:$0xff]
    %v1764 = vld [vmem:[%s1761 + $0x10] sm:$0xff]
    %v1765 = vld [vmem:[%s1761 + $0x18] sm:$0xff]
    %v1766 = vld [vmem:[%s1761 + $0x20] sm:$0xff]
    %v1767 = vld [vmem:[%s1761 + $0x28] sm:$0xff]
    %v1768 = vld [vmem:[%s1761 + $0x30] sm:$0xff]
    %v1769 = vld [vmem:[%s1761 + $0x38] sm:$0xff]
    %v1770 = vld [vmem:[%s1761 + $0x40] sm:$0xff]
    %v1771 = vld [vmem:[%s1761 + $0x48] sm:$0xff]
    %v1772 = vld [vmem:[%s1761 + $0x50] sm:$0xff]
    %v1773 = vld [vmem:[%s1761 + $0x58] sm:$0xff]
    %v1774 = vld [vmem:[%s1761 + $0x60] sm:$0xff]
    %v1775 = vld [vmem:[%s1761 + $0x68] sm:$0xff]
    %v1776 = vld [vmem:[%s1761 + $0x70] sm:$0xff]
    %v1777 = vld [vmem:[%s1761 + $0x78] sm:$0xff]
    %v1780 = vrot.slane %v1743, 1
    %vm1781 = vcmask 1041409
    %v1782 = vsel %vm1781, %v1744, %v1780
    %1784 = vmatprep.subr.mxu0 0.0
    %1785 = vmatpush1.msra.mxu0 %v1777
    %1786 = vmatprep.subr.mxu0 0.0
    %1787 = vmatpush1.msra.mxu0 %v1776
    %1788 = vmatprep.subr.mxu0 0.0
    %1789 = vmatpush1.msra.mxu0 %v1775
    %1790 = vmatprep.subr.mxu0 0.0
    %1791 = vmatpush1.msra.mxu0 %v1774
    %1792 = vmatprep.subr.mxu0 0.0
    %1793 = vmatpush1.msra.mxu0 %v1773
    %1794 = vmatprep.subr.mxu0 0.0
    %1795 = vmatpush1.msra.mxu0 %v1772
    %1796 = vmatprep.subr.mxu0 0.0
    %1797 = vmatpush1.msra.mxu0 %v1771
    %1798 = vmatprep.subr.mxu0 0.0
    %1799 = vmatpush1.msra.mxu0 %v1770
    %1800 = vmatprep.subr.mxu0 0.0
    %1801 = vmatpush1.msra.mxu0 %v1769
    %1802 = vmatprep.subr.mxu0 0.0
    %1803 = vmatpush1.msra.mxu0 %v1768
    %1804 = vmatprep.subr.mxu0 0.0
    %1805 = vmatpush1.msra.mxu0 %v1767
    %1806 = vmatprep.subr.mxu0 0.0
    %1807 = vmatpush1.msra.mxu0 %v1766
    %1808 = vmatprep.subr.mxu0 0.0
    %1809 = vmatpush1.msra.mxu0 %v1765
    %1810 = vmatprep.subr.mxu0 0.0
    %1811 = vmatpush1.msra.mxu0 %v1764
    %1812 = vmatprep.subr.mxu0 0.0
    %1813 = vmatpush1.msra.mxu0 %v1763
    %1814 = vmatprep.subr.mxu0 0.0
    %1815 = vmatpush1.msra.mxu0 %v1762
    %1816 = vmatprep.subr.mxu0 0.0
    %1817 = vmatpush2.msra.mxu0 0.0
    %1818 = vmatprep.subr.mxu0 0.0
    %1819 = vmatpush2.msra.mxu0 0.0
    %1820 = vmatprep.subr.mxu0 0.0
    %1821 = vmatpush2.msra.mxu0 0.0
    %1822 = vmatprep.subr.mxu0 0.0
    %1823 = vmatpush2.msra.mxu0 0.0
    %1824 = vmatprep.subr.mxu0 0.0
    %1825 = vmatpush2.msra.mxu0 0.0
    %1826 = vmatprep.subr.mxu0 0.0
    %1827 = vmatpush2.msra.mxu0 0.0
    %1828 = vmatprep.subr.mxu0 0.0
    %1829 = vmatpush2.msra.mxu0 0.0
    %1830 = vmatprep.subr.mxu0 0.0
    %1831 = vmatpush2.msra.mxu0 0.0
    %1832 = vmatprep.subr.mxu0 0.0
    %1833 = vmatpush2.msra.mxu0 0.0
    %1834 = vmatprep.subr.mxu0 0.0
    %1835 = vmatpush2.msra.mxu0 0.0
    %1836 = vmatprep.subr.mxu0 0.0
    %1837 = vmatpush2.msra.mxu0 0.0
    %1838 = vmatprep.subr.mxu0 0.0
    %1839 = vmatpush2.msra.mxu0 0.0
    %1840 = vmatprep.subr.mxu0 0.0
    %1841 = vmatpush2.msra.mxu0 0.0
    %1842 = vmatprep.subr.mxu0 0.0
    %1843 = vmatpush2.msra.mxu0 0.0
    %1844 = vmatprep.subr.mxu0 0.0
    %1845 = vmatpush2.msra.mxu0 0.0
    %1846 = vmatprep.subr.mxu0 0.0
    %1847 = vmatpush2.msra.mxu0 0.0
    %1848 = vmatprep.mubr.f32.mxu0 0.0
    %1849 = vmatmul.mubr.f32.gmra.mxu0 %v1782
    %v1850 = vpop.f32.mrf.mxu0
    %v1851 = vadd.f32 0.0, %v1850
    %v1852 = vpop.f32.mrf.mxu0
    %1853 = vdwg.mxu0
    %v1854 = vrot.slane %v1744, 7
    %v1855 = vsel %vm1781, %v1854, %v1743
    %1857 = vmatprep.subr.mxu0 0.0
    %1858 = vmatpush1.msra.mxu0 %v1760
    %1859 = vmatprep.subr.mxu0 0.0
    %1860 = vmatpush1.msra.mxu0 %v1759
    %1861 = vmatprep.subr.mxu0 0.0
    %1862 = vmatpush1.msra.mxu0 %v1758
    %1863 = vmatprep.subr.mxu0 0.0
    %1864 = vmatpush1.msra.mxu0 %v1757
    %1865 = vmatprep.subr.mxu0 0.0
    %1866 = vmatpush1.msra.mxu0 %v1756
    %1867 = vmatprep.subr.mxu0 0.0
    %1868 = vmatpush1.msra.mxu0 %v1755
    %1869 = vmatprep.subr.mxu0 0.0
    %1870 = vmatpush1.msra.mxu0 %v1754
    %1871 = vmatprep.subr.mxu0 0.0
    %1872 = vmatpush1.msra.mxu0 %v1753
    %1873 = vmatprep.subr.mxu0 0.0
    %1874 = vmatpush1.msra.mxu0 %v1752
    %1875 = vmatprep.subr.mxu0 0.0
    %1876 = vmatpush1.msra.mxu0 %v1751
    %1877 = vmatprep.subr.mxu0 0.0
    %1878 = vmatpush1.msra.mxu0 %v1750
    %1879 = vmatprep.subr.mxu0 0.0
    %1880 = vmatpush1.msra.mxu0 %v1749
    %1881 = vmatprep.subr.mxu0 0.0
    %1882 = vmatpush1.msra.mxu0 %v1748
    %1883 = vmatprep.subr.mxu0 0.0
    %1884 = vmatpush1.msra.mxu0 %v1747
    %1885 = vmatprep.subr.mxu0 0.0
    %1886 = vmatpush1.msra.mxu0 %v1746
    %1887 = vmatprep.subr.mxu0 0.0
    %1888 = vmatpush1.msra.mxu0 %v1745
    %1889 = vmatprep.subr.mxu0 0.0
    %1890 = vmatpush2.msra.mxu0 0.0
    %1891 = vmatprep.subr.mxu0 0.0
    %1892 = vmatpush2.msra.mxu0 0.0
    %1893 = vmatprep.subr.mxu0 0.0
    %1894 = vmatpush2.msra.mxu0 0.0
    %1895 = vmatprep.subr.mxu0 0.0
    %1896 = vmatpush2.msra.mxu0 0.0
    %1897 = vmatprep.subr.mxu0 0.0
    %1898 = vmatpush2.msra.mxu0 0.0
    %1899 = vmatprep.subr.mxu0 0.0
    %1900 = vmatpush2.msra.mxu0 0.0
    %1901 = vmatprep.subr.mxu0 0.0
    %1902 = vmatpush2.msra.mxu0 0.0
    %1903 = vmatprep.subr.mxu0 0.0
    %1904 = vmatpush2.msra.mxu0 0.0
    %1905 = vmatprep.subr.mxu0 0.0
    %1906 = vmatpush2.msra.mxu0 0.0
    %1907 = vmatprep.subr.mxu0 0.0
    %1908 = vmatpush2.msra.mxu0 0.0
    %1909 = vmatprep.subr.mxu0 0.0
    %1910 = vmatpush2.msra.mxu0 0.0
    %1911 = vmatprep.subr.mxu0 0.0
    %1912 = vmatpush2.msra.mxu0 0.0
    %1913 = vmatprep.subr.mxu0 0.0
    %1914 = vmatpush2.msra.mxu0 0.0
    %1915 = vmatprep.subr.mxu0 0.0
    %1916 = vmatpush2.msra.mxu0 0.0
    %1917 = vmatprep.subr.mxu0 0.0
    %1918 = vmatpush2.msra.mxu0 0.0
    %1919 = vmatprep.subr.mxu0 0.0
    %1920 = vmatpush2.msra.mxu0 0.0
    %1921 = vmatprep.mubr.f32.mxu0 0.0
    %1922 = vmatmul.mubr.f32.gmra.mxu0 %v1855
    %v1923 = vpop.f32.mrf.mxu0
    %v1924 = vadd.f32 %v1851, %v1923
    %v1925 = vpop.f32.mrf.mxu0
    %1926 = vdwg.mxu0
    %s1927 = scalar_lea.vmem %s3, 256
    %v1928 = vld [vmem:[%s1927] sm:$0xff]
    %v1929 = vld [vmem:[%s1927 + $0x8] sm:$0xff]
    %v1930 = vld [vmem:[%s1927 + $0x10] sm:$0xff]
    %v1931 = vld [vmem:[%s1927 + $0x18] sm:$0xff]
    %v1932 = vld [vmem:[%s1927 + $0x20] sm:$0xff]
    %v1933 = vld [vmem:[%s1927 + $0x28] sm:$0xff]
    %v1934 = vld [vmem:[%s1927 + $0x30] sm:$0xff]
    %v1935 = vld [vmem:[%s1927 + $0x38] sm:$0xff]
    %v1936 = vld [vmem:[%s1927 + $0x40] sm:$0xff]
    %v1937 = vld [vmem:[%s1927 + $0x48] sm:$0xff]
    %v1938 = vld [vmem:[%s1927 + $0x50] sm:$0xff]
    %v1939 = vld [vmem:[%s1927 + $0x58] sm:$0xff]
    %v1940 = vld [vmem:[%s1927 + $0x60] sm:$0xff]
    %v1941 = vld [vmem:[%s1927 + $0x68] sm:$0xff]
    %v1942 = vld [vmem:[%s1927 + $0x70] sm:$0xff]
    %v1943 = vld [vmem:[%s1927 + $0x78] sm:$0xff]
    %v1944 = vrot.slane %v1743, 2
    %v1945 = vrot.slane %v1744, 1
    %v1946 = vsel %vm1781, %v1945, %v1944
    %1948 = vmatprep.subr.mxu0 0.0
    %1949 = vmatpush1.msra.mxu0 %v1943
    %1950 = vmatprep.subr.mxu0 0.0
    %1951 = vmatpush1.msra.mxu0 %v1942
    %1952 = vmatprep.subr.mxu0 0.0
    %1953 = vmatpush1.msra.mxu0 %v1941
    %1954 = vmatprep.subr.mxu0 0.0
    %1955 = vmatpush1.msra.mxu0 %v1940
    %1956 = vmatprep.subr.mxu0 0.0
    %1957 = vmatpush1.msra.mxu0 %v1939
    %1958 = vmatprep.subr.mxu0 0.0
    %1959 = vmatpush1.msra.mxu0 %v1938
    %1960 = vmatprep.subr.mxu0 0.0
    %1961 = vmatpush1.msra.mxu0 %v1937
    %1962 = vmatprep.subr.mxu0 0.0
    %1963 = vmatpush1.msra.mxu0 %v1936
    %1964 = vmatprep.subr.mxu0 0.0
    %1965 = vmatpush1.msra.mxu0 %v1935
    %1966 = vmatprep.subr.mxu0 0.0
    %1967 = vmatpush1.msra.mxu0 %v1934
    %1968 = vmatprep.subr.mxu0 0.0
    %1969 = vmatpush1.msra.mxu0 %v1933
    %1970 = vmatprep.subr.mxu0 0.0
    %1971 = vmatpush1.msra.mxu0 %v1932
    %1972 = vmatprep.subr.mxu0 0.0
    %1973 = vmatpush1.msra.mxu0 %v1931
    %1974 = vmatprep.subr.mxu0 0.0
    %1975 = vmatpush1.msra.mxu0 %v1930
    %1976 = vmatprep.subr.mxu0 0.0
    %1977 = vmatpush1.msra.mxu0 %v1929
    %1978 = vmatprep.subr.mxu0 0.0
    %1979 = vmatpush1.msra.mxu0 %v1928
    %1980 = vmatprep.subr.mxu0 0.0
    %1981 = vmatpush2.msra.mxu0 0.0
    %1982 = vmatprep.subr.mxu0 0.0
    %1983 = vmatpush2.msra.mxu0 0.0
    %1984 = vmatprep.subr.mxu0 0.0
    %1985 = vmatpush2.msra.mxu0 0.0
    %1986 = vmatprep.subr.mxu0 0.0
    %1987 = vmatpush2.msra.mxu0 0.0
    %1988 = vmatprep.subr.mxu0 0.0
    %1989 = vmatpush2.msra.mxu0 0.0
    %1990 = vmatprep.subr.mxu0 0.0
    %1991 = vmatpush2.msra.mxu0 0.0
    %1992 = vmatprep.subr.mxu0 0.0
    %1993 = vmatpush2.msra.mxu0 0.0
    %1994 = vmatprep.subr.mxu0 0.0
    %1995 = vmatpush2.msra.mxu0 0.0
    %1996 = vmatprep.subr.mxu0 0.0
    %1997 = vmatpush2.msra.mxu0 0.0
    %1998 = vmatprep.subr.mxu0 0.0
    %1999 = vmatpush2.msra.mxu0 0.0
    %2000 = vmatprep.subr.mxu0 0.0
    %2001 = vmatpush2.msra.mxu0 0.0
    %2002 = vmatprep.subr.mxu0 0.0
    %2003 = vmatpush2.msra.mxu0 0.0
    %2004 = vmatprep.subr.mxu0 0.0
    %2005 = vmatpush2.msra.mxu0 0.0
    %2006 = vmatprep.subr.mxu0 0.0
    %2007 = vmatpush2.msra.mxu0 0.0
    %2008 = vmatprep.subr.mxu0 0.0
    %2009 = vmatpush2.msra.mxu0 0.0
    %2010 = vmatprep.subr.mxu0 0.0
    %2011 = vmatpush2.msra.mxu0 0.0
    %2012 = vmatprep.mubr.f32.mxu0 0.0
    %2013 = vmatmul.mubr.f32.gmra.mxu0 %v1946
    %v2014 = vpop.f32.mrf.mxu0
    %v2015 = vadd.f32 0.0, %v2014
    %v2016 = vpop.f32.mrf.mxu0
    %2017 = vdwg.mxu0
    %v2018 = vadd.f32 %v1924, %v2015
    %s2019 = scalar_lea.vmem %s3, 384
    %v2020 = vld [vmem:[%s2019] sm:$0xff]
    %v2021 = vld [vmem:[%s2019 + $0x8] sm:$0xff]
    %v2022 = vld [vmem:[%s2019 + $0x10] sm:$0xff]
    %v2023 = vld [vmem:[%s2019 + $0x18] sm:$0xff]
    %v2024 = vld [vmem:[%s2019 + $0x20] sm:$0xff]
    %v2025 = vld [vmem:[%s2019 + $0x28] sm:$0xff]
    %v2026 = vld [vmem:[%s2019 + $0x30] sm:$0xff]
    %v2027 = vld [vmem:[%s2019 + $0x38] sm:$0xff]
    %v2028 = vld [vmem:[%s2019 + $0x40] sm:$0xff]
    %v2029 = vld [vmem:[%s2019 + $0x48] sm:$0xff]
    %v2030 = vld [vmem:[%s2019 + $0x50] sm:$0xff]
    %v2031 = vld [vmem:[%s2019 + $0x58] sm:$0xff]
    %v2032 = vld [vmem:[%s2019 + $0x60] sm:$0xff]
    %v2033 = vld [vmem:[%s2019 + $0x68] sm:$0xff]
    %v2034 = vld [vmem:[%s2019 + $0x70] sm:$0xff]
    %v2035 = vld [vmem:[%s2019 + $0x78] sm:$0xff]
    %v2036 = vrot.slane %v1743, 3
    %v2037 = vrot.slane %v1744, 2
    %v2038 = vsel %vm1781, %v2037, %v2036
    %2040 = vmatprep.subr.mxu0 0.0
    %2041 = vmatpush1.msra.mxu0 %v2035
    %2042 = vmatprep.subr.mxu0 0.0
    %2043 = vmatpush1.msra.mxu0 %v2034
    %2044 = vmatprep.subr.mxu0 0.0
    %2045 = vmatpush1.msra.mxu0 %v2033
    %2046 = vmatprep.subr.mxu0 0.0
    %2047 = vmatpush1.msra.mxu0 %v2032
    %2048 = vmatprep.subr.mxu0 0.0
    %2049 = vmatpush1.msra.mxu0 %v2031
    %2050 = vmatprep.subr.mxu0 0.0
    %2051 = vmatpush1.msra.mxu0 %v2030
    %2052 = vmatprep.subr.mxu0 0.0
    %2053 = vmatpush1.msra.mxu0 %v2029
    %2054 = vmatprep.subr.mxu0 0.0
    %2055 = vmatpush1.msra.mxu0 %v2028
    %2056 = vmatprep.subr.mxu0 0.0
    %2057 = vmatpush1.msra.mxu0 %v2027
    %2058 = vmatprep.subr.mxu0 0.0
    %2059 = vmatpush1.msra.mxu0 %v2026
    %2060 = vmatprep.subr.mxu0 0.0
    %2061 = vmatpush1.msra.mxu0 %v2025
    %2062 = vmatprep.subr.mxu0 0.0
    %2063 = vmatpush1.msra.mxu0 %v2024
    %2064 = vmatprep.subr.mxu0 0.0
    %2065 = vmatpush1.msra.mxu0 %v2023
    %2066 = vmatprep.subr.mxu0 0.0
    %2067 = vmatpush1.msra.mxu0 %v2022
    %2068 = vmatprep.subr.mxu0 0.0
    %2069 = vmatpush1.msra.mxu0 %v2021
    %2070 = vmatprep.subr.mxu0 0.0
    %2071 = vmatpush1.msra.mxu0 %v2020
    %2072 = vmatprep.subr.mxu0 0.0
    %2073 = vmatpush2.msra.mxu0 0.0
    %2074 = vmatprep.subr.mxu0 0.0
    %2075 = vmatpush2.msra.mxu0 0.0
    %2076 = vmatprep.subr.mxu0 0.0
    %2077 = vmatpush2.msra.mxu0 0.0
    %2078 = vmatprep.subr.mxu0 0.0
    %2079 = vmatpush2.msra.mxu0 0.0
    %2080 = vmatprep.subr.mxu0 0.0
    %2081 = vmatpush2.msra.mxu0 0.0
    %2082 = vmatprep.subr.mxu0 0.0
    %2083 = vmatpush2.msra.mxu0 0.0
    %2084 = vmatprep.subr.mxu0 0.0
    %2085 = vmatpush2.msra.mxu0 0.0
    %2086 = vmatprep.subr.mxu0 0.0
    %2087 = vmatpush2.msra.mxu0 0.0
    %2088 = vmatprep.subr.mxu0 0.0
    %2089 = vmatpush2.msra.mxu0 0.0
    %2090 = vmatprep.subr.mxu0 0.0
    %2091 = vmatpush2.msra.mxu0 0.0
    %2092 = vmatprep.subr.mxu0 0.0
    %2093 = vmatpush2.msra.mxu0 0.0
    %2094 = vmatprep.subr.mxu0 0.0
    %2095 = vmatpush2.msra.mxu0 0.0
    %2096 = vmatprep.subr.mxu0 0.0
    %2097 = vmatpush2.msra.mxu0 0.0
    %2098 = vmatprep.subr.mxu0 0.0
    %2099 = vmatpush2.msra.mxu0 0.0
    %2100 = vmatprep.subr.mxu0 0.0
    %2101 = vmatpush2.msra.mxu0 0.0
    %2102 = vmatprep.subr.mxu0 0.0
    %2103 = vmatpush2.msra.mxu0 0.0
    %2104 = vmatprep.mubr.f32.mxu0 0.0
    %2105 = vmatmul.mubr.f32.gmra.mxu0 %v2038
    %v2106 = vpop.f32.mrf.mxu0
    %v2107 = vadd.f32 0.0, %v2106
    %v2108 = vpop.f32.mrf.mxu0
    %2109 = vdwg.mxu0
    %v2110 = vadd.f32 %v2018, %v2107
    %s2111 = scalar_lea.vmem %s3, 512
    %v2112 = vld [vmem:[%s2111] sm:$0xff]
    %v2113 = vld [vmem:[%s2111 + $0x8] sm:$0xff]
    %v2114 = vld [vmem:[%s2111 + $0x10] sm:$0xff]
    %v2115 = vld [vmem:[%s2111 + $0x18] sm:$0xff]
    %v2116 = vld [vmem:[%s2111 + $0x20] sm:$0xff]
    %v2117 = vld [vmem:[%s2111 + $0x28] sm:$0xff]
    %v2118 = vld [vmem:[%s2111 + $0x30] sm:$0xff]
    %v2119 = vld [vmem:[%s2111 + $0x38] sm:$0xff]
    %v2120 = vld [vmem:[%s2111 + $0x40] sm:$0xff]
    %v2121 = vld [vmem:[%s2111 + $0x48] sm:$0xff]
    %v2122 = vld [vmem:[%s2111 + $0x50] sm:$0xff]
    %v2123 = vld [vmem:[%s2111 + $0x58] sm:$0xff]
    %v2124 = vld [vmem:[%s2111 + $0x60] sm:$0xff]
    %v2125 = vld [vmem:[%s2111 + $0x68] sm:$0xff]
    %v2126 = vld [vmem:[%s2111 + $0x70] sm:$0xff]
    %v2127 = vld [vmem:[%s2111 + $0x78] sm:$0xff]
    %v2128 = vrot.slane %v1743, 4
    %v2129 = vrot.slane %v1744, 3
    %v2130 = vsel %vm1781, %v2129, %v2128
    %2132 = vmatprep.subr.mxu0 0.0
    %2133 = vmatpush1.msra.mxu0 %v2127
    %2134 = vmatprep.subr.mxu0 0.0
    %2135 = vmatpush1.msra.mxu0 %v2126
    %2136 = vmatprep.subr.mxu0 0.0
    %2137 = vmatpush1.msra.mxu0 %v2125
    %2138 = vmatprep.subr.mxu0 0.0
    %2139 = vmatpush1.msra.mxu0 %v2124
    %2140 = vmatprep.subr.mxu0 0.0
    %2141 = vmatpush1.msra.mxu0 %v2123
    %2142 = vmatprep.subr.mxu0 0.0
    %2143 = vmatpush1.msra.mxu0 %v2122
    %2144 = vmatprep.subr.mxu0 0.0
    %2145 = vmatpush1.msra.mxu0 %v2121
    %2146 = vmatprep.subr.mxu0 0.0
    %2147 = vmatpush1.msra.mxu0 %v2120
    %2148 = vmatprep.subr.mxu0 0.0
    %2149 = vmatpush1.msra.mxu0 %v2119
    %2150 = vmatprep.subr.mxu0 0.0
    %2151 = vmatpush1.msra.mxu0 %v2118
    %2152 = vmatprep.subr.mxu0 0.0
    %2153 = vmatpush1.msra.mxu0 %v2117
    %2154 = vmatprep.subr.mxu0 0.0
    %2155 = vmatpush1.msra.mxu0 %v2116
    %2156 = vmatprep.subr.mxu0 0.0
    %2157 = vmatpush1.msra.mxu0 %v2115
    %2158 = vmatprep.subr.mxu0 0.0
    %2159 = vmatpush1.msra.mxu0 %v2114
    %2160 = vmatprep.subr.mxu0 0.0
    %2161 = vmatpush1.msra.mxu0 %v2113
    %2162 = vmatprep.subr.mxu0 0.0
    %2163 = vmatpush1.msra.mxu0 %v2112
    %2164 = vmatprep.subr.mxu0 0.0
    %2165 = vmatpush2.msra.mxu0 0.0
    %2166 = vmatprep.subr.mxu0 0.0
    %2167 = vmatpush2.msra.mxu0 0.0
    %2168 = vmatprep.subr.mxu0 0.0
    %2169 = vmatpush2.msra.mxu0 0.0
    %2170 = vmatprep.subr.mxu0 0.0
    %2171 = vmatpush2.msra.mxu0 0.0
    %2172 = vmatprep.subr.mxu0 0.0
    %2173 = vmatpush2.msra.mxu0 0.0
    %2174 = vmatprep.subr.mxu0 0.0
    %2175 = vmatpush2.msra.mxu0 0.0
    %2176 = vmatprep.subr.mxu0 0.0
    %2177 = vmatpush2.msra.mxu0 0.0
    %2178 = vmatprep.subr.mxu0 0.0
    %2179 = vmatpush2.msra.mxu0 0.0
    %2180 = vmatprep.subr.mxu0 0.0
    %2181 = vmatpush2.msra.mxu0 0.0
    %2182 = vmatprep.subr.mxu0 0.0
    %2183 = vmatpush2.msra.mxu0 0.0
    %2184 = vmatprep.subr.mxu0 0.0
    %2185 = vmatpush2.msra.mxu0 0.0
    %2186 = vmatprep.subr.mxu0 0.0
    %2187 = vmatpush2.msra.mxu0 0.0
    %2188 = vmatprep.subr.mxu0 0.0
    %2189 = vmatpush2.msra.mxu0 0.0
    %2190 = vmatprep.subr.mxu0 0.0
    %2191 = vmatpush2.msra.mxu0 0.0
    %2192 = vmatprep.subr.mxu0 0.0
    %2193 = vmatpush2.msra.mxu0 0.0
    %2194 = vmatprep.subr.mxu0 0.0
    %2195 = vmatpush2.msra.mxu0 0.0
    %2196 = vmatprep.mubr.f32.mxu0 0.0
    %2197 = vmatmul.mubr.f32.gmra.mxu0 %v2130
    %v2198 = vpop.f32.mrf.mxu0
    %v2199 = vadd.f32 0.0, %v2198
    %v2200 = vpop.f32.mrf.mxu0
    %2201 = vdwg.mxu0
    %v2202 = vadd.f32 %v2110, %v2199
    %s2203 = scalar_lea.vmem %s3, 640
    %v2204 = vld [vmem:[%s2203] sm:$0xff]
    %v2205 = vld [vmem:[%s2203 + $0x8] sm:$0xff]
    %v2206 = vld [vmem:[%s2203 + $0x10] sm:$0xff]
    %v2207 = vld [vmem:[%s2203 + $0x18] sm:$0xff]
    %v2208 = vld [vmem:[%s2203 + $0x20] sm:$0xff]
    %v2209 = vld [vmem:[%s2203 + $0x28] sm:$0xff]
    %v2210 = vld [vmem:[%s2203 + $0x30] sm:$0xff]
    %v2211 = vld [vmem:[%s2203 + $0x38] sm:$0xff]
    %v2212 = vld [vmem:[%s2203 + $0x40] sm:$0xff]
    %v2213 = vld [vmem:[%s2203 + $0x48] sm:$0xff]
    %v2214 = vld [vmem:[%s2203 + $0x50] sm:$0xff]
    %v2215 = vld [vmem:[%s2203 + $0x58] sm:$0xff]
    %v2216 = vld [vmem:[%s2203 + $0x60] sm:$0xff]
    %v2217 = vld [vmem:[%s2203 + $0x68] sm:$0xff]
    %v2218 = vld [vmem:[%s2203 + $0x70] sm:$0xff]
    %v2219 = vld [vmem:[%s2203 + $0x78] sm:$0xff]
    %v2220 = vrot.slane %v1743, 5
    %v2221 = vrot.slane %v1744, 4
    %v2222 = vsel %vm1781, %v2221, %v2220
    %2224 = vmatprep.subr.mxu0 0.0
    %2225 = vmatpush1.msra.mxu0 %v2219
    %2226 = vmatprep.subr.mxu0 0.0
    %2227 = vmatpush1.msra.mxu0 %v2218
    %2228 = vmatprep.subr.mxu0 0.0
    %2229 = vmatpush1.msra.mxu0 %v2217
    %2230 = vmatprep.subr.mxu0 0.0
    %2231 = vmatpush1.msra.mxu0 %v2216
    %2232 = vmatprep.subr.mxu0 0.0
    %2233 = vmatpush1.msra.mxu0 %v2215
    %2234 = vmatprep.subr.mxu0 0.0
    %2235 = vmatpush1.msra.mxu0 %v2214
    %2236 = vmatprep.subr.mxu0 0.0
    %2237 = vmatpush1.msra.mxu0 %v2213
    %2238 = vmatprep.subr.mxu0 0.0
    %2239 = vmatpush1.msra.mxu0 %v2212
    %2240 = vmatprep.subr.mxu0 0.0
    %2241 = vmatpush1.msra.mxu0 %v2211
    %2242 = vmatprep.subr.mxu0 0.0
    %2243 = vmatpush1.msra.mxu0 %v2210
    %2244 = vmatprep.subr.mxu0 0.0
    %2245 = vmatpush1.msra.mxu0 %v2209
    %2246 = vmatprep.subr.mxu0 0.0
    %2247 = vmatpush1.msra.mxu0 %v2208
    %2248 = vmatprep.subr.mxu0 0.0
    %2249 = vmatpush1.msra.mxu0 %v2207
    %2250 = vmatprep.subr.mxu0 0.0
    %2251 = vmatpush1.msra.mxu0 %v2206
    %2252 = vmatprep.subr.mxu0 0.0
    %2253 = vmatpush1.msra.mxu0 %v2205
    %2254 = vmatprep.subr.mxu0 0.0
    %2255 = vmatpush1.msra.mxu0 %v2204
    %2256 = vmatprep.subr.mxu0 0.0
    %2257 = vmatpush2.msra.mxu0 0.0
    %2258 = vmatprep.subr.mxu0 0.0
    %2259 = vmatpush2.msra.mxu0 0.0
    %2260 = vmatprep.subr.mxu0 0.0
    %2261 = vmatpush2.msra.mxu0 0.0
    %2262 = vmatprep.subr.mxu0 0.0
    %2263 = vmatpush2.msra.mxu0 0.0
    %2264 = vmatprep.subr.mxu0 0.0
    %2265 = vmatpush2.msra.mxu0 0.0
    %2266 = vmatprep.subr.mxu0 0.0
    %2267 = vmatpush2.msra.mxu0 0.0
    %2268 = vmatprep.subr.mxu0 0.0
    %2269 = vmatpush2.msra.mxu0 0.0
    %2270 = vmatprep.subr.mxu0 0.0
    %2271 = vmatpush2.msra.mxu0 0.0
    %2272 = vmatprep.subr.mxu0 0.0
    %2273 = vmatpush2.msra.mxu0 0.0
    %2274 = vmatprep.subr.mxu0 0.0
    %2275 = vmatpush2.msra.mxu0 0.0
    %2276 = vmatprep.subr.mxu0 0.0
    %2277 = vmatpush2.msra.mxu0 0.0
    %2278 = vmatprep.subr.mxu0 0.0
    %2279 = vmatpush2.msra.mxu0 0.0
    %2280 = vmatprep.subr.mxu0 0.0
    %2281 = vmatpush2.msra.mxu0 0.0
    %2282 = vmatprep.subr.mxu0 0.0
    %2283 = vmatpush2.msra.mxu0 0.0
    %2284 = vmatprep.subr.mxu0 0.0
    %2285 = vmatpush2.msra.mxu0 0.0
    %2286 = vmatprep.subr.mxu0 0.0
    %2287 = vmatpush2.msra.mxu0 0.0
    %2288 = vmatprep.mubr.f32.mxu0 0.0
    %2289 = vmatmul.mubr.f32.gmra.mxu0 %v2222
    %v2290 = vpop.f32.mrf.mxu0
    %v2291 = vadd.f32 0.0, %v2290
    %v2292 = vpop.f32.mrf.mxu0
    %2293 = vdwg.mxu0
    %v2294 = vadd.f32 %v2202, %v2291
    %s2295 = scalar_lea.vmem %s3, 768
    %v2296 = vld [vmem:[%s2295] sm:$0xff]
    %v2297 = vld [vmem:[%s2295 + $0x8] sm:$0xff]
    %v2298 = vld [vmem:[%s2295 + $0x10] sm:$0xff]
    %v2299 = vld [vmem:[%s2295 + $0x18] sm:$0xff]
    %v2300 = vld [vmem:[%s2295 + $0x20] sm:$0xff]
    %v2301 = vld [vmem:[%s2295 + $0x28] sm:$0xff]
    %v2302 = vld [vmem:[%s2295 + $0x30] sm:$0xff]
    %v2303 = vld [vmem:[%s2295 + $0x38] sm:$0xff]
    %v2304 = vld [vmem:[%s2295 + $0x40] sm:$0xff]
    %v2305 = vld [vmem:[%s2295 + $0x48] sm:$0xff]
    %v2306 = vld [vmem:[%s2295 + $0x50] sm:$0xff]
    %v2307 = vld [vmem:[%s2295 + $0x58] sm:$0xff]
    %v2308 = vld [vmem:[%s2295 + $0x60] sm:$0xff]
    %v2309 = vld [vmem:[%s2295 + $0x68] sm:$0xff]
    %v2310 = vld [vmem:[%s2295 + $0x70] sm:$0xff]
    %v2311 = vld [vmem:[%s2295 + $0x78] sm:$0xff]
    %v2312 = vrot.slane %v1743, 6
    %v2313 = vrot.slane %v1744, 5
    %v2314 = vsel %vm1781, %v2313, %v2312
    %2316 = vmatprep.subr.mxu0 0.0
    %2317 = vmatpush1.msra.mxu0 %v2311
    %2318 = vmatprep.subr.mxu0 0.0
    %2319 = vmatpush1.msra.mxu0 %v2310
    %2320 = vmatprep.subr.mxu0 0.0
    %2321 = vmatpush1.msra.mxu0 %v2309
    %2322 = vmatprep.subr.mxu0 0.0
    %2323 = vmatpush1.msra.mxu0 %v2308
    %2324 = vmatprep.subr.mxu0 0.0
    %2325 = vmatpush1.msra.mxu0 %v2307
    %2326 = vmatprep.subr.mxu0 0.0
    %2327 = vmatpush1.msra.mxu0 %v2306
    %2328 = vmatprep.subr.mxu0 0.0
    %2329 = vmatpush1.msra.mxu0 %v2305
    %2330 = vmatprep.subr.mxu0 0.0
    %2331 = vmatpush1.msra.mxu0 %v2304
    %2332 = vmatprep.subr.mxu0 0.0
    %2333 = vmatpush1.msra.mxu0 %v2303
    %2334 = vmatprep.subr.mxu0 0.0
    %2335 = vmatpush1.msra.mxu0 %v2302
    %2336 = vmatprep.subr.mxu0 0.0
    %2337 = vmatpush1.msra.mxu0 %v2301
    %2338 = vmatprep.subr.mxu0 0.0
    %2339 = vmatpush1.msra.mxu0 %v2300
    %2340 = vmatprep.subr.mxu0 0.0
    %2341 = vmatpush1.msra.mxu0 %v2299
    %2342 = vmatprep.subr.mxu0 0.0
    %2343 = vmatpush1.msra.mxu0 %v2298
    %2344 = vmatprep.subr.mxu0 0.0
    %2345 = vmatpush1.msra.mxu0 %v2297
    %2346 = vmatprep.subr.mxu0 0.0
    %2347 = vmatpush1.msra.mxu0 %v2296
    %2348 = vmatprep.subr.mxu0 0.0
    %2349 = vmatpush2.msra.mxu0 0.0
    %2350 = vmatprep.subr.mxu0 0.0
    %2351 = vmatpush2.msra.mxu0 0.0
    %2352 = vmatprep.subr.mxu0 0.0
    %2353 = vmatpush2.msra.mxu0 0.0
    %2354 = vmatprep.subr.mxu0 0.0
    %2355 = vmatpush2.msra.mxu0 0.0
    %2356 = vmatprep.subr.mxu0 0.0
    %2357 = vmatpush2.msra.mxu0 0.0
    %2358 = vmatprep.subr.mxu0 0.0
    %2359 = vmatpush2.msra.mxu0 0.0
    %2360 = vmatprep.subr.mxu0 0.0
    %2361 = vmatpush2.msra.mxu0 0.0
    %2362 = vmatprep.subr.mxu0 0.0
    %2363 = vmatpush2.msra.mxu0 0.0
    %2364 = vmatprep.subr.mxu0 0.0
    %2365 = vmatpush2.msra.mxu0 0.0
    %2366 = vmatprep.subr.mxu0 0.0
    %2367 = vmatpush2.msra.mxu0 0.0
    %2368 = vmatprep.subr.mxu0 0.0
    %2369 = vmatpush2.msra.mxu0 0.0
    %2370 = vmatprep.subr.mxu0 0.0
    %2371 = vmatpush2.msra.mxu0 0.0
    %2372 = vmatprep.subr.mxu0 0.0
    %2373 = vmatpush2.msra.mxu0 0.0
    %2374 = vmatprep.subr.mxu0 0.0
    %2375 = vmatpush2.msra.mxu0 0.0
    %2376 = vmatprep.subr.mxu0 0.0
    %2377 = vmatpush2.msra.mxu0 0.0
    %2378 = vmatprep.subr.mxu0 0.0
    %2379 = vmatpush2.msra.mxu0 0.0
    %2380 = vmatprep.mubr.f32.mxu0 0.0
    %2381 = vmatmul.mubr.f32.gmra.mxu0 %v2314
    %v2382 = vpop.f32.mrf.mxu0
    %v2383 = vadd.f32 0.0, %v2382
    %v2384 = vpop.f32.mrf.mxu0
    %2385 = vdwg.mxu0
    %v2386 = vadd.f32 %v2294, %v2383
    %v2387 = vld [vmem:[%s6] sm:$0x1]
    %v2389 = vlaneseq
    %v2390 = vshrl.u32 %v2389, 7
    %v2391 = vsub.s32 0, %v2390
    %v2392 = vrot.slane %v2387, %v2391
    %v2394 = vadd.f32 %v2386, %v2392
    %vm2395 = vcmask 123904
    %2396 = vst.msk [vmem:[#allocation4] sm:$0x3] %vm2395, %v2394
    // Predicated region
    $region30: #{net_forward.1} parent=1 // pred_check
      _
    $region31: #{net_forward.1} parent=1 // pred_check_branch
      %2398 = sbr.rel (0) target = $region33
    $region32: #{net_forward.1} parent=1 // pred_region
      %s2400 = ssub.s32 32, 32
      %2401 = vsyncadd [#allocation5], %s2400
      %s2403 = sshll.u32 [#allocation4], 4
      %s2404 = int_to_ptr.vmem [resolvable:$true] %s2403
      %2406 = dma.vmem_to_hbm [thread:$0]  %s2404, 32, %s7, [#allocation5]
    $region33: #{net_forward.1} parent=1 // pred_fallthru
      _
    // Predicated region
    $region34: #{net_forward.1} parent=1 // pred_check
      _
    $region35: #{net_forward.1} parent=1 // pred_check_branch
      %2408 = sbr.rel (0) target = $region37
    $region36: #{net_forward.1} parent=1 // pred_region
      %2409 = dma.done [#allocation5], 32
    $region37: #{net_forward.1} parent=1 // pred_fallthru
      _
    %2410 = vsyncpa [#allocation5], 1

</llo_original>
